<compile_context>
chip_gen: v6e
topology: v6e:2x2x1
jax: 0.10.0
libtpu: 0.0.40
codegen_flags: <defaults>
</compile_context>

<pallas_src>
import math

import jax
import jax.numpy as jnp
from jax import lax
from jax.experimental import pallas as pl
from jax.experimental.pallas import tpu as pltpu

# ----------------------------- hyper-params ---------------------------------
VOCAB = 50
EMB = 24
HIDDEN = 32            # bidirectional GRU output size
HALF = HIDDEN // 2     # per-direction GRU hidden size

_LOG_MASK_EPS = float(math.log(1e-45))   # AllenNLP's (mask + 1e-45).log() for mask==0
_MASK_FILL = -10000000.0                 # replace_masked_values fill


# ----------------------------- Pallas kernel --------------------------------
def _attention_head_kernel(p_ref, q_ref, pm_ref, qm_ref, attw_ref, wse_ref,
                           bias_ref, out_ref):
    """Attention + start/end projections + masked (log)softmax.

    p_ref   : (TB, Lp, H)    passage encodings (Lp padded to x128)
    q_ref   : (TB, Lq, H)    question encodings (Lq padded to x128)
    pm_ref  : (TB, Lp)       passage mask (float 0/1)
    qm_ref  : (TB, Lq)       question mask (float 0/1)
    attw_ref: (3, H)         attention weight rows [w_p, w_q, w_pq]
    wse_ref : (2, 3, H)      start/end weights, rows [w_P, w_A, w_PA]
    bias_ref: (3,)  SMEM     [att_b, start_b, end_b]
    out_ref : (4, TB, Lp)    rows [start_logits, end_logits, logsm_start, logsm_end]
    """
    f32 = jnp.float32
    P = p_ref[...]                       # (TB, Lp, H)
    Q = q_ref[...]                       # (TB, Lq, H)
    pm = pm_ref[...]                     # (TB, Lp)
    qm = qm_ref[...]                     # (TB, Lq)
    aw = attw_ref[...]                   # (3, H)
    ws = wse_ref[...]                    # (2, 3, H)
    att_b = bias_ref[0]
    start_b = bias_ref[1]
    end_b = bias_ref[2]

    # attention_logits[b,i,j] = <P_i,w_p> + <Q_j,w_q> + <P_i*Q_j,w_pq> + b
    # cross term -> one batched MXU matmul; linear terms -> lane reductions.
    p_term = jnp.sum(P * aw[0], axis=-1)[:, :, None]            # (TB, Lp, 1)
    q_term = jnp.sum(Q * aw[1], axis=-1)[:, None, :]            # (TB, 1, Lq)
    cross = jnp.einsum('bph,bqh->bpq', P * aw[2], Q,
                       preferred_element_type=f32)               # (TB, Lp, Lq)
    att_logits = cross + p_term + q_term + att_b

    # AllenNLP masked_softmax: softmax(x*mask), re-mask, renormalize.
    qm3 = qm[:, None, :]                                         # (TB, 1, Lq)
    x = att_logits * qm3
    x = x - jnp.max(x, axis=-1, keepdims=True)
    e = jnp.exp(x)
    sm = e * pl.reciprocal(jnp.sum(e, axis=-1, keepdims=True), approx=True)
    sm = sm * qm3
    prob = sm * pl.reciprocal(jnp.sum(sm, axis=-1, keepdims=True) + 1e-13,
                              approx=True)                        # (TB, Lp, Lq)

    # attention-weighted question representation (batched MXU matmul)
    A = jnp.einsum('bpq,bqh->bph', prob, Q, preferred_element_type=f32)
    PA = P * A

    # start/end projections as lane reductions (no M=2 matmul, no concat).
    start = jnp.sum(P * ws[0, 0] + A * ws[0, 1] + PA * ws[0, 2], axis=-1) + start_b
    end = jnp.sum(P * ws[1, 0] + A * ws[1, 1] + PA * ws[1, 2], axis=-1) + end_b

    # replace_masked_values(..., -1e7)
    inv_pm = 1.0 - pm
    start_logits = start * pm + inv_pm * _MASK_FILL               # (TB, Lp)
    end_logits = end * pm + inv_pm * _MASK_FILL

    # masked_log_softmax: add log(1e-45) where mask==0 (finite on TPU), then LSE.
    mask_add = inv_pm * _LOG_MASK_EPS

    def logsm(v):
        vv = v + mask_add
        vmax = jnp.max(vv, axis=-1, keepdims=True)
        lse = jnp.log(jnp.sum(jnp.exp(vv - vmax), axis=-1, keepdims=True)) + vmax
        return vv - lse

    out_ref[0] = start_logits
    out_ref[1] = end_logits
    out_ref[2] = logsm(start_logits)
    out_ref[3] = logsm(end_logits)


def _num_tensorcores():
    try:
        kind = jax.devices()[0].device_kind.lower()
        if "v7" in kind:
            return 2
    except Exception:
        pass
    return 1


def _pick_batch_tile(B, Lp_pad, Lq_pad, H):
    """Batch tile: grid == #TensorCores when alignment/VMEM allow, else grid=1."""
    def vmem_bytes(tb):
        ins = 2 * (tb * Lp_pad * H + tb * Lq_pad * H + tb * Lp_pad + tb * Lq_pad)
        outs = 2 * (4 * tb * Lp_pad)
        temps = 3 * tb * Lp_pad * Lq_pad + 2 * tb * Lp_pad * H
        return 4 * (ins + outs + temps)

    budget = 24 * 1024 * 1024          # conservative: fits v7x 64 MiB / scoped 32 MiB
    ncores = _num_tensorcores()
    if ncores > 1 and B % ncores == 0:
        tb = B // ncores
        if (tb == B or tb % 8 == 0) and vmem_bytes(tb) <= budget:
            return tb
    if vmem_bytes(B) <= budget:
        return B
    for t in range(B - 1, 0, -1):      # large-B fallback, keep (8,128) alignment
        if B % t == 0 and t % 8 == 0 and vmem_bytes(t) <= budget:
            return t
    return B


def attention_head_pallas(p_enc, q_enc, p_mask, q_mask, att_w, w_se, biases):
    B, Lp, H = p_enc.shape
    Lq = q_enc.shape[1]

    # Pad passage & question axes to multiples of 128: lane-dense matmuls /
    # softmax / stores. Padded positions carry mask 0, so results are unchanged.
    Lp_pad = int(pl.cdiv(Lp, 128) * 128)
    Lq_pad = int(pl.cdiv(Lq, 128) * 128)
    if Lp_pad != Lp:
        p_enc = jnp.pad(p_enc, ((0, 0), (0, Lp_pad - Lp), (0, 0)))
        p_mask = jnp.pad(p_mask, ((0, 0), (0, Lp_pad - Lp)))
    if Lq_pad != Lq:
        q_enc = jnp.pad(q_enc, ((0, 0), (0, Lq_pad - Lq), (0, 0)))
        q_mask = jnp.pad(q_mask, ((0, 0), (0, Lq_pad - Lq)))

    p_mask = p_mask.astype(jnp.float32)
    q_mask = q_mask.astype(jnp.float32)

    TB = _pick_batch_tile(B, Lp_pad, Lq_pad, H)
    grid = (B // TB,)

    out = pl.pallas_call(
        _attention_head_kernel,
        out_shape=jax.ShapeDtypeStruct((4, B, Lp_pad), jnp.float32),
        grid=grid,
        in_specs=[
            pl.BlockSpec((TB, Lp_pad, H), lambda b: (b, 0, 0)),
            pl.BlockSpec((TB, Lq_pad, H), lambda b: (b, 0, 0)),
            pl.BlockSpec((TB, Lp_pad), lambda b: (b, 0)),
            pl.BlockSpec((TB, Lq_pad), lambda b: (b, 0)),
            pl.BlockSpec((3, H), lambda b: (0, 0)),
            pl.BlockSpec((2, 3, H), lambda b: (0, 0, 0)),
            pl.BlockSpec(memory_space=pltpu.MemorySpace.SMEM),
        ],
        out_specs=pl.BlockSpec((4, TB, Lp_pad), lambda b: (0, b, 0)),
        compiler_params=pltpu.CompilerParams(
            dimension_semantics=("parallel",),
            vmem_limit_bytes=32 * 1024 * 1024),
    )(p_enc, q_enc, p_mask, q_mask, att_w, w_se, biases)

    return (out[0, :, :Lp], out[1, :, :Lp], out[2, :, :Lp], out[3, :, :Lp])


# --------------------------- GRU (plain JAX glue) ----------------------------
# TODO(synk): the GRU time recurrence is inherently sequential; it stays in a
# lax.scan.  The input projection is hoisted out of the recurrence and the
# four recurrences (passage/question x fwd/bwd) share a single scan; masking
# reproduces pack_padded_sequence / pad_packed_sequence semantics.
def bi_gru_encode(emb_p, p_mask, emb_q, q_mask, params):
    B, Lp, _ = emb_p.shape
    Lq = emb_q.shape[1]
    L = max(Lp, Lq)

    def pad_t(x, n):
        if x.shape[1] == n:
            return x
        cfg = [(0, 0)] * x.ndim
        cfg[1] = (0, n - x.shape[1])
        return jnp.pad(x, cfg)

    groups = [params["gruP_fwd"], params["gruP_bwd"],
              params["gruQ_fwd"], params["gruQ_bwd"]]
    w_hh = jnp.stack([g[1] for g in groups])          # (4, 3*HALF, HALF)
    b_hh = jnp.stack([g[3] for g in groups])          # (4, 3*HALF)

    def in_proj(x, g):                                # hoisted out of the scan
        return x @ g[0].T + g[2]

    gi_pf = pad_t(in_proj(emb_p, groups[0]), L)
    gi_pb = pad_t(in_proj(emb_p, groups[1]), L)
    gi_qf = pad_t(in_proj(emb_q, groups[2]), L)
    gi_qb = pad_t(in_proj(emb_q, groups[3]), L)
    m_p = pad_t(p_mask, L)
    m_q = pad_t(q_mask, L)

    # backward directions run forward over the time-flipped (padded) sequence
    gi = jnp.stack([gi_pf, jnp.flip(gi_pb, axis=1),
                    gi_qf, jnp.flip(gi_qb, axis=1)])  # (4, B, L, 3*HALF)
    m = jnp.stack([m_p, jnp.flip(m_p, axis=1),
                   m_q, jnp.flip(m_q, axis=1)])       # (4, B, L)

    gi_t = jnp.moveaxis(gi, 2, 0)                     # (L, 4, B, 3*HALF)
    m_t = jnp.moveaxis(m, 2, 0)[..., None]            # (L, 4, B, 1)
    h0 = jnp.zeros((4, B, HALF), jnp.float32)

    def step(h, inp):
        gi_s, m_s = inp
        gh = jnp.einsum('kbh,koh->kbo', h, w_hh) + b_hh[:, None, :]
        i_r, i_z, i_n = jnp.split(gi_s, 3, axis=-1)
        h_r, h_z, h_n = jnp.split(gh, 3, axis=-1)
        r = jax.nn.sigmoid(i_r + h_r)
        z = jax.nn.sigmoid(i_z + h_z)
        n = jnp.tanh(i_n + r * h_n)
        h_new = (1.0 - z) * n + z * h
        h = m_s * h_new + (1.0 - m_s) * h             # freeze state when padded
        return h, m_s * h                             # zero output when padded

    _, outs = lax.scan(step, h0, (gi_t, m_t))         # (L, 4, B, HALF)
    outs = jnp.moveaxis(outs, 0, 2)                   # (4, B, L, HALF)

    p_enc = jnp.concatenate(
        [outs[0][:, :Lp], jnp.flip(outs[1], axis=1)[:, :Lp]], axis=-1)
    q_enc = jnp.concatenate(
        [outs[2][:, :Lq], jnp.flip(outs[3], axis=1)[:, :Lq]], axis=-1)
    return p_enc, q_enc


# ------------------------------- full forward --------------------------------
def attention_rnn_forward(params, passage, question):
    p_mask = (passage != 0).astype(jnp.float32)
    q_mask = (question != 0).astype(jnp.float32)

    emb_p = jnp.take(params["embedding"], passage, axis=0)
    emb_q = jnp.take(params["embedding"], question, axis=0)

    p_enc, q_enc = bi_gru_encode(emb_p, p_mask, emb_q, q_mask, params)

    att_w = params["att_w"].reshape(3, HIDDEN)                  # [w_p, w_q, w_pq]
    w_se = jnp.stack([params["start_w"].reshape(3, HIDDEN),
                      params["end_w"].reshape(3, HIDDEN)])      # (2, 3, H)
    biases = jnp.stack([params["att_b"], params["start_b"],
                        params["end_b"]]).astype(jnp.float32)   # (3,) -> SMEM

    start_logits, end_logits, ls_start, ls_end = attention_head_pallas(
        p_enc, q_enc, p_mask, q_mask, att_w, w_se, biases)

    return {
        "start_logits": start_logits,
        "end_logits": end_logits,
        "softmax_start_logits": ls_start,
        "softmax_end_logits": ls_end,
    }


# ------------------------------ parameter init -------------------------------
def init_params(key):
    ks = jax.random.split(key, 12)
    rnd = lambda k, shape, s=0.1: jax.random.normal(k, shape, dtype=jnp.float32) * s

    emb = rnd(ks[0], (VOCAB, EMB), 0.5)
    emb = emb.at[0].set(0.0)   # padding row

    def gru_dir(k):
        kk = jax.random.split(k, 4)
        return (rnd(kk[0], (3 * HALF, EMB)), rnd(kk[1], (3 * HALF, HALF)),
                rnd(kk[2], (3 * HALF,)), rnd(kk[3], (3 * HALF,)))

    return {
        "embedding": emb,
        "gruP_fwd": gru_dir(ks[1]), "gruP_bwd": gru_dir(ks[2]),
        "gruQ_fwd": gru_dir(ks[3]), "gruQ_bwd": gru_dir(ks[4]),
        "att_w": rnd(ks[5], (1, 3 * HIDDEN)), "att_b": rnd(ks[6], ()),
        "start_w": rnd(ks[7], (1, 3 * HIDDEN)), "start_b": rnd(ks[8], ()),
        "end_w": rnd(ks[9], (1, 3 * HIDDEN)), "end_b": rnd(ks[10], ()),
    }


# ----------------------------------- main ------------------------------------
if __name__ == "__main__":
    key = jax.random.PRNGKey(0)
    k_p, k_q, k_params = jax.random.split(key, 3)

    B, Lp, Lq = 2, 16, 8
    passage = jax.random.randint(k_p, (B, Lp), 1, VOCAB, dtype=jnp.int32)
    question = jax.random.randint(k_q, (B, Lq), 1, VOCAB, dtype=jnp.int32)

    # trailing padding (token id 0), as required by pack_padded_sequence
    p_lens = jnp.array([Lp, 12], dtype=jnp.int32)
    q_lens = jnp.array([Lq, 6], dtype=jnp.int32)
    passage = jnp.where(jnp.arange(Lp)[None, :] < p_lens[:, None], passage, 0)
    question = jnp.where(jnp.arange(Lq)[None, :] < q_lens[:, None], question, 0)

    params = init_params(k_params)

    fwd = jax.jit(attention_rnn_forward)
    out = fwd(params, passage, question)
    jax.block_until_ready(out)

    assert out["start_logits"].shape == (B, Lp)
    assert out["end_logits"].shape == (B, Lp)
    assert out["softmax_start_logits"].shape == (B, Lp)
    assert out["softmax_end_logits"].shape == (B, Lp)
    assert bool(jnp.all(jnp.isfinite(out["softmax_start_logits"])))
    assert bool(jnp.all(jnp.isfinite(out["softmax_end_logits"])))
    print("KERNEL_OK")
</pallas_src>

<mosaic_0001>
module attributes {stable_mosaic.version = 11 : i64} {
  func.func @_attention_head_kernel(%arg0: i32, %arg1: memref<2x128x32xf32, #tpu.memory_space<vmem>>, %arg2: memref<2x128x32xf32, #tpu.memory_space<vmem>>, %arg3: memref<2x128xf32, #tpu.memory_space<vmem>>, %arg4: memref<2x128xf32, #tpu.memory_space<vmem>>, %arg5: memref<3x32xf32, #tpu.memory_space<vmem>>, %arg6: memref<2x3x32xf32, #tpu.memory_space<vmem>>, %arg7: memref<3xf32, #tpu.memory_space<smem>>, %arg8: memref<4x2x128xf32, #tpu.memory_space<vmem>>) attributes {dimension_semantics = [#tpu.dimension_semantics<parallel>], iteration_bounds = array<i64: 1>, scalar_prefetch = 0 : i64, scratch_operands = 0 : i64, tpu.core_type = #tpu.core_type<tc>, window_params = [{transform_indices = @transform_0, window_bounds = array<i64: 2, 128, 32>}, {transform_indices = @transform_1, window_bounds = array<i64: 2, 128, 32>}, {transform_indices = @transform_2, window_bounds = array<i64: 2, 128>}, {transform_indices = @transform_3, window_bounds = array<i64: 2, 128>}, {pipeline_mode = #tpu.pipeline_mode<synchronous>, transform_indices = @transform_4, window_bounds = array<i64: 3, 32>}, {pipeline_mode = #tpu.pipeline_mode<synchronous>, transform_indices = @transform_5, window_bounds = array<i64: 2, 3, 32>}, {transform_indices = @transform_6, window_bounds = array<i64: 3>}, {transform_indices = @transform_7, window_bounds = array<i64: 4, 2, 128>}]} {
    %c0 = arith.constant 0 : index
    %c0_0 = arith.constant 0 : index
    %c0_1 = arith.constant 0 : index
    %0 = vector.load %arg1[%c0, %c0_0, %c0_1] : memref<2x128x32xf32, #tpu.memory_space<vmem>>, vector<2x128x32xf32>
    %c0_2 = arith.constant 0 : index
    %c0_3 = arith.constant 0 : index
    %c0_4 = arith.constant 0 : index
    %1 = vector.load %arg2[%c0_2, %c0_3, %c0_4] : memref<2x128x32xf32, #tpu.memory_space<vmem>>, vector<2x128x32xf32>
    %c0_5 = arith.constant 0 : index
    %c0_6 = arith.constant 0 : index
    %2 = vector.load %arg3[%c0_5, %c0_6] : memref<2x128xf32, #tpu.memory_space<vmem>>, vector<2x128xf32>
    %c0_7 = arith.constant 0 : index
    %c0_8 = arith.constant 0 : index
    %3 = vector.load %arg4[%c0_7, %c0_8] : memref<2x128xf32, #tpu.memory_space<vmem>>, vector<2x128xf32>
    %c0_9 = arith.constant 0 : index
    %c0_10 = arith.constant 0 : index
    %4 = vector.load %arg5[%c0_9, %c0_10] : memref<3x32xf32, #tpu.memory_space<vmem>>, vector<3x32xf32>
    %c0_11 = arith.constant 0 : index
    %c0_12 = arith.constant 0 : index
    %c0_13 = arith.constant 0 : index
    %5 = vector.load %arg6[%c0_11, %c0_12, %c0_13] : memref<2x3x32xf32, #tpu.memory_space<vmem>>, vector<2x3x32xf32>
    %c0_14 = arith.constant 0 : index
    %6 = memref.load %arg7[%c0_14] : memref<3xf32, #tpu.memory_space<smem>>
    %c1 = arith.constant 1 : index
    %7 = memref.load %arg7[%c1] : memref<3xf32, #tpu.memory_space<smem>>
    %c2 = arith.constant 2 : index
    %8 = memref.load %arg7[%c2] : memref<3xf32, #tpu.memory_space<smem>>
    %9 = vector.extract_strided_slice %4 {offsets = [0, 0], sizes = [1, 32], strides = [1, 1]} : vector<3x32xf32> to vector<1x32xf32>
    %10 = vector.shape_cast %9 : vector<1x32xf32> to vector<32xf32>
    %11 = vector.shape_cast %10 : vector<32xf32> to vector<1x1x32xf32>
    %12 = vector.broadcast %11 : vector<1x1x32xf32> to vector<2x128x32xf32>
    %13 = arith.mulf %0, %12 : vector<2x128x32xf32>
    %cst = arith.constant dense<0.000000e+00> : vector<2x128xf32>
    %14 = vector.multi_reduction <add>, %13, %cst [2] : vector<2x128x32xf32> to vector<2x128xf32>
    %15 = vector.shape_cast %14 : vector<2x128xf32> to vector<2x128x1xf32>
    %16 = vector.extract_strided_slice %4 {offsets = [1, 0], sizes = [1, 32], strides = [1, 1]} : vector<3x32xf32> to vector<1x32xf32>
    %17 = vector.shape_cast %16 : vector<1x32xf32> to vector<32xf32>
    %18 = vector.shape_cast %17 : vector<32xf32> to vector<1x1x32xf32>
    %19 = vector.broadcast %18 : vector<1x1x32xf32> to vector<2x128x32xf32>
    %20 = arith.mulf %1, %19 : vector<2x128x32xf32>
    %cst_15 = arith.constant dense<0.000000e+00> : vector<2x128xf32>
    %21 = vector.multi_reduction <add>, %20, %cst_15 [2] : vector<2x128x32xf32> to vector<2x128xf32>
    %22 = vector.shape_cast %21 : vector<2x128xf32> to vector<2x1x128xf32>
    %23 = vector.extract_strided_slice %4 {offsets = [2, 0], sizes = [1, 32], strides = [1, 1]} : vector<3x32xf32> to vector<1x32xf32>
    %24 = vector.shape_cast %23 : vector<1x32xf32> to vector<32xf32>
    %25 = vector.shape_cast %24 : vector<32xf32> to vector<1x1x32xf32>
    %26 = vector.broadcast %25 : vector<1x1x32xf32> to vector<2x128x32xf32>
    %27 = arith.mulf %0, %26 : vector<2x128x32xf32>
    "tpu.trace_start"() <{level = 10 : i32, message = "bph,bqh->bpq"}> : () -> ()
    %cst_16 = arith.constant dense<0.000000e+00> : vector<2x128x128xf32>
    %28 = tpu.matmul %27, %1, %cst_16 {dimension_numbers = #tpu.dot_dimension_numbers<[2], [2], [1], [1], [0, 0, 0, 1, 1, 1], [0], [0]>} : vector<2x128x32xf32>, vector<2x128x32xf32>, vector<2x128x128xf32> -> vector<2x128x128xf32>
    "tpu.trace_stop"() : () -> ()
    %29 = vector.broadcast %15 : vector<2x128x1xf32> to vector<2x128x128xf32>
    %30 = arith.addf %28, %29 : vector<2x128x128xf32>
    %31 = vector.broadcast %22 : vector<2x1x128xf32> to vector<2x128x128xf32>
    %32 = arith.addf %30, %31 : vector<2x128x128xf32>
    %33 = vector.broadcast %6 : f32 to vector<2x128x128xf32>
    %34 = arith.addf %32, %33 : vector<2x128x128xf32>
    %35 = vector.shape_cast %3 : vector<2x128xf32> to vector<2x1x128xf32>
    %36 = vector.broadcast %35 : vector<2x1x128xf32> to vector<2x128x128xf32>
    %37 = arith.mulf %34, %36 : vector<2x128x128xf32>
    %cst_17 = arith.constant dense<0xFF800000> : vector<2x128xf32>
    %38 = vector.multi_reduction <maximumf>, %37, %cst_17 [2] : vector<2x128x128xf32> to vector<2x128xf32>
    %39 = vector.shape_cast %38 : vector<2x128xf32> to vector<2x128x1xf32>
    %40 = vector.broadcast %39 : vector<2x128x1xf32> to vector<2x128x128xf32>
    %41 = arith.subf %37, %40 : vector<2x128x128xf32>
    %42 = math.exp %41 : vector<2x128x128xf32>
    %cst_18 = arith.constant dense<0.000000e+00> : vector<2x128xf32>
    %43 = vector.multi_reduction <add>, %42, %cst_18 [2] : vector<2x128x128xf32> to vector<2x128xf32>
    %44 = vector.shape_cast %43 : vector<2x128xf32> to vector<2x128x1xf32>
    %45 = tpu.reciprocal %44 {approx = true} : vector<2x128x1xf32> -> vector<2x128x1xf32>
    %46 = vector.broadcast %45 : vector<2x128x1xf32> to vector<2x128x128xf32>
    %47 = arith.mulf %42, %46 : vector<2x128x128xf32>
    %48 = vector.broadcast %35 : vector<2x1x128xf32> to vector<2x128x128xf32>
    %49 = arith.mulf %47, %48 : vector<2x128x128xf32>
    %cst_19 = arith.constant dense<0.000000e+00> : vector<2x128xf32>
    %50 = vector.multi_reduction <add>, %49, %cst_19 [2] : vector<2x128x128xf32> to vector<2x128xf32>
    %51 = vector.shape_cast %50 : vector<2x128xf32> to vector<2x128x1xf32>
    %cst_20 = arith.constant 9.99999982E-14 : f32
    %52 = vector.broadcast %cst_20 : f32 to vector<2x128x1xf32>
    %53 = arith.addf %51, %52 : vector<2x128x1xf32>
    %54 = tpu.reciprocal %53 {approx = true} : vector<2x128x1xf32> -> vector<2x128x1xf32>
    %55 = vector.broadcast %54 : vector<2x128x1xf32> to vector<2x128x128xf32>
    %56 = arith.mulf %49, %55 : vector<2x128x128xf32>
    "tpu.trace_start"() <{level = 10 : i32, message = "bpq,bqh->bph"}> : () -> ()
    %cst_21 = arith.constant dense<0.000000e+00> : vector<2x128x32xf32>
    %57 = tpu.matmul %56, %1, %cst_21 {dimension_numbers = #tpu.dot_dimension_numbers<[2], [1], [1], [2], [0, 0, 0, 1, 1, 2], [0], [0]>} : vector<2x128x128xf32>, vector<2x128x32xf32>, vector<2x128x32xf32> -> vector<2x128x32xf32>
    "tpu.trace_stop"() : () -> ()
    %58 = arith.mulf %0, %57 : vector<2x128x32xf32>
    %59 = vector.extract_strided_slice %5 {offsets = [0, 0, 0], sizes = [1, 1, 32], strides = [1, 1, 1]} : vector<2x3x32xf32> to vector<1x1x32xf32>
    %60 = vector.shape_cast %59 : vector<1x1x32xf32> to vector<32xf32>
    %61 = vector.shape_cast %60 : vector<32xf32> to vector<1x1x32xf32>
    %62 = vector.broadcast %61 : vector<1x1x32xf32> to vector<2x128x32xf32>
    %63 = arith.mulf %0, %62 : vector<2x128x32xf32>
    %64 = vector.extract_strided_slice %5 {offsets = [0, 1, 0], sizes = [1, 1, 32], strides = [1, 1, 1]} : vector<2x3x32xf32> to vector<1x1x32xf32>
    %65 = vector.shape_cast %64 : vector<1x1x32xf32> to vector<32xf32>
    %66 = vector.shape_cast %65 : vector<32xf32> to vector<1x1x32xf32>
    %67 = vector.broadcast %66 : vector<1x1x32xf32> to vector<2x128x32xf32>
    %68 = arith.mulf %57, %67 : vector<2x128x32xf32>
    %69 = arith.addf %63, %68 : vector<2x128x32xf32>
    %70 = vector.extract_strided_slice %5 {offsets = [0, 2, 0], sizes = [1, 1, 32], strides = [1, 1, 1]} : vector<2x3x32xf32> to vector<1x1x32xf32>
    %71 = vector.shape_cast %70 : vector<1x1x32xf32> to vector<32xf32>
    %72 = vector.shape_cast %71 : vector<32xf32> to vector<1x1x32xf32>
    %73 = vector.broadcast %72 : vector<1x1x32xf32> to vector<2x128x32xf32>
    %74 = arith.mulf %58, %73 : vector<2x128x32xf32>
    %75 = arith.addf %69, %74 : vector<2x128x32xf32>
    %cst_22 = arith.constant dense<0.000000e+00> : vector<2x128xf32>
    %76 = vector.multi_reduction <add>, %75, %cst_22 [2] : vector<2x128x32xf32> to vector<2x128xf32>
    %77 = vector.broadcast %7 : f32 to vector<2x128xf32>
    %78 = arith.addf %76, %77 : vector<2x128xf32>
    %79 = vector.extract_strided_slice %5 {offsets = [1, 0, 0], sizes = [1, 1, 32], strides = [1, 1, 1]} : vector<2x3x32xf32> to vector<1x1x32xf32>
    %80 = vector.shape_cast %79 : vector<1x1x32xf32> to vector<32xf32>
    %81 = vector.shape_cast %80 : vector<32xf32> to vector<1x1x32xf32>
    %82 = vector.broadcast %81 : vector<1x1x32xf32> to vector<2x128x32xf32>
    %83 = arith.mulf %0, %82 : vector<2x128x32xf32>
    %84 = vector.extract_strided_slice %5 {offsets = [1, 1, 0], sizes = [1, 1, 32], strides = [1, 1, 1]} : vector<2x3x32xf32> to vector<1x1x32xf32>
    %85 = vector.shape_cast %84 : vector<1x1x32xf32> to vector<32xf32>
    %86 = vector.shape_cast %85 : vector<32xf32> to vector<1x1x32xf32>
    %87 = vector.broadcast %86 : vector<1x1x32xf32> to vector<2x128x32xf32>
    %88 = arith.mulf %57, %87 : vector<2x128x32xf32>
    %89 = arith.addf %83, %88 : vector<2x128x32xf32>
    %90 = vector.extract_strided_slice %5 {offsets = [1, 2, 0], sizes = [1, 1, 32], strides = [1, 1, 1]} : vector<2x3x32xf32> to vector<1x1x32xf32>
    %91 = vector.shape_cast %90 : vector<1x1x32xf32> to vector<32xf32>
    %92 = vector.shape_cast %91 : vector<32xf32> to vector<1x1x32xf32>
    %93 = vector.broadcast %92 : vector<1x1x32xf32> to vector<2x128x32xf32>
    %94 = arith.mulf %58, %93 : vector<2x128x32xf32>
    %95 = arith.addf %89, %94 : vector<2x128x32xf32>
    %cst_23 = arith.constant dense<0.000000e+00> : vector<2x128xf32>
    %96 = vector.multi_reduction <add>, %95, %cst_23 [2] : vector<2x128x32xf32> to vector<2x128xf32>
    %97 = vector.broadcast %8 : f32 to vector<2x128xf32>
    %98 = arith.addf %96, %97 : vector<2x128xf32>
    %cst_24 = arith.constant 1.000000e+00 : f32
    %99 = vector.broadcast %cst_24 : f32 to vector<2x128xf32>
    %100 = arith.subf %99, %2 : vector<2x128xf32>
    %101 = arith.mulf %78, %2 : vector<2x128xf32>
    %cst_25 = arith.constant -1.000000e+07 : f32
    %102 = vector.broadcast %cst_25 : f32 to vector<2x128xf32>
    %103 = arith.mulf %100, %102 : vector<2x128xf32>
    %104 = arith.addf %101, %103 : vector<2x128xf32>
    %105 = arith.mulf %98, %2 : vector<2x128xf32>
    %cst_26 = arith.constant -1.000000e+07 : f32
    %106 = vector.broadcast %cst_26 : f32 to vector<2x128xf32>
    %107 = arith.mulf %100, %106 : vector<2x128xf32>
    %108 = arith.addf %105, %107 : vector<2x128xf32>
    %cst_27 = arith.constant -103.616325 : f32
    %109 = vector.broadcast %cst_27 : f32 to vector<2x128xf32>
    %110 = arith.mulf %100, %109 : vector<2x128xf32>
    %c0_28 = arith.constant 0 : index
    %c0_29 = arith.constant 0 : index
    %c0_30 = arith.constant 0 : index
    %111 = vector.load %arg8[%c0_28, %c0_29, %c0_30] : memref<4x2x128xf32, #tpu.memory_space<vmem>>, vector<1x2x128xf32>
    %112 = vector.shape_cast %111 : vector<1x2x128xf32> to vector<2x128xf32>
    %113 = vector.shape_cast %104 : vector<2x128xf32> to vector<1x2x128xf32>
    tpu.vector_store %arg8[%c0_28, %c0_29, %c0_30], %113 {strides = array<i32>} : memref<4x2x128xf32, #tpu.memory_space<vmem>>, vector<1x2x128xf32>,
    %c1_31 = arith.constant 1 : index
    %c0_32 = arith.constant 0 : index
    %c0_33 = arith.constant 0 : index
    %114 = vector.load %arg8[%c1_31, %c0_32, %c0_33] : memref<4x2x128xf32, #tpu.memory_space<vmem>>, vector<1x2x128xf32>
    %115 = vector.shape_cast %114 : vector<1x2x128xf32> to vector<2x128xf32>
    %116 = vector.shape_cast %108 : vector<2x128xf32> to vector<1x2x128xf32>
    tpu.vector_store %arg8[%c1_31, %c0_32, %c0_33], %116 {strides = array<i32>} : memref<4x2x128xf32, #tpu.memory_space<vmem>>, vector<1x2x128xf32>,
    %117 = arith.addf %104, %110 : vector<2x128xf32>
    %cst_34 = arith.constant dense<0xFF800000> : vector<2xf32>
    %118 = vector.multi_reduction <maximumf>, %117, %cst_34 [1] : vector<2x128xf32> to vector<2xf32>
    %119 = vector.shape_cast %118 : vector<2xf32> to vector<2x1xf32>
    %120 = vector.broadcast %119 : vector<2x1xf32> to vector<2x128xf32>
    %121 = arith.subf %117, %120 : vector<2x128xf32>
    %122 = math.exp %121 : vector<2x128xf32>
    %cst_35 = arith.constant dense<0.000000e+00> : vector<2xf32>
    %123 = vector.multi_reduction <add>, %122, %cst_35 [1] : vector<2x128xf32> to vector<2xf32>
    %124 = vector.shape_cast %123 : vector<2xf32> to vector<2x1xf32>
    %125 = math.log %124 : vector<2x1xf32>
    %126 = arith.addf %125, %119 : vector<2x1xf32>
    %127 = vector.broadcast %126 : vector<2x1xf32> to vector<2x128xf32>
    %128 = arith.subf %117, %127 : vector<2x128xf32>
    %c2_36 = arith.constant 2 : index
    %c0_37 = arith.constant 0 : index
    %c0_38 = arith.constant 0 : index
    %129 = vector.load %arg8[%c2_36, %c0_37, %c0_38] : memref<4x2x128xf32, #tpu.memory_space<vmem>>, vector<1x2x128xf32>
    %130 = vector.shape_cast %129 : vector<1x2x128xf32> to vector<2x128xf32>
    %131 = vector.shape_cast %128 : vector<2x128xf32> to vector<1x2x128xf32>
    tpu.vector_store %arg8[%c2_36, %c0_37, %c0_38], %131 {strides = array<i32>} : memref<4x2x128xf32, #tpu.memory_space<vmem>>, vector<1x2x128xf32>,
    %132 = arith.addf %108, %110 : vector<2x128xf32>
    %cst_39 = arith.constant dense<0xFF800000> : vector<2xf32>
    %133 = vector.multi_reduction <maximumf>, %132, %cst_39 [1] : vector<2x128xf32> to vector<2xf32>
    %134 = vector.shape_cast %133 : vector<2xf32> to vector<2x1xf32>
    %135 = vector.broadcast %134 : vector<2x1xf32> to vector<2x128xf32>
    %136 = arith.subf %132, %135 : vector<2x128xf32>
    %137 = math.exp %136 : vector<2x128xf32>
    %cst_40 = arith.constant dense<0.000000e+00> : vector<2xf32>
    %138 = vector.multi_reduction <add>, %137, %cst_40 [1] : vector<2x128xf32> to vector<2xf32>
    %139 = vector.shape_cast %138 : vector<2xf32> to vector<2x1xf32>
    %140 = math.log %139 : vector<2x1xf32>
    %141 = arith.addf %140, %134 : vector<2x1xf32>
    %142 = vector.broadcast %141 : vector<2x1xf32> to vector<2x128xf32>
    %143 = arith.subf %132, %142 : vector<2x128xf32>
    %c3 = arith.constant 3 : index
    %c0_41 = arith.constant 0 : index
    %c0_42 = arith.constant 0 : index
    %144 = vector.load %arg8[%c3, %c0_41, %c0_42] : memref<4x2x128xf32, #tpu.memory_space<vmem>>, vector<1x2x128xf32>
    %145 = vector.shape_cast %144 : vector<1x2x128xf32> to vector<2x128xf32>
    %146 = vector.shape_cast %143 : vector<2x128xf32> to vector<1x2x128xf32>
    tpu.vector_store %arg8[%c3, %c0_41, %c0_42], %146 {strides = array<i32>} : memref<4x2x128xf32, #tpu.memory_space<vmem>>, vector<1x2x128xf32>,
    return
  }
  func.func @transform_0(%arg0: i32) -> (i32, i32, i32) {
    %c0_i32 = arith.constant 0 : i32
    %c0_i32_0 = arith.constant 0 : i32
    %c0_i32_1 = arith.constant 0 : i32
    return %arg0, %c0_i32, %c0_i32_0 : i32, i32, i32
  }
  func.func @transform_1(%arg0: i32) -> (i32, i32, i32) {
    %c0_i32 = arith.constant 0 : i32
    %c0_i32_0 = arith.constant 0 : i32
    %c0_i32_1 = arith.constant 0 : i32
    return %arg0, %c0_i32, %c0_i32_0 : i32, i32, i32
  }
  func.func @transform_2(%arg0: i32) -> (i32, i32) {
    %c0_i32 = arith.constant 0 : i32
    %c0_i32_0 = arith.constant 0 : i32
    return %arg0, %c0_i32 : i32, i32
  }
  func.func @transform_3(%arg0: i32) -> (i32, i32) {
    %c0_i32 = arith.constant 0 : i32
    %c0_i32_0 = arith.constant 0 : i32
    return %arg0, %c0_i32 : i32, i32
  }
  func.func @transform_4(%arg0: i32) -> (i32, i32) {
    %c0_i32 = arith.constant 0 : i32
    %c0_i32_0 = arith.constant 0 : i32
    %c0_i32_1 = arith.constant 0 : i32
    return %c0_i32, %c0_i32_0 : i32, i32
  }
  func.func @transform_5(%arg0: i32) -> (i32, i32, i32) {
    %c0_i32 = arith.constant 0 : i32
    %c0_i32_0 = arith.constant 0 : i32
    %c0_i32_1 = arith.constant 0 : i32
    %c0_i32_2 = arith.constant 0 : i32
    return %c0_i32, %c0_i32_0, %c0_i32_1 : i32, i32, i32
  }
  func.func @transform_6(%arg0: i32) -> i32 {
    %c0_i32 = arith.constant 0 : i32
    %c0_i32_0 = arith.constant 0 : i32
    return %c0_i32 : i32
  }
  func.func @transform_7(%arg0: i32) -> (i32, i32, i32) {
    %c0_i32 = arith.constant 0 : i32
    %c0_i32_0 = arith.constant 0 : i32
    %c0_i32_1 = arith.constant 0 : i32
    return %c0_i32, %arg0, %c0_i32_0 : i32, i32, i32
  }
}

</mosaic_0001>

<llo_original>
// kernel: custom-call.5
$region0: #{custom-call.5}
  %s0 = inlined_call_operand.vmem [shape: f32[16,4,2,16], index: 0, kind: output, shape index: {}]

// kernel: custom-call
$region0: #{custom-call}
  %s0 = inlined_call_operand.vmem [shape: f32[4,2,16], index: 0, kind: output, shape index: {}]

// kernel: reverse
$region0: #{reverse}
  %s0 = inlined_call_operand.vmem [shape: f32[2,8,16], index: 0, kind: input, shape index: {}]
  %s1 = inlined_call_operand.vmem [shape: f32[2,8,16], index: 1, kind: output, shape index: {}]
  $region1: #{reverse} parent=0
    #allocation0 [shape = 'u8[8192]{0}', space=vmem, size = 0x2000, scoped, tag = 'operand span for operand 0']
    #allocation1 [shape = 'u8[8192]{0}', space=vmem, size = 0x2000, scoped, tag = 'operand span for operand 1']
    // Predicated region
    $region2: #{reverse} parent=1 // pred_check
      _
    $region3: #{reverse} parent=1 // pred_check_branch
      %3 = sbr.rel (0) target = $region5
    $region4: #{reverse} parent=1 // pred_region
      // Predicated region
      $region6: #{reverse} parent=4 // pred_check
        _
      $region7: #{reverse} parent=4 // pred_check_branch
        %5 = sbr.rel (0) target = $region9
      $region8: #{reverse} parent=4 // pred_region
        // Predicated region
        $region21: #{reverse} parent=8 // pred_check
          _
        $region22: #{reverse} parent=8 // pred_check_branch
          %23 = sbr.rel (0) target = $region24
        $region23: #{reverse} parent=8 // pred_region
          loop: start=0, step=1, limit=1
          $region25: #{reverse} parent=23 // loop_pre_header
            _
          $region26: #{reverse} parent=23 // loop_header
            %s25 = sphi 0, %s29
            %p26 = scmp.ge.s32.totalorder %s25, 1
            %s30 = sphi %s0, %s0
            %s31 = sphi [#allocation0], [#allocation0]
          $region27: #{reverse} parent=23 // loop_header_branch
            %28 = sbr.rel (%p26) target = $region31
          $region28: #{reverse} parent=23 // loop_body
            %v32 = vld [vmem:[%s30] sm:$0xff]
            %33 = vst [vmem:[%s31] sm:$0xff] %v32
            %v34 = vld [vmem:[%s30 + $0x8] sm:$0xff]
            %35 = vst [vmem:[%s31 + $0x8] sm:$0xff] %v34
          $region29: #{reverse} parent=23 // loop_footer
            %s29 = sadd.s32 1, %s25
          $region30: #{reverse} parent=23 // loop_footer_branch
            %24 = sbr.rel target = $region26
          $region31: #{reverse} parent=23 // loop_exit
            _
        $region24: #{reverse} parent=8 // pred_fallthru
          _
        // Predicated region
        $region32: #{reverse} parent=8 // pred_check
          _
        $region33: #{reverse} parent=8 // pred_check_branch
          %37 = sbr.rel target = $region35
        $region34: #{reverse} parent=8 // pred_region
          _
        $region35: #{reverse} parent=8 // pred_fallthru
          _
      $region9: #{reverse} parent=4 // pred_fallthru
        _
      // Predicated region
      $region10: #{reverse} parent=4 // pred_check
        _
      $region11: #{reverse} parent=4 // pred_check_branch
        %7 = sbr.rel target = $region13
      $region12: #{reverse} parent=4 // pred_region
        %s9 = ssub.s32 256, 1
        loop: start=0, step=1, limit=1
        $region14: #{reverse} parent=12 // loop_pre_header
          _
        $region15: #{reverse} parent=12 // loop_header
          %s11 = sphi 0, %s15
          %p12 = scmp.ge.s32.totalorder %s11, 1
          %s16 = sphi %s0, %s0
          %s17 = sphi [#allocation0], [#allocation0]
        $region16: #{reverse} parent=12 // loop_header_branch
          %14 = sbr.rel (%p12) target = $region20
        $region17: #{reverse} parent=12 // loop_body
          %v18 = vld [vmem:[%s16] sm:%s9]
          %19 = vst [vmem:[%s17] sm:%s9] %v18
          %v20 = vld [vmem:[%s16 + $0x8] sm:%s9]
          %21 = vst [vmem:[%s17 + $0x8] sm:%s9] %v20
        $region18: #{reverse} parent=12 // loop_footer
          %s15 = sadd.s32 1, %s11
        $region19: #{reverse} parent=12 // loop_footer_branch
          %10 = sbr.rel target = $region15
        $region20: #{reverse} parent=12 // loop_exit
          _
      $region13: #{reverse} parent=4 // pred_fallthru
        _
    $region5: #{reverse} parent=1 // pred_fallthru
      _
    %38 = vnop
    %s39 = scalar_lea.vmem [#allocation0], 7
    %v40 = vld [vmem:[%s39] ss:$-1 sm:$0xff]
    %41 = vst [vmem:[#allocation1] sm:$0xff] %v40
    %s42 = scalar_lea.vmem [#allocation1], 8
    %s43 = scalar_lea.vmem [#allocation0], 8
    %s44 = scalar_lea.vmem %s43, 7 [#allocation0]
    %v45 = vld [vmem:[%s44] ss:$-1 sm:$0xff]
    %46 = vst [vmem:[%s42] sm:$0xff] %v45
    // Predicated region
    $region36: #{reverse} parent=1 // pred_check
      _
    $region37: #{reverse} parent=1 // pred_check_branch
      %48 = sbr.rel (0) target = $region39
    $region38: #{reverse} parent=1 // pred_region
      // Predicated region
      $region40: #{reverse} parent=38 // pred_check
        _
      $region41: #{reverse} parent=38 // pred_check_branch
        %50 = sbr.rel (0) target = $region43
      $region42: #{reverse} parent=38 // pred_region
        // Predicated region
        $region55: #{reverse} parent=42 // pred_check
          _
        $region56: #{reverse} parent=42 // pred_check_branch
          %68 = sbr.rel (0) target = $region58
        $region57: #{reverse} parent=42 // pred_region
          loop: start=0, step=1, limit=1
          $region59: #{reverse} parent=57 // loop_pre_header
            _
          $region60: #{reverse} parent=57 // loop_header
            %s70 = sphi 0, %s74
            %p71 = scmp.ge.s32.totalorder %s70, 1
            %s75 = sphi [#allocation1], [#allocation1]
            %s76 = sphi %s1, %s1
          $region61: #{reverse} parent=57 // loop_header_branch
            %73 = sbr.rel (%p71) target = $region65
          $region62: #{reverse} parent=57 // loop_body
            %v77 = vld [vmem:[%s75] sm:$0xff]
            %78 = vst [vmem:[%s76] sm:$0xff] %v77
            %v79 = vld [vmem:[%s75 + $0x8] sm:$0xff]
            %80 = vst [vmem:[%s76 + $0x8] sm:$0xff] %v79
          $region63: #{reverse} parent=57 // loop_footer
            %s74 = sadd.s32 1, %s70
          $region64: #{reverse} parent=57 // loop_footer_branch
            %69 = sbr.rel target = $region60
          $region65: #{reverse} parent=57 // loop_exit
            _
        $region58: #{reverse} parent=42 // pred_fallthru
          _
        // Predicated region
        $region66: #{reverse} parent=42 // pred_check
          _
        $region67: #{reverse} parent=42 // pred_check_branch
          %82 = sbr.rel target = $region69
        $region68: #{reverse} parent=42 // pred_region
          _
        $region69: #{reverse} parent=42 // pred_fallthru
          _
      $region43: #{reverse} parent=38 // pred_fallthru
        _
      // Predicated region
      $region44: #{reverse} parent=38 // pred_check
        _
      $region45: #{reverse} parent=38 // pred_check_branch
        %52 = sbr.rel target = $region47
      $region46: #{reverse} parent=38 // pred_region
        %s54 = ssub.s32 256, 1
        loop: start=0, step=1, limit=1
        $region48: #{reverse} parent=46 // loop_pre_header
          _
        $region49: #{reverse} parent=46 // loop_header
          %s56 = sphi 0, %s60
          %p57 = scmp.ge.s32.totalorder %s56, 1
          %s61 = sphi [#allocation1], [#allocation1]
          %s62 = sphi %s1, %s1
        $region50: #{reverse} parent=46 // loop_header_branch
          %59 = sbr.rel (%p57) target = $region54
        $region51: #{reverse} parent=46 // loop_body
          %v63 = vld [vmem:[%s61] sm:%s54]
          %64 = vst [vmem:[%s62] sm:%s54] %v63
          %v65 = vld [vmem:[%s61 + $0x8] sm:%s54]
          %66 = vst [vmem:[%s62 + $0x8] sm:%s54] %v65
        $region52: #{reverse} parent=46 // loop_footer
          %s60 = sadd.s32 1, %s56
        $region53: #{reverse} parent=46 // loop_footer_branch
          %55 = sbr.rel target = $region49
        $region54: #{reverse} parent=46 // loop_exit
          _
      $region47: #{reverse} parent=38 // pred_fallthru
        _
    $region39: #{reverse} parent=1 // pred_fallthru
      _
    %83 = vnop

// kernel: attention_rnn_forward.1
$region0: #{attention_rnn_forward.1}
  #allocation0 [shape = 'u32[]', space=smem, size = 0x4, offset = 0x4, fixed_abs, tag = 'smem constant byte address 0x4 - core index']
  #allocation1 [shape = 'u32[144,128]{1,0:T(1,128)}', space=vmem, size = 0x12000, scoped, tag = 'internal scratch']
  %s0 = inlined_call_operand.vmem [shape: f32[2,128,32], index: 0, kind: input, shape index: {}]
  %s1 = inlined_call_operand.vmem [shape: f32[2,128,32], index: 1, kind: input, shape index: {}]
  %s2 = inlined_call_operand.vmem [shape: f32[2,128], index: 2, kind: input, shape index: {}]
  %s3 = inlined_call_operand.vmem [shape: f32[2,128], index: 3, kind: input, shape index: {}]
  %s4 = inlined_call_operand.vmem [shape: f32[3,32], index: 4, kind: input, shape index: {}]
  %s5 = inlined_call_operand.vmem [shape: f32[2,3,32], index: 5, kind: input, shape index: {}]
  %s6 = inlined_call_operand.vmem [shape: f32[3], index: 6, kind: input, shape index: {}]
  %s7 = inlined_call_operand.vmem [shape: f32[4,2,128], index: 7, kind: output, shape index: {}]
  %s8 = sld [smem:[#allocation0]]
  $region42: #{attention_rnn_forward.1} parent=0
    _
  %s10 = ssub.s32 1, %s8
  %s11 = scalar_select 0, %s10, %s8
  $region1: #{attention_rnn_forward.1} parent=0
    #allocation2 [shape = 'u8[512]{0}', space=smem, size = 0x200, scoped, tag = 'input window, operand 6, single buffered']
    #allocation3 [shape = 's32[1]{0}', space=sflag, size = 0x4, scoped, tag = 'scoped memory for attention_rnn_forward.1']
    %12 = vsyncpa [#allocation3], 0
    // Predicated region
    $region2: #{attention_rnn_forward.1} parent=1 // pred_check
      _
    $region3: #{attention_rnn_forward.1} parent=1 // pred_check_branch
      %14 = sbr.rel (0) target = $region5
    $region4: #{attention_rnn_forward.1} parent=1 // pred_region
      _
    $region5: #{attention_rnn_forward.1} parent=1 // pred_fallthru
      _
    // Predicated region
    $region6: #{attention_rnn_forward.1} parent=1 // pred_check
      _
    $region7: #{attention_rnn_forward.1} parent=1 // pred_check_branch
      %16 = sbr.rel (0) target = $region9
    $region8: #{attention_rnn_forward.1} parent=1 // pred_region
      _
    $region9: #{attention_rnn_forward.1} parent=1 // pred_fallthru
      _
    // Predicated region
    $region10: #{attention_rnn_forward.1} parent=1 // pred_check
      _
    $region11: #{attention_rnn_forward.1} parent=1 // pred_check_branch
      %18 = sbr.rel (0) target = $region13
    $region12: #{attention_rnn_forward.1} parent=1 // pred_region
      _
    $region13: #{attention_rnn_forward.1} parent=1 // pred_fallthru
      _
    // Predicated region
    $region14: #{attention_rnn_forward.1} parent=1 // pred_check
      _
    $region15: #{attention_rnn_forward.1} parent=1 // pred_check_branch
      %20 = sbr.rel (0) target = $region17
    $region16: #{attention_rnn_forward.1} parent=1 // pred_region
      _
    $region17: #{attention_rnn_forward.1} parent=1 // pred_fallthru
      _
    // Predicated region
    $region18: #{attention_rnn_forward.1} parent=1 // pred_check
      _
    $region19: #{attention_rnn_forward.1} parent=1 // pred_check_branch
      %22 = sbr.rel (0) target = $region21
    $region20: #{attention_rnn_forward.1} parent=1 // pred_region
      _
    $region21: #{attention_rnn_forward.1} parent=1 // pred_fallthru
      _
    // Predicated region
    $region22: #{attention_rnn_forward.1} parent=1 // pred_check
      _
    $region23: #{attention_rnn_forward.1} parent=1 // pred_check_branch
      %24 = sbr.rel (0) target = $region25
    $region24: #{attention_rnn_forward.1} parent=1 // pred_region
      _
    $region25: #{attention_rnn_forward.1} parent=1 // pred_fallthru
      _
    // Predicated region
    $region26: #{attention_rnn_forward.1} parent=1 // pred_check
      _
    $region27: #{attention_rnn_forward.1} parent=1 // pred_check_branch
      %26 = sbr.rel (0) target = $region29
    $region28: #{attention_rnn_forward.1} parent=1 // pred_region
      %s28 = ssub.s32 16, 16
      %29 = vsyncadd [#allocation3], %s28
      %s31 = sshll.u32 %s6, 4
      %s32 = int_to_ptr.vmem [resolvable:$true] %s31
      %34 = dma.vmem_to_smem %s32, 16, [#allocation2], [#allocation3]
    $region29: #{attention_rnn_forward.1} parent=1 // pred_fallthru
      _
    // Predicated region
    $region30: #{attention_rnn_forward.1} parent=1 // pred_check
      _
    $region31: #{attention_rnn_forward.1} parent=1 // pred_check_branch
      %36 = sbr.rel (0) target = $region33
    $region32: #{attention_rnn_forward.1} parent=1 // pred_region
      %37 = dma.done [#allocation3], 16
    $region33: #{attention_rnn_forward.1} parent=1 // pred_fallthru
      _
    %38 = sfence
    %v39 = vld [vmem:[%s0] sm:$0xff]
    %v40 = vld [vmem:[%s0 + $0x8] sm:$0xff]
    %v41 = vld [vmem:[%s0 + $0x10] sm:$0xff]
    %v42 = vld [vmem:[%s0 + $0x18] sm:$0xff]
    %v43 = vld [vmem:[%s0 + $0x20] sm:$0xff]
    %v44 = vld [vmem:[%s0 + $0x28] sm:$0xff]
    %v45 = vld [vmem:[%s0 + $0x30] sm:$0xff]
    %v46 = vld [vmem:[%s0 + $0x38] sm:$0xff]
    %v47 = vld [vmem:[%s0 + $0x40] sm:$0xff]
    %v48 = vld [vmem:[%s0 + $0x48] sm:$0xff]
    %v49 = vld [vmem:[%s0 + $0x50] sm:$0xff]
    %v50 = vld [vmem:[%s0 + $0x58] sm:$0xff]
    %v51 = vld [vmem:[%s0 + $0x60] sm:$0xff]
    %v52 = vld [vmem:[%s0 + $0x68] sm:$0xff]
    %v53 = vld [vmem:[%s0 + $0x70] sm:$0xff]
    %v54 = vld [vmem:[%s0 + $0x78] sm:$0xff]
    %v55 = vld [vmem:[%s0 + $0x80] sm:$0xff]
    %v56 = vld [vmem:[%s0 + $0x88] sm:$0xff]
    %v57 = vld [vmem:[%s0 + $0x90] sm:$0xff]
    %v58 = vld [vmem:[%s0 + $0x98] sm:$0xff]
    %v59 = vld [vmem:[%s0 + $0xa0] sm:$0xff]
    %v60 = vld [vmem:[%s0 + $0xa8] sm:$0xff]
    %v61 = vld [vmem:[%s0 + $0xb0] sm:$0xff]
    %v62 = vld [vmem:[%s0 + $0xb8] sm:$0xff]
    %v63 = vld [vmem:[%s0 + $0xc0] sm:$0xff]
    %v64 = vld [vmem:[%s0 + $0xc8] sm:$0xff]
    %v65 = vld [vmem:[%s0 + $0xd0] sm:$0xff]
    %v66 = vld [vmem:[%s0 + $0xd8] sm:$0xff]
    %v67 = vld [vmem:[%s0 + $0xe0] sm:$0xff]
    %v68 = vld [vmem:[%s0 + $0xe8] sm:$0xff]
    %v69 = vld [vmem:[%s0 + $0xf0] sm:$0xff]
    %v70 = vld [vmem:[%s0 + $0xf8] sm:$0xff]
    %v71 = vld [vmem:[%s1] sm:$0xff]
    %v72 = vld [vmem:[%s1 + $0x8] sm:$0xff]
    %v73 = vld [vmem:[%s1 + $0x10] sm:$0xff]
    %v74 = vld [vmem:[%s1 + $0x18] sm:$0xff]
    %v75 = vld [vmem:[%s1 + $0x20] sm:$0xff]
    %v76 = vld [vmem:[%s1 + $0x28] sm:$0xff]
    %v77 = vld [vmem:[%s1 + $0x30] sm:$0xff]
    %v78 = vld [vmem:[%s1 + $0x38] sm:$0xff]
    %v79 = vld [vmem:[%s1 + $0x40] sm:$0xff]
    %v80 = vld [vmem:[%s1 + $0x48] sm:$0xff]
    %v81 = vld [vmem:[%s1 + $0x50] sm:$0xff]
    %v82 = vld [vmem:[%s1 + $0x58] sm:$0xff]
    %v83 = vld [vmem:[%s1 + $0x60] sm:$0xff]
    %v84 = vld [vmem:[%s1 + $0x68] sm:$0xff]
    %v85 = vld [vmem:[%s1 + $0x70] sm:$0xff]
    %v86 = vld [vmem:[%s1 + $0x78] sm:$0xff]
    %v87 = vld [vmem:[%s1 + $0x80] sm:$0xff]
    %v88 = vld [vmem:[%s1 + $0x88] sm:$0xff]
    %v89 = vld [vmem:[%s1 + $0x90] sm:$0xff]
    %v90 = vld [vmem:[%s1 + $0x98] sm:$0xff]
    %v91 = vld [vmem:[%s1 + $0xa0] sm:$0xff]
    %v92 = vld [vmem:[%s1 + $0xa8] sm:$0xff]
    %v93 = vld [vmem:[%s1 + $0xb0] sm:$0xff]
    %v94 = vld [vmem:[%s1 + $0xb8] sm:$0xff]
    %v95 = vld [vmem:[%s1 + $0xc0] sm:$0xff]
    %v96 = vld [vmem:[%s1 + $0xc8] sm:$0xff]
    %v97 = vld [vmem:[%s1 + $0xd0] sm:$0xff]
    %v98 = vld [vmem:[%s1 + $0xd8] sm:$0xff]
    %v99 = vld [vmem:[%s1 + $0xe0] sm:$0xff]
    %v100 = vld [vmem:[%s1 + $0xe8] sm:$0xff]
    %v101 = vld [vmem:[%s1 + $0xf0] sm:$0xff]
    %v102 = vld [vmem:[%s1 + $0xf8] sm:$0xff]
    %v103 = vld [vmem:[%s2] sm:$0x3]
    %v104 = vld [vmem:[%s3] sm:$0x3]
    %v105 = vld [vmem:[%s4] sm:$0x7]
    %v106 = vld [vmem:[%s5] sm:$0x7]
    %v107 = vld [vmem:[%s5 + $0x4] sm:$0x7]
    %s108 = sld [smem:[#allocation2]]
    %s109 = sld [smem:[#allocation2 + $0x1]]
    %s110 = sld [smem:[#allocation2 + $0x2]]
    %v111 = vlaneseq
    %v112 = vshrl.u32 %v111, 7
    %v113 = vsub.s32 0, %v112
    %v114 = vrot.slane %v105, %v113
    %v115 = vmul.f32 %v39, %v114
    %v116 = vmul.f32 %v40, %v114
    %v117 = vmul.f32 %v41, %v114
    %v118 = vmul.f32 %v42, %v114
    %v119 = vmul.f32 %v43, %v114
    %v120 = vmul.f32 %v44, %v114
    %v121 = vmul.f32 %v45, %v114
    %v122 = vmul.f32 %v46, %v114
    %v123 = vmul.f32 %v47, %v114
    %v124 = vmul.f32 %v48, %v114
    %v125 = vmul.f32 %v49, %v114
    %v126 = vmul.f32 %v50, %v114
    %v127 = vmul.f32 %v51, %v114
    %v128 = vmul.f32 %v52, %v114
    %v129 = vmul.f32 %v53, %v114
    %v130 = vmul.f32 %v54, %v114
    %v131 = vmul.f32 %v55, %v114
    %v132 = vmul.f32 %v56, %v114
    %v133 = vmul.f32 %v57, %v114
    %v134 = vmul.f32 %v58, %v114
    %v135 = vmul.f32 %v59, %v114
    %v136 = vmul.f32 %v60, %v114
    %v137 = vmul.f32 %v61, %v114
    %v138 = vmul.f32 %v62, %v114
    %v139 = vmul.f32 %v63, %v114
    %v140 = vmul.f32 %v64, %v114
    %v141 = vmul.f32 %v65, %v114
    %v142 = vmul.f32 %v66, %v114
    %v143 = vmul.f32 %v67, %v114
    %v144 = vmul.f32 %v68, %v114
    %v145 = vmul.f32 %v69, %v114
    %v146 = vmul.f32 %v70, %v114
    %vm147 = vcmask 261120
    %v148 = vsel %vm147, %v115, 0.0
    %149 = vadd.xlane.f32.xlu0 %v148
    %v150 = vpop.xlane.xlu0 %149
    %v151 = vsel %vm147, %v116, 0.0
    %152 = vadd.xlane.f32.xlu0 %v151
    %v153 = vpop.xlane.xlu0 %152
    %v154 = vsel %vm147, %v117, 0.0
    %155 = vadd.xlane.f32.xlu0 %v154
    %v156 = vpop.xlane.xlu0 %155
    %v157 = vsel %vm147, %v118, 0.0
    %158 = vadd.xlane.f32.xlu0 %v157
    %v159 = vpop.xlane.xlu0 %158
    %v160 = vsel %vm147, %v119, 0.0
    %161 = vadd.xlane.f32.xlu0 %v160
    %v162 = vpop.xlane.xlu0 %161
    %v163 = vsel %vm147, %v120, 0.0
    %164 = vadd.xlane.f32.xlu0 %v163
    %v165 = vpop.xlane.xlu0 %164
    %v166 = vsel %vm147, %v121, 0.0
    %167 = vadd.xlane.f32.xlu0 %v166
    %v168 = vpop.xlane.xlu0 %167
    %v169 = vsel %vm147, %v122, 0.0
    %170 = vadd.xlane.f32.xlu0 %v169
    %v171 = vpop.xlane.xlu0 %170
    %v172 = vsel %vm147, %v123, 0.0
    %173 = vadd.xlane.f32.xlu0 %v172
    %v174 = vpop.xlane.xlu0 %173
    %v175 = vsel %vm147, %v124, 0.0
    %176 = vadd.xlane.f32.xlu0 %v175
    %v177 = vpop.xlane.xlu0 %176
    %v178 = vsel %vm147, %v125, 0.0
    %179 = vadd.xlane.f32.xlu0 %v178
    %v180 = vpop.xlane.xlu0 %179
    %v181 = vsel %vm147, %v126, 0.0
    %182 = vadd.xlane.f32.xlu0 %v181
    %v183 = vpop.xlane.xlu0 %182
    %v184 = vsel %vm147, %v127, 0.0
    %185 = vadd.xlane.f32.xlu0 %v184
    %v186 = vpop.xlane.xlu0 %185
    %v187 = vsel %vm147, %v128, 0.0
    %188 = vadd.xlane.f32.xlu0 %v187
    %v189 = vpop.xlane.xlu0 %188
    %v190 = vsel %vm147, %v129, 0.0
    %191 = vadd.xlane.f32.xlu0 %v190
    %v192 = vpop.xlane.xlu0 %191
    %v193 = vsel %vm147, %v130, 0.0
    %194 = vadd.xlane.f32.xlu0 %v193
    %v195 = vpop.xlane.xlu0 %194
    %v196 = vsel %vm147, %v131, 0.0
    %197 = vadd.xlane.f32.xlu0 %v196
    %v198 = vpop.xlane.xlu0 %197
    %v199 = vsel %vm147, %v132, 0.0
    %200 = vadd.xlane.f32.xlu0 %v199
    %v201 = vpop.xlane.xlu0 %200
    %v202 = vsel %vm147, %v133, 0.0
    %203 = vadd.xlane.f32.xlu0 %v202
    %v204 = vpop.xlane.xlu0 %203
    %v205 = vsel %vm147, %v134, 0.0
    %206 = vadd.xlane.f32.xlu0 %v205
    %v207 = vpop.xlane.xlu0 %206
    %v208 = vsel %vm147, %v135, 0.0
    %209 = vadd.xlane.f32.xlu0 %v208
    %v210 = vpop.xlane.xlu0 %209
    %v211 = vsel %vm147, %v136, 0.0
    %212 = vadd.xlane.f32.xlu0 %v211
    %v213 = vpop.xlane.xlu0 %212
    %v214 = vsel %vm147, %v137, 0.0
    %215 = vadd.xlane.f32.xlu0 %v214
    %v216 = vpop.xlane.xlu0 %215
    %v217 = vsel %vm147, %v138, 0.0
    %218 = vadd.xlane.f32.xlu0 %v217
    %v219 = vpop.xlane.xlu0 %218
    %v220 = vsel %vm147, %v139, 0.0
    %221 = vadd.xlane.f32.xlu0 %v220
    %v222 = vpop.xlane.xlu0 %221
    %v223 = vsel %vm147, %v140, 0.0
    %224 = vadd.xlane.f32.xlu0 %v223
    %v225 = vpop.xlane.xlu0 %224
    %v226 = vsel %vm147, %v141, 0.0
    %227 = vadd.xlane.f32.xlu0 %v226
    %v228 = vpop.xlane.xlu0 %227
    %v229 = vsel %vm147, %v142, 0.0
    %230 = vadd.xlane.f32.xlu0 %v229
    %v231 = vpop.xlane.xlu0 %230
    %v232 = vsel %vm147, %v143, 0.0
    %233 = vadd.xlane.f32.xlu0 %v232
    %v234 = vpop.xlane.xlu0 %233
    %v235 = vsel %vm147, %v144, 0.0
    %236 = vadd.xlane.f32.xlu0 %v235
    %v237 = vpop.xlane.xlu0 %236
    %v238 = vsel %vm147, %v145, 0.0
    %239 = vadd.xlane.f32.xlu0 %v238
    %v240 = vpop.xlane.xlu0 %239
    %v241 = vsel %vm147, %v146, 0.0
    %242 = vadd.xlane.f32.xlu0 %v241
    %v243 = vpop.xlane.xlu0 %242
    %v244 = vlaneseq
    %v245 = vshrl.u32 %v244, 7
    %v246 = vsub.s32 1, %v245
    %v247 = vrot.slane %v105, %v246
    %v248 = vmul.f32 %v71, %v247
    %v249 = vmul.f32 %v72, %v247
    %v250 = vmul.f32 %v73, %v247
    %v251 = vmul.f32 %v74, %v247
    %v252 = vmul.f32 %v75, %v247
    %v253 = vmul.f32 %v76, %v247
    %v254 = vmul.f32 %v77, %v247
    %v255 = vmul.f32 %v78, %v247
    %v256 = vmul.f32 %v79, %v247
    %v257 = vmul.f32 %v80, %v247
    %v258 = vmul.f32 %v81, %v247
    %v259 = vmul.f32 %v82, %v247
    %v260 = vmul.f32 %v83, %v247
    %v261 = vmul.f32 %v84, %v247
    %v262 = vmul.f32 %v85, %v247
    %v263 = vmul.f32 %v86, %v247
    %v264 = vmul.f32 %v87, %v247
    %v265 = vmul.f32 %v88, %v247
    %v266 = vmul.f32 %v89, %v247
    %v267 = vmul.f32 %v90, %v247
    %v268 = vmul.f32 %v91, %v247
    %v269 = vmul.f32 %v92, %v247
    %v270 = vmul.f32 %v93, %v247
    %v271 = vmul.f32 %v94, %v247
    %v272 = vmul.f32 %v95, %v247
    %v273 = vmul.f32 %v96, %v247
    %v274 = vmul.f32 %v97, %v247
    %v275 = vmul.f32 %v98, %v247
    %v276 = vmul.f32 %v99, %v247
    %v277 = vmul.f32 %v100, %v247
    %v278 = vmul.f32 %v101, %v247
    %v279 = vmul.f32 %v102, %v247
    %v280 = vsel %vm147, %v248, 0.0
    %281 = vadd.xlane.f32.xlu0 %v280
    %v282 = vpop.xlane.xlu0 %281
    %v283 = vsel %vm147, %v249, 0.0
    %284 = vadd.xlane.f32.xlu0 %v283
    %v285 = vpop.xlane.xlu0 %284
    %v286 = vsel %vm147, %v250, 0.0
    %287 = vadd.xlane.f32.xlu0 %v286
    %v288 = vpop.xlane.xlu0 %287
    %v289 = vsel %vm147, %v251, 0.0
    %290 = vadd.xlane.f32.xlu0 %v289
    %v291 = vpop.xlane.xlu0 %290
    %v292 = vsel %vm147, %v252, 0.0
    %293 = vadd.xlane.f32.xlu0 %v292
    %v294 = vpop.xlane.xlu0 %293
    %v295 = vsel %vm147, %v253, 0.0
    %296 = vadd.xlane.f32.xlu0 %v295
    %v297 = vpop.xlane.xlu0 %296
    %v298 = vsel %vm147, %v254, 0.0
    %299 = vadd.xlane.f32.xlu0 %v298
    %v300 = vpop.xlane.xlu0 %299
    %v301 = vsel %vm147, %v255, 0.0
    %302 = vadd.xlane.f32.xlu0 %v301
    %v303 = vpop.xlane.xlu0 %302
    %v304 = vsel %vm147, %v256, 0.0
    %305 = vadd.xlane.f32.xlu0 %v304
    %v306 = vpop.xlane.xlu0 %305
    %v307 = vsel %vm147, %v257, 0.0
    %308 = vadd.xlane.f32.xlu0 %v307
    %v309 = vpop.xlane.xlu0 %308
    %v310 = vsel %vm147, %v258, 0.0
    %311 = vadd.xlane.f32.xlu0 %v310
    %v312 = vpop.xlane.xlu0 %311
    %v313 = vsel %vm147, %v259, 0.0
    %314 = vadd.xlane.f32.xlu0 %v313
    %v315 = vpop.xlane.xlu0 %314
    %v316 = vsel %vm147, %v260, 0.0
    %317 = vadd.xlane.f32.xlu0 %v316
    %v318 = vpop.xlane.xlu0 %317
    %v319 = vsel %vm147, %v261, 0.0
    %320 = vadd.xlane.f32.xlu0 %v319
    %v321 = vpop.xlane.xlu0 %320
    %v322 = vsel %vm147, %v262, 0.0
    %323 = vadd.xlane.f32.xlu0 %v322
    %v324 = vpop.xlane.xlu0 %323
    %v325 = vsel %vm147, %v263, 0.0
    %326 = vadd.xlane.f32.xlu0 %v325
    %v327 = vpop.xlane.xlu0 %326
    %v328 = vsel %vm147, %v264, 0.0
    %329 = vadd.xlane.f32.xlu0 %v328
    %v330 = vpop.xlane.xlu0 %329
    %v331 = vsel %vm147, %v265, 0.0
    %332 = vadd.xlane.f32.xlu0 %v331
    %v333 = vpop.xlane.xlu0 %332
    %v334 = vsel %vm147, %v266, 0.0
    %335 = vadd.xlane.f32.xlu0 %v334
    %v336 = vpop.xlane.xlu0 %335
    %v337 = vsel %vm147, %v267, 0.0
    %338 = vadd.xlane.f32.xlu0 %v337
    %v339 = vpop.xlane.xlu0 %338
    %v340 = vsel %vm147, %v268, 0.0
    %341 = vadd.xlane.f32.xlu0 %v340
    %v342 = vpop.xlane.xlu0 %341
    %v343 = vsel %vm147, %v269, 0.0
    %344 = vadd.xlane.f32.xlu0 %v343
    %v345 = vpop.xlane.xlu0 %344
    %v346 = vsel %vm147, %v270, 0.0
    %347 = vadd.xlane.f32.xlu0 %v346
    %v348 = vpop.xlane.xlu0 %347
    %v349 = vsel %vm147, %v271, 0.0
    %350 = vadd.xlane.f32.xlu0 %v349
    %v351 = vpop.xlane.xlu0 %350
    %v352 = vsel %vm147, %v272, 0.0
    %353 = vadd.xlane.f32.xlu0 %v352
    %v354 = vpop.xlane.xlu0 %353
    %v355 = vsel %vm147, %v273, 0.0
    %356 = vadd.xlane.f32.xlu0 %v355
    %v357 = vpop.xlane.xlu0 %356
    %v358 = vsel %vm147, %v274, 0.0
    %359 = vadd.xlane.f32.xlu0 %v358
    %v360 = vpop.xlane.xlu0 %359
    %v361 = vsel %vm147, %v275, 0.0
    %362 = vadd.xlane.f32.xlu0 %v361
    %v363 = vpop.xlane.xlu0 %362
    %v364 = vsel %vm147, %v276, 0.0
    %365 = vadd.xlane.f32.xlu0 %v364
    %v366 = vpop.xlane.xlu0 %365
    %v367 = vsel %vm147, %v277, 0.0
    %368 = vadd.xlane.f32.xlu0 %v367
    %v369 = vpop.xlane.xlu0 %368
    %v370 = vsel %vm147, %v278, 0.0
    %371 = vadd.xlane.f32.xlu0 %v370
    %v372 = vpop.xlane.xlu0 %371
    %v373 = vsel %vm147, %v279, 0.0
    %374 = vadd.xlane.f32.xlu0 %v373
    %v375 = vpop.xlane.xlu0 %374
    %v376 = vlaneseq
    %v377 = vshrl.u32 %v376, 7
    %v378 = vsub.s32 2, %v377
    %v379 = vrot.slane %v105, %v378
    %v380 = vmul.f32 %v39, %v379
    %v381 = vmul.f32 %v40, %v379
    %v382 = vmul.f32 %v41, %v379
    %v383 = vmul.f32 %v42, %v379
    %v384 = vmul.f32 %v43, %v379
    %v385 = vmul.f32 %v44, %v379
    %v386 = vmul.f32 %v45, %v379
    %v387 = vmul.f32 %v46, %v379
    %v388 = vmul.f32 %v47, %v379
    %v389 = vmul.f32 %v48, %v379
    %v390 = vmul.f32 %v49, %v379
    %v391 = vmul.f32 %v50, %v379
    %v392 = vmul.f32 %v51, %v379
    %v393 = vmul.f32 %v52, %v379
    %v394 = vmul.f32 %v53, %v379
    %v395 = vmul.f32 %v54, %v379
    %v396 = vmul.f32 %v55, %v379
    %v397 = vmul.f32 %v56, %v379
    %v398 = vmul.f32 %v57, %v379
    %v399 = vmul.f32 %v58, %v379
    %v400 = vmul.f32 %v59, %v379
    %v401 = vmul.f32 %v60, %v379
    %v402 = vmul.f32 %v61, %v379
    %v403 = vmul.f32 %v62, %v379
    %v404 = vmul.f32 %v63, %v379
    %v405 = vmul.f32 %v64, %v379
    %v406 = vmul.f32 %v65, %v379
    %v407 = vmul.f32 %v66, %v379
    %v408 = vmul.f32 %v67, %v379
    %v409 = vmul.f32 %v68, %v379
    %v410 = vmul.f32 %v69, %v379
    %v411 = vmul.f32 %v70, %v379
    %v413 = vsel %vm147, %v380, 0
    %v416 = vsel %vm147, %v381, 0
    %v419 = vsel %vm147, %v382, 0
    %v422 = vsel %vm147, %v383, 0
    %v425 = vsel %vm147, %v384, 0
    %v428 = vsel %vm147, %v385, 0
    %v431 = vsel %vm147, %v386, 0
    %v434 = vsel %vm147, %v387, 0
    %v437 = vsel %vm147, %v388, 0
    %v440 = vsel %vm147, %v389, 0
    %v443 = vsel %vm147, %v390, 0
    %v446 = vsel %vm147, %v391, 0
    %v449 = vsel %vm147, %v392, 0
    %v452 = vsel %vm147, %v393, 0
    %v455 = vsel %vm147, %v394, 0
    %v458 = vsel %vm147, %v395, 0
    %v461 = vsel %vm147, %v71, 0
    %v464 = vsel %vm147, %v72, 0
    %v467 = vsel %vm147, %v73, 0
    %v470 = vsel %vm147, %v74, 0
    %v473 = vsel %vm147, %v75, 0
    %v476 = vsel %vm147, %v76, 0
    %v479 = vsel %vm147, %v77, 0
    %v482 = vsel %vm147, %v78, 0
    %v485 = vsel %vm147, %v79, 0
    %v488 = vsel %vm147, %v80, 0
    %v491 = vsel %vm147, %v81, 0
    %v494 = vsel %vm147, %v82, 0
    %v497 = vsel %vm147, %v83, 0
    %v500 = vsel %vm147, %v84, 0
    %v503 = vsel %vm147, %v85, 0
    %v506 = vsel %vm147, %v86, 0
    %508 = vmatprep.subr.mxu0 0.0
    %509 = vmatpush1.xpose.msra.mxu0 %v506
    %510 = vmatprep.subr.mxu0 0.0
    %511 = vmatpush1.xpose.msra.mxu0 %v503
    %512 = vmatprep.subr.mxu0 0.0
    %513 = vmatpush1.xpose.msra.mxu0 %v500
    %514 = vmatprep.subr.mxu0 0.0
    %515 = vmatpush1.xpose.msra.mxu0 %v497
    %516 = vmatprep.subr.mxu0 0.0
    %517 = vmatpush1.xpose.msra.mxu0 %v494
    %518 = vmatprep.subr.mxu0 0.0
    %519 = vmatpush1.xpose.msra.mxu0 %v491
    %520 = vmatprep.subr.mxu0 0.0
    %521 = vmatpush1.xpose.msra.mxu0 %v488
    %522 = vmatprep.subr.mxu0 0.0
    %523 = vmatpush1.xpose.msra.mxu0 %v485
    %524 = vmatprep.subr.mxu0 0.0
    %525 = vmatpush1.xpose.msra.mxu0 %v482
    %526 = vmatprep.subr.mxu0 0.0
    %527 = vmatpush1.xpose.msra.mxu0 %v479
    %528 = vmatprep.subr.mxu0 0.0
    %529 = vmatpush1.xpose.msra.mxu0 %v476
    %530 = vmatprep.subr.mxu0 0.0
    %531 = vmatpush1.xpose.msra.mxu0 %v473
    %532 = vmatprep.subr.mxu0 0.0
    %533 = vmatpush1.xpose.msra.mxu0 %v470
    %534 = vmatprep.subr.mxu0 0.0
    %535 = vmatpush1.xpose.msra.mxu0 %v467
    %536 = vmatprep.subr.mxu0 0.0
    %537 = vmatpush1.xpose.msra.mxu0 %v464
    %538 = vmatprep.subr.mxu0 0.0
    %539 = vmatpush1.xpose.msra.mxu0 %v461
    %540 = vmatprep.subr.mxu0 0.0
    %541 = vmatpush2.xpose.msra.mxu0 0.0
    %542 = vmatprep.subr.mxu0 0.0
    %543 = vmatpush2.xpose.msra.mxu0 0.0
    %544 = vmatprep.subr.mxu0 0.0
    %545 = vmatpush2.xpose.msra.mxu0 0.0
    %546 = vmatprep.subr.mxu0 0.0
    %547 = vmatpush2.xpose.msra.mxu0 0.0
    %548 = vmatprep.subr.mxu0 0.0
    %549 = vmatpush2.xpose.msra.mxu0 0.0
    %550 = vmatprep.subr.mxu0 0.0
    %551 = vmatpush2.xpose.msra.mxu0 0.0
    %552 = vmatprep.subr.mxu0 0.0
    %553 = vmatpush2.xpose.msra.mxu0 0.0
    %554 = vmatprep.subr.mxu0 0.0
    %555 = vmatpush2.xpose.msra.mxu0 0.0
    %556 = vmatprep.subr.mxu0 0.0
    %557 = vmatpush2.xpose.msra.mxu0 0.0
    %558 = vmatprep.subr.mxu0 0.0
    %559 = vmatpush2.xpose.msra.mxu0 0.0
    %560 = vmatprep.subr.mxu0 0.0
    %561 = vmatpush2.xpose.msra.mxu0 0.0
    %562 = vmatprep.subr.mxu0 0.0
    %563 = vmatpush2.xpose.msra.mxu0 0.0
    %564 = vmatprep.subr.mxu0 0.0
    %565 = vmatpush2.xpose.msra.mxu0 0.0
    %566 = vmatprep.subr.mxu0 0.0
    %567 = vmatpush2.xpose.msra.mxu0 0.0
    %568 = vmatprep.subr.mxu0 0.0
    %569 = vmatpush2.xpose.msra.mxu0 0.0
    %570 = vmatprep.subr.mxu0 0.0
    %571 = vmatpush2.xpose.msra.mxu0 0.0
    %572 = vmatprep.mubr.f32.mxu0 0.0
    %573 = vmatmul.mubr.f32.gmra.mxu0 %v413
    %v574 = vpop.f32.mrf.mxu0
    %v575 = vadd.f32 %v150, %v574
    %v576 = vpop.f32.mrf.mxu0
    %577 = vmatprep.mubr.f32.mxu0 0.0
    %578 = vmatmul.mubr.f32.gmra.mxu0 %v416
    %v579 = vpop.f32.mrf.mxu0
    %v580 = vadd.f32 %v153, %v579
    %v581 = vpop.f32.mrf.mxu0
    %582 = vmatprep.mubr.f32.mxu0 0.0
    %583 = vmatmul.mubr.f32.gmra.mxu0 %v419
    %v584 = vpop.f32.mrf.mxu0
    %v585 = vadd.f32 %v156, %v584
    %v586 = vpop.f32.mrf.mxu0
    %587 = vmatprep.mubr.f32.mxu0 0.0
    %588 = vmatmul.mubr.f32.gmra.mxu0 %v422
    %v589 = vpop.f32.mrf.mxu0
    %v590 = vadd.f32 %v159, %v589
    %v591 = vpop.f32.mrf.mxu0
    %592 = vmatprep.mubr.f32.mxu0 0.0
    %593 = vmatmul.mubr.f32.gmra.mxu0 %v425
    %v594 = vpop.f32.mrf.mxu0
    %v595 = vadd.f32 %v162, %v594
    %v596 = vpop.f32.mrf.mxu0
    %597 = vmatprep.mubr.f32.mxu0 0.0
    %598 = vmatmul.mubr.f32.gmra.mxu0 %v428
    %v599 = vpop.f32.mrf.mxu0
    %v600 = vadd.f32 %v165, %v599
    %v601 = vpop.f32.mrf.mxu0
    %602 = vmatprep.mubr.f32.mxu0 0.0
    %603 = vmatmul.mubr.f32.gmra.mxu0 %v431
    %v604 = vpop.f32.mrf.mxu0
    %v605 = vadd.f32 %v168, %v604
    %v606 = vpop.f32.mrf.mxu0
    %607 = vmatprep.mubr.f32.mxu0 0.0
    %608 = vmatmul.mubr.f32.gmra.mxu0 %v434
    %v609 = vpop.f32.mrf.mxu0
    %v610 = vadd.f32 %v171, %v609
    %v611 = vpop.f32.mrf.mxu0
    %612 = vmatprep.mubr.f32.mxu0 0.0
    %613 = vmatmul.mubr.f32.gmra.mxu0 %v437
    %v614 = vpop.f32.mrf.mxu0
    %v615 = vadd.f32 %v174, %v614
    %v616 = vpop.f32.mrf.mxu0
    %617 = vmatprep.mubr.f32.mxu0 0.0
    %618 = vmatmul.mubr.f32.gmra.mxu0 %v440
    %v619 = vpop.f32.mrf.mxu0
    %v620 = vadd.f32 %v177, %v619
    %v621 = vpop.f32.mrf.mxu0
    %622 = vmatprep.mubr.f32.mxu0 0.0
    %623 = vmatmul.mubr.f32.gmra.mxu0 %v443
    %v624 = vpop.f32.mrf.mxu0
    %v625 = vadd.f32 %v180, %v624
    %v626 = vpop.f32.mrf.mxu0
    %627 = vmatprep.mubr.f32.mxu0 0.0
    %628 = vmatmul.mubr.f32.gmra.mxu0 %v446
    %v629 = vpop.f32.mrf.mxu0
    %v630 = vadd.f32 %v183, %v629
    %v631 = vpop.f32.mrf.mxu0
    %632 = vmatprep.mubr.f32.mxu0 0.0
    %633 = vmatmul.mubr.f32.gmra.mxu0 %v449
    %v634 = vpop.f32.mrf.mxu0
    %v635 = vadd.f32 %v186, %v634
    %v636 = vpop.f32.mrf.mxu0
    %637 = vmatprep.mubr.f32.mxu0 0.0
    %638 = vmatmul.mubr.f32.gmra.mxu0 %v452
    %v639 = vpop.f32.mrf.mxu0
    %v640 = vadd.f32 %v189, %v639
    %v641 = vpop.f32.mrf.mxu0
    %642 = vmatprep.mubr.f32.mxu0 0.0
    %643 = vmatmul.mubr.f32.gmra.mxu0 %v455
    %v644 = vpop.f32.mrf.mxu0
    %v645 = vadd.f32 %v192, %v644
    %v646 = vpop.f32.mrf.mxu0
    %647 = vmatprep.mubr.f32.mxu0 0.0
    %648 = vmatmul.mubr.f32.gmra.mxu0 %v458
    %v649 = vpop.f32.mrf.mxu0
    %v650 = vadd.f32 %v195, %v649
    %v651 = vpop.f32.mrf.mxu0
    %652 = vdwg.mxu0
    %v654 = vsel %vm147, %v396, 0
    %v657 = vsel %vm147, %v397, 0
    %v660 = vsel %vm147, %v398, 0
    %v663 = vsel %vm147, %v399, 0
    %v666 = vsel %vm147, %v400, 0
    %v669 = vsel %vm147, %v401, 0
    %v672 = vsel %vm147, %v402, 0
    %v675 = vsel %vm147, %v403, 0
    %v678 = vsel %vm147, %v404, 0
    %v681 = vsel %vm147, %v405, 0
    %v684 = vsel %vm147, %v406, 0
    %v687 = vsel %vm147, %v407, 0
    %v690 = vsel %vm147, %v408, 0
    %v693 = vsel %vm147, %v409, 0
    %v696 = vsel %vm147, %v410, 0
    %v699 = vsel %vm147, %v411, 0
    %v702 = vsel %vm147, %v87, 0
    %v705 = vsel %vm147, %v88, 0
    %v708 = vsel %vm147, %v89, 0
    %v711 = vsel %vm147, %v90, 0
    %v714 = vsel %vm147, %v91, 0
    %v717 = vsel %vm147, %v92, 0
    %v720 = vsel %vm147, %v93, 0
    %v723 = vsel %vm147, %v94, 0
    %v726 = vsel %vm147, %v95, 0
    %v729 = vsel %vm147, %v96, 0
    %v732 = vsel %vm147, %v97, 0
    %v735 = vsel %vm147, %v98, 0
    %v738 = vsel %vm147, %v99, 0
    %v741 = vsel %vm147, %v100, 0
    %v744 = vsel %vm147, %v101, 0
    %v747 = vsel %vm147, %v102, 0
    %749 = vmatprep.subr.mxu0 0.0
    %750 = vmatpush1.xpose.msra.mxu0 %v747
    %751 = vmatprep.subr.mxu0 0.0
    %752 = vmatpush1.xpose.msra.mxu0 %v744
    %753 = vmatprep.subr.mxu0 0.0
    %754 = vmatpush1.xpose.msra.mxu0 %v741
    %755 = vmatprep.subr.mxu0 0.0
    %756 = vmatpush1.xpose.msra.mxu0 %v738
    %757 = vmatprep.subr.mxu0 0.0
    %758 = vmatpush1.xpose.msra.mxu0 %v735
    %759 = vmatprep.subr.mxu0 0.0
    %760 = vmatpush1.xpose.msra.mxu0 %v732
    %761 = vmatprep.subr.mxu0 0.0
    %762 = vmatpush1.xpose.msra.mxu0 %v729
    %763 = vmatprep.subr.mxu0 0.0
    %764 = vmatpush1.xpose.msra.mxu0 %v726
    %765 = vmatprep.subr.mxu0 0.0
    %766 = vmatpush1.xpose.msra.mxu0 %v723
    %767 = vmatprep.subr.mxu0 0.0
    %768 = vmatpush1.xpose.msra.mxu0 %v720
    %769 = vmatprep.subr.mxu0 0.0
    %770 = vmatpush1.xpose.msra.mxu0 %v717
    %771 = vmatprep.subr.mxu0 0.0
    %772 = vmatpush1.xpose.msra.mxu0 %v714
    %773 = vmatprep.subr.mxu0 0.0
    %774 = vmatpush1.xpose.msra.mxu0 %v711
    %775 = vmatprep.subr.mxu0 0.0
    %776 = vmatpush1.xpose.msra.mxu0 %v708
    %777 = vmatprep.subr.mxu0 0.0
    %778 = vmatpush1.xpose.msra.mxu0 %v705
    %779 = vmatprep.subr.mxu0 0.0
    %780 = vmatpush1.xpose.msra.mxu0 %v702
    %781 = vmatprep.subr.mxu0 0.0
    %782 = vmatpush2.xpose.msra.mxu0 0.0
    %783 = vmatprep.subr.mxu0 0.0
    %784 = vmatpush2.xpose.msra.mxu0 0.0
    %785 = vmatprep.subr.mxu0 0.0
    %786 = vmatpush2.xpose.msra.mxu0 0.0
    %787 = vmatprep.subr.mxu0 0.0
    %788 = vmatpush2.xpose.msra.mxu0 0.0
    %789 = vmatprep.subr.mxu0 0.0
    %790 = vmatpush2.xpose.msra.mxu0 0.0
    %791 = vmatprep.subr.mxu0 0.0
    %792 = vmatpush2.xpose.msra.mxu0 0.0
    %793 = vmatprep.subr.mxu0 0.0
    %794 = vmatpush2.xpose.msra.mxu0 0.0
    %795 = vmatprep.subr.mxu0 0.0
    %796 = vmatpush2.xpose.msra.mxu0 0.0
    %797 = vmatprep.subr.mxu0 0.0
    %798 = vmatpush2.xpose.msra.mxu0 0.0
    %799 = vmatprep.subr.mxu0 0.0
    %800 = vmatpush2.xpose.msra.mxu0 0.0
    %801 = vmatprep.subr.mxu0 0.0
    %802 = vmatpush2.xpose.msra.mxu0 0.0
    %803 = vmatprep.subr.mxu0 0.0
    %804 = vmatpush2.xpose.msra.mxu0 0.0
    %805 = vmatprep.subr.mxu0 0.0
    %806 = vmatpush2.xpose.msra.mxu0 0.0
    %807 = vmatprep.subr.mxu0 0.0
    %808 = vmatpush2.xpose.msra.mxu0 0.0
    %809 = vmatprep.subr.mxu0 0.0
    %810 = vmatpush2.xpose.msra.mxu0 0.0
    %811 = vmatprep.subr.mxu0 0.0
    %812 = vmatpush2.xpose.msra.mxu0 0.0
    %813 = vmatprep.mubr.f32.mxu0 0.0
    %814 = vmatmul.mubr.f32.gmra.mxu0 %v654
    %v815 = vpop.f32.mrf.mxu0
    %v816 = vadd.f32 %v198, %v815
    %v817 = vpop.f32.mrf.mxu0
    %818 = vmatprep.mubr.f32.mxu0 0.0
    %819 = vmatmul.mubr.f32.gmra.mxu0 %v657
    %v820 = vpop.f32.mrf.mxu0
    %v821 = vadd.f32 %v201, %v820
    %v822 = vpop.f32.mrf.mxu0
    %823 = vmatprep.mubr.f32.mxu0 0.0
    %824 = vmatmul.mubr.f32.gmra.mxu0 %v660
    %v825 = vpop.f32.mrf.mxu0
    %v826 = vadd.f32 %v204, %v825
    %v827 = vpop.f32.mrf.mxu0
    %828 = vmatprep.mubr.f32.mxu0 0.0
    %829 = vmatmul.mubr.f32.gmra.mxu0 %v663
    %v830 = vpop.f32.mrf.mxu0
    %v831 = vadd.f32 %v207, %v830
    %v832 = vpop.f32.mrf.mxu0
    %833 = vmatprep.mubr.f32.mxu0 0.0
    %834 = vmatmul.mubr.f32.gmra.mxu0 %v666
    %v835 = vpop.f32.mrf.mxu0
    %v836 = vadd.f32 %v210, %v835
    %v837 = vpop.f32.mrf.mxu0
    %838 = vmatprep.mubr.f32.mxu0 0.0
    %839 = vmatmul.mubr.f32.gmra.mxu0 %v669
    %v840 = vpop.f32.mrf.mxu0
    %v841 = vadd.f32 %v213, %v840
    %v842 = vpop.f32.mrf.mxu0
    %843 = vmatprep.mubr.f32.mxu0 0.0
    %844 = vmatmul.mubr.f32.gmra.mxu0 %v672
    %v845 = vpop.f32.mrf.mxu0
    %v846 = vadd.f32 %v216, %v845
    %v847 = vpop.f32.mrf.mxu0
    %848 = vmatprep.mubr.f32.mxu0 0.0
    %849 = vmatmul.mubr.f32.gmra.mxu0 %v675
    %v850 = vpop.f32.mrf.mxu0
    %v851 = vadd.f32 %v219, %v850
    %v852 = vpop.f32.mrf.mxu0
    %853 = vmatprep.mubr.f32.mxu0 0.0
    %854 = vmatmul.mubr.f32.gmra.mxu0 %v678
    %v855 = vpop.f32.mrf.mxu0
    %v856 = vadd.f32 %v222, %v855
    %v857 = vpop.f32.mrf.mxu0
    %858 = vmatprep.mubr.f32.mxu0 0.0
    %859 = vmatmul.mubr.f32.gmra.mxu0 %v681
    %v860 = vpop.f32.mrf.mxu0
    %v861 = vadd.f32 %v225, %v860
    %v862 = vpop.f32.mrf.mxu0
    %863 = vmatprep.mubr.f32.mxu0 0.0
    %864 = vmatmul.mubr.f32.gmra.mxu0 %v684
    %v865 = vpop.f32.mrf.mxu0
    %v866 = vadd.f32 %v228, %v865
    %v867 = vpop.f32.mrf.mxu0
    %868 = vmatprep.mubr.f32.mxu0 0.0
    %869 = vmatmul.mubr.f32.gmra.mxu0 %v687
    %v870 = vpop.f32.mrf.mxu0
    %v871 = vadd.f32 %v231, %v870
    %v872 = vpop.f32.mrf.mxu0
    %873 = vmatprep.mubr.f32.mxu0 0.0
    %874 = vmatmul.mubr.f32.gmra.mxu0 %v690
    %v875 = vpop.f32.mrf.mxu0
    %v876 = vadd.f32 %v234, %v875
    %v877 = vpop.f32.mrf.mxu0
    %878 = vmatprep.mubr.f32.mxu0 0.0
    %879 = vmatmul.mubr.f32.gmra.mxu0 %v693
    %v880 = vpop.f32.mrf.mxu0
    %v881 = vadd.f32 %v237, %v880
    %v882 = vpop.f32.mrf.mxu0
    %883 = vmatprep.mubr.f32.mxu0 0.0
    %884 = vmatmul.mubr.f32.gmra.mxu0 %v696
    %v885 = vpop.f32.mrf.mxu0
    %v886 = vadd.f32 %v240, %v885
    %v887 = vpop.f32.mrf.mxu0
    %888 = vmatprep.mubr.f32.mxu0 0.0
    %889 = vmatmul.mubr.f32.gmra.mxu0 %v699
    %v890 = vpop.f32.mrf.mxu0
    %v891 = vadd.f32 %v243, %v890
    %v892 = vpop.f32.mrf.mxu0
    %893 = vdwg.mxu0
    %v926 = vlaneseq
    %v927 = vand.u32 %v926, 127
    %v928 = vlaneseq
    %v929 = vshrl.u32 %v928, 7
    %v930 = vsub.s32 %v927, %v929
    %v931 = vrot.slane %v282, %v930
    %v932 = vadd.s32 %v927, 4294967288
    %v933 = vlaneseq
    %v934 = vshrl.u32 %v933, 7
    %v935 = vsub.s32 %v932, %v934
    %v936 = vrot.slane %v285, %v935
    %vm937 = vcmask 130112
    %v938 = vsel %vm937, %v936, %v931
    %v939 = vadd.s32 %v927, 4294967280
    %v940 = vlaneseq
    %v941 = vshrl.u32 %v940, 7
    %v942 = vsub.s32 %v939, %v941
    %v943 = vrot.slane %v288, %v942
    %vm944 = vcmask 195712
    %v945 = vsel %vm944, %v943, %v938
    %v946 = vadd.s32 %v927, 4294967272
    %v947 = vlaneseq
    %v948 = vshrl.u32 %v947, 7
    %v949 = vsub.s32 %v946, %v948
    %v950 = vrot.slane %v291, %v949
    %vm951 = vcmask 261312
    %v952 = vsel %vm951, %v950, %v945
    %v953 = vadd.s32 %v927, 4294967264
    %v954 = vlaneseq
    %v955 = vshrl.u32 %v954, 7
    %v956 = vsub.s32 %v953, %v955
    %v957 = vrot.slane %v294, %v956
    %vm958 = vcmask 326912
    %v959 = vsel %vm958, %v957, %v952
    %v960 = vadd.s32 %v927, 4294967256
    %v961 = vlaneseq
    %v962 = vshrl.u32 %v961, 7
    %v963 = vsub.s32 %v960, %v962
    %v964 = vrot.slane %v297, %v963
    %vm965 = vcmask 392512
    %v966 = vsel %vm965, %v964, %v959
    %v967 = vadd.s32 %v927, 4294967248
    %v968 = vlaneseq
    %v969 = vshrl.u32 %v968, 7
    %v970 = vsub.s32 %v967, %v969
    %v971 = vrot.slane %v300, %v970
    %vm972 = vcmask 458112
    %v973 = vsel %vm972, %v971, %v966
    %v974 = vadd.s32 %v927, 4294967240
    %v975 = vlaneseq
    %v976 = vshrl.u32 %v975, 7
    %v977 = vsub.s32 %v974, %v976
    %v978 = vrot.slane %v303, %v977
    %vm979 = vcmask 523712
    %v980 = vsel %vm979, %v978, %v973
    %v981 = vadd.s32 %v927, 4294967232
    %v982 = vlaneseq
    %v983 = vshrl.u32 %v982, 7
    %v984 = vsub.s32 %v981, %v983
    %v985 = vrot.slane %v306, %v984
    %vm986 = vcmask 589312
    %v987 = vsel %vm986, %v985, %v980
    %v988 = vadd.s32 %v927, 4294967224
    %v989 = vlaneseq
    %v990 = vshrl.u32 %v989, 7
    %v991 = vsub.s32 %v988, %v990
    %v992 = vrot.slane %v309, %v991
    %vm993 = vcmask 654912
    %v994 = vsel %vm993, %v992, %v987
    %v995 = vadd.s32 %v927, 4294967216
    %v996 = vlaneseq
    %v997 = vshrl.u32 %v996, 7
    %v998 = vsub.s32 %v995, %v997
    %v999 = vrot.slane %v312, %v998
    %vm1000 = vcmask 720512
    %v1001 = vsel %vm1000, %v999, %v994
    %v1002 = vadd.s32 %v927, 4294967208
    %v1003 = vlaneseq
    %v1004 = vshrl.u32 %v1003, 7
    %v1005 = vsub.s32 %v1002, %v1004
    %v1006 = vrot.slane %v315, %v1005
    %vm1007 = vcmask 786112
    %v1008 = vsel %vm1007, %v1006, %v1001
    %v1009 = vadd.s32 %v927, 4294967200
    %v1010 = vlaneseq
    %v1011 = vshrl.u32 %v1010, 7
    %v1012 = vsub.s32 %v1009, %v1011
    %v1013 = vrot.slane %v318, %v1012
    %vm1014 = vcmask 851712
    %v1015 = vsel %vm1014, %v1013, %v1008
    %v1016 = vadd.s32 %v927, 4294967192
    %v1017 = vlaneseq
    %v1018 = vshrl.u32 %v1017, 7
    %v1019 = vsub.s32 %v1016, %v1018
    %v1020 = vrot.slane %v321, %v1019
    %vm1021 = vcmask 917312
    %v1022 = vsel %vm1021, %v1020, %v1015
    %v1023 = vadd.s32 %v927, 4294967184
    %v1024 = vlaneseq
    %v1025 = vshrl.u32 %v1024, 7
    %v1026 = vsub.s32 %v1023, %v1025
    %v1027 = vrot.slane %v324, %v1026
    %vm1028 = vcmask 982912
    %v1029 = vsel %vm1028, %v1027, %v1022
    %v1030 = vadd.s32 %v927, 4294967176
    %v1031 = vlaneseq
    %v1032 = vshrl.u32 %v1031, 7
    %v1033 = vsub.s32 %v1030, %v1032
    %v1034 = vrot.slane %v327, %v1033
    %vm1035 = vcmask 1048512
    %v1036 = vsel %vm1035, %v1034, %v1029
    %v1037 = vlaneseq
    %v1038 = vshrl.u32 %v1037, 7
    %v1039 = vsub.s32 %v927, %v1038
    %v1040 = vrot.slane %v330, %v1039
    %v1041 = vlaneseq
    %v1042 = vshrl.u32 %v1041, 7
    %v1043 = vsub.s32 %v932, %v1042
    %v1044 = vrot.slane %v333, %v1043
    %v1045 = vsel %vm937, %v1044, %v1040
    %v1046 = vlaneseq
    %v1047 = vshrl.u32 %v1046, 7
    %v1048 = vsub.s32 %v939, %v1047
    %v1049 = vrot.slane %v336, %v1048
    %v1050 = vsel %vm944, %v1049, %v1045
    %v1051 = vlaneseq
    %v1052 = vshrl.u32 %v1051, 7
    %v1053 = vsub.s32 %v946, %v1052
    %v1054 = vrot.slane %v339, %v1053
    %v1055 = vsel %vm951, %v1054, %v1050
    %v1056 = vlaneseq
    %v1057 = vshrl.u32 %v1056, 7
    %v1058 = vsub.s32 %v953, %v1057
    %v1059 = vrot.slane %v342, %v1058
    %v1060 = vsel %vm958, %v1059, %v1055
    %v1061 = vlaneseq
    %v1062 = vshrl.u32 %v1061, 7
    %v1063 = vsub.s32 %v960, %v1062
    %v1064 = vrot.slane %v345, %v1063
    %v1065 = vsel %vm965, %v1064, %v1060
    %v1066 = vlaneseq
    %v1067 = vshrl.u32 %v1066, 7
    %v1068 = vsub.s32 %v967, %v1067
    %v1069 = vrot.slane %v348, %v1068
    %v1070 = vsel %vm972, %v1069, %v1065
    %v1071 = vlaneseq
    %v1072 = vshrl.u32 %v1071, 7
    %v1073 = vsub.s32 %v974, %v1072
    %v1074 = vrot.slane %v351, %v1073
    %v1075 = vsel %vm979, %v1074, %v1070
    %v1076 = vlaneseq
    %v1077 = vshrl.u32 %v1076, 7
    %v1078 = vsub.s32 %v981, %v1077
    %v1079 = vrot.slane %v354, %v1078
    %v1080 = vsel %vm986, %v1079, %v1075
    %v1081 = vlaneseq
    %v1082 = vshrl.u32 %v1081, 7
    %v1083 = vsub.s32 %v988, %v1082
    %v1084 = vrot.slane %v357, %v1083
    %v1085 = vsel %vm993, %v1084, %v1080
    %v1086 = vlaneseq
    %v1087 = vshrl.u32 %v1086, 7
    %v1088 = vsub.s32 %v995, %v1087
    %v1089 = vrot.slane %v360, %v1088
    %v1090 = vsel %vm1000, %v1089, %v1085
    %v1091 = vlaneseq
    %v1092 = vshrl.u32 %v1091, 7
    %v1093 = vsub.s32 %v1002, %v1092
    %v1094 = vrot.slane %v363, %v1093
    %v1095 = vsel %vm1007, %v1094, %v1090
    %v1096 = vlaneseq
    %v1097 = vshrl.u32 %v1096, 7
    %v1098 = vsub.s32 %v1009, %v1097
    %v1099 = vrot.slane %v366, %v1098
    %v1100 = vsel %vm1014, %v1099, %v1095
    %v1101 = vlaneseq
    %v1102 = vshrl.u32 %v1101, 7
    %v1103 = vsub.s32 %v1016, %v1102
    %v1104 = vrot.slane %v369, %v1103
    %v1105 = vsel %vm1021, %v1104, %v1100
    %v1106 = vlaneseq
    %v1107 = vshrl.u32 %v1106, 7
    %v1108 = vsub.s32 %v1023, %v1107
    %v1109 = vrot.slane %v372, %v1108
    %v1110 = vsel %vm1028, %v1109, %v1105
    %v1111 = vlaneseq
    %v1112 = vshrl.u32 %v1111, 7
    %v1113 = vsub.s32 %v1030, %v1112
    %v1114 = vrot.slane %v375, %v1113
    %v1115 = vsel %vm1035, %v1114, %v1110
    %vm1116 = vcmask 1041409
    %vm1117 = vcmask 1042434
    %v1118 = vsel %vm1117, %v1036, %v1036
    %vm1119 = vcmask 1043459
    %v1120 = vsel %vm1119, %v1036, %v1118
    %vm1121 = vcmask 1044484
    %v1122 = vsel %vm1121, %v1036, %v1120
    %vm1123 = vcmask 1045509
    %v1124 = vsel %vm1123, %v1036, %v1122
    %vm1125 = vcmask 1046534
    %v1126 = vsel %vm1125, %v1036, %v1124
    %vm1127 = vcmask 1047559
    %v1128 = vsel %vm1127, %v1036, %v1126
    %v1129 = vsel %vm1117, %v1115, %v1115
    %v1130 = vsel %vm1119, %v1115, %v1129
    %v1131 = vsel %vm1121, %v1115, %v1130
    %v1132 = vsel %vm1123, %v1115, %v1131
    %v1133 = vsel %vm1125, %v1115, %v1132
    %v1134 = vsel %vm1127, %v1115, %v1133
    %v1137 = vadd.f32 %v575, %v1128
    %v1138 = vadd.f32 %v580, %v1128
    %v1139 = vadd.f32 %v585, %v1128
    %v1140 = vadd.f32 %v590, %v1128
    %v1141 = vadd.f32 %v595, %v1128
    %v1142 = vadd.f32 %v600, %v1128
    %v1143 = vadd.f32 %v605, %v1128
    %v1144 = vadd.f32 %v610, %v1128
    %v1145 = vadd.f32 %v615, %v1128
    %v1146 = vadd.f32 %v620, %v1128
    %v1147 = vadd.f32 %v625, %v1128
    %v1148 = vadd.f32 %v630, %v1128
    %v1149 = vadd.f32 %v635, %v1128
    %v1150 = vadd.f32 %v640, %v1128
    %v1151 = vadd.f32 %v645, %v1128
    %v1152 = vadd.f32 %v650, %v1128
    %v1153 = vadd.f32 %v816, %v1134
    %v1154 = vadd.f32 %v821, %v1134
    %v1155 = vadd.f32 %v826, %v1134
    %v1156 = vadd.f32 %v831, %v1134
    %v1157 = vadd.f32 %v836, %v1134
    %v1158 = vadd.f32 %v841, %v1134
    %v1159 = vadd.f32 %v846, %v1134
    %v1160 = vadd.f32 %v851, %v1134
    %v1161 = vadd.f32 %v856, %v1134
    %v1162 = vadd.f32 %v861, %v1134
    %v1163 = vadd.f32 %v866, %v1134
    %v1164 = vadd.f32 %v871, %v1134
    %v1165 = vadd.f32 %v876, %v1134
    %v1166 = vadd.f32 %v881, %v1134
    %v1167 = vadd.f32 %v886, %v1134
    %v1168 = vadd.f32 %v891, %v1134
    %v1169 = vstv %s108
    %v1170 = vadd.f32 %v1137, %v1169
    %v1171 = vadd.f32 %v1138, %v1169
    %v1172 = vadd.f32 %v1139, %v1169
    %v1173 = vadd.f32 %v1140, %v1169
    %v1174 = vadd.f32 %v1141, %v1169
    %v1175 = vadd.f32 %v1142, %v1169
    %v1176 = vadd.f32 %v1143, %v1169
    %v1177 = vadd.f32 %v1144, %v1169
    %v1178 = vadd.f32 %v1145, %v1169
    %v1179 = vadd.f32 %v1146, %v1169
    %v1180 = vadd.f32 %v1147, %v1169
    %v1181 = vadd.f32 %v1148, %v1169
    %v1182 = vadd.f32 %v1149, %v1169
    %v1183 = vadd.f32 %v1150, %v1169
    %v1184 = vadd.f32 %v1151, %v1169
    %v1185 = vadd.f32 %v1152, %v1169
    %v1186 = vadd.f32 %v1153, %v1169
    %v1187 = vadd.f32 %v1154, %v1169
    %v1188 = vadd.f32 %v1155, %v1169
    %v1189 = vadd.f32 %v1156, %v1169
    %v1190 = vadd.f32 %v1157, %v1169
    %v1191 = vadd.f32 %v1158, %v1169
    %v1192 = vadd.f32 %v1159, %v1169
    %v1193 = vadd.f32 %v1160, %v1169
    %v1194 = vadd.f32 %v1161, %v1169
    %v1195 = vadd.f32 %v1162, %v1169
    %v1196 = vadd.f32 %v1163, %v1169
    %v1197 = vadd.f32 %v1164, %v1169
    %v1198 = vadd.f32 %v1165, %v1169
    %v1199 = vadd.f32 %v1166, %v1169
    %v1200 = vadd.f32 %v1167, %v1169
    %v1201 = vadd.f32 %v1168, %v1169
    %v1204 = vunpack.c.l.s4 1966171168
    %v1205 = vunpack.c.0.s8 %v1204
    %v1206 = vlaneseq
    %v1207 = vshrl.u32 %v1206, 7
    %v1208 = vsub.s32 %v1205, %v1207
    %v1209 = vrot.slane %v104, %v1208
    %v1210 = vcombine.high %v1209, %v1209
    %v1212 = vunpack.c.l.s4 1966171168
    %v1213 = vunpack.c.0.s8 %v1212
    %v1214 = vlaneseq
    %v1215 = vshrl.u32 %v1214, 7
    %v1216 = vsub.s32 %v1213, %v1215
    %v1217 = vrot.slane %v1209, %v1216
    %v1219 = vunpack.c.l.s4 1966171168
    %v1220 = vunpack.c.0.s8 %v1219
    %v1221 = vlaneseq
    %v1222 = vshrl.u32 %v1221, 7
    %v1223 = vsub.s32 %v1220, %v1222
    %v1224 = vrot.slane %v1210, %v1223
    %v1225 = vlaneseq
    %v1226 = vshrl.u32 %v1225, 7
    %v1227 = vsub.s32 0, %v1226
    %v1228 = vrot.slane %v1217, %v1227
    %v1229 = vlaneseq
    %v1230 = vshrl.u32 %v1229, 7
    %v1231 = vsub.s32 0, %v1230
    %v1232 = vrot.slane %v1224, %v1231
    %v1235 = vmul.f32 %v1170, %v1228
    %v1236 = vmul.f32 %v1171, %v1228
    %v1237 = vmul.f32 %v1172, %v1228
    %v1238 = vmul.f32 %v1173, %v1228
    %v1239 = vmul.f32 %v1174, %v1228
    %v1240 = vmul.f32 %v1175, %v1228
    %v1241 = vmul.f32 %v1176, %v1228
    %v1242 = vmul.f32 %v1177, %v1228
    %v1243 = vmul.f32 %v1178, %v1228
    %v1244 = vmul.f32 %v1179, %v1228
    %v1245 = vmul.f32 %v1180, %v1228
    %v1246 = vmul.f32 %v1181, %v1228
    %v1247 = vmul.f32 %v1182, %v1228
    %v1248 = vmul.f32 %v1183, %v1228
    %v1249 = vmul.f32 %v1184, %v1228
    %v1250 = vmul.f32 %v1185, %v1228
    %v1251 = vmul.f32 %v1186, %v1232
    %v1252 = vmul.f32 %v1187, %v1232
    %v1253 = vmul.f32 %v1188, %v1232
    %v1254 = vmul.f32 %v1189, %v1232
    %v1255 = vmul.f32 %v1190, %v1232
    %v1256 = vmul.f32 %v1191, %v1232
    %v1257 = vmul.f32 %v1192, %v1232
    %v1258 = vmul.f32 %v1193, %v1232
    %v1259 = vmul.f32 %v1194, %v1232
    %v1260 = vmul.f32 %v1195, %v1232
    %v1261 = vmul.f32 %v1196, %v1232
    %v1262 = vmul.f32 %v1197, %v1232
    %v1263 = vmul.f32 %v1198, %v1232
    %v1264 = vmul.f32 %v1199, %v1232
    %v1265 = vmul.f32 %v1200, %v1232
    %v1266 = vmul.f32 %v1201, %v1232
    %1267 = vmax.xlane.f32.xlu0 %v1235
    %v1268 = vpop.xlane.xlu0 %1267
    %1269 = vmax.xlane.f32.xlu0 %v1236
    %v1270 = vpop.xlane.xlu0 %1269
    %1271 = vmax.xlane.f32.xlu0 %v1237
    %v1272 = vpop.xlane.xlu0 %1271
    %1273 = vmax.xlane.f32.xlu0 %v1238
    %v1274 = vpop.xlane.xlu0 %1273
    %1275 = vmax.xlane.f32.xlu0 %v1239
    %v1276 = vpop.xlane.xlu0 %1275
    %1277 = vmax.xlane.f32.xlu0 %v1240
    %v1278 = vpop.xlane.xlu0 %1277
    %1279 = vmax.xlane.f32.xlu0 %v1241
    %v1280 = vpop.xlane.xlu0 %1279
    %1281 = vmax.xlane.f32.xlu0 %v1242
    %v1282 = vpop.xlane.xlu0 %1281
    %1283 = vmax.xlane.f32.xlu0 %v1243
    %v1284 = vpop.xlane.xlu0 %1283
    %1285 = vmax.xlane.f32.xlu0 %v1244
    %v1286 = vpop.xlane.xlu0 %1285
    %1287 = vmax.xlane.f32.xlu0 %v1245
    %v1288 = vpop.xlane.xlu0 %1287
    %1289 = vmax.xlane.f32.xlu0 %v1246
    %v1290 = vpop.xlane.xlu0 %1289
    %1291 = vmax.xlane.f32.xlu0 %v1247
    %v1292 = vpop.xlane.xlu0 %1291
    %1293 = vmax.xlane.f32.xlu0 %v1248
    %v1294 = vpop.xlane.xlu0 %1293
    %1295 = vmax.xlane.f32.xlu0 %v1249
    %v1296 = vpop.xlane.xlu0 %1295
    %1297 = vmax.xlane.f32.xlu0 %v1250
    %v1298 = vpop.xlane.xlu0 %1297
    %1299 = vmax.xlane.f32.xlu0 %v1251
    %v1300 = vpop.xlane.xlu0 %1299
    %1301 = vmax.xlane.f32.xlu0 %v1252
    %v1302 = vpop.xlane.xlu0 %1301
    %1303 = vmax.xlane.f32.xlu0 %v1253
    %v1304 = vpop.xlane.xlu0 %1303
    %1305 = vmax.xlane.f32.xlu0 %v1254
    %v1306 = vpop.xlane.xlu0 %1305
    %1307 = vmax.xlane.f32.xlu0 %v1255
    %v1308 = vpop.xlane.xlu0 %1307
    %1309 = vmax.xlane.f32.xlu0 %v1256
    %v1310 = vpop.xlane.xlu0 %1309
    %1311 = vmax.xlane.f32.xlu0 %v1257
    %v1312 = vpop.xlane.xlu0 %1311
    %1313 = vmax.xlane.f32.xlu0 %v1258
    %v1314 = vpop.xlane.xlu0 %1313
    %1315 = vmax.xlane.f32.xlu0 %v1259
    %v1316 = vpop.xlane.xlu0 %1315
    %1317 = vmax.xlane.f32.xlu0 %v1260
    %v1318 = vpop.xlane.xlu0 %1317
    %1319 = vmax.xlane.f32.xlu0 %v1261
    %v1320 = vpop.xlane.xlu0 %1319
    %1321 = vmax.xlane.f32.xlu0 %v1262
    %v1322 = vpop.xlane.xlu0 %1321
    %1323 = vmax.xlane.f32.xlu0 %v1263
    %v1324 = vpop.xlane.xlu0 %1323
    %1325 = vmax.xlane.f32.xlu0 %v1264
    %v1326 = vpop.xlane.xlu0 %1325
    %1327 = vmax.xlane.f32.xlu0 %v1265
    %v1328 = vpop.xlane.xlu0 %1327
    %1329 = vmax.xlane.f32.xlu0 %v1266
    %v1330 = vpop.xlane.xlu0 %1329
    %v1331 = vsub.f32 %v1235, %v1268
    %v1332 = vsub.f32 %v1236, %v1270
    %v1333 = vsub.f32 %v1237, %v1272
    %v1334 = vsub.f32 %v1238, %v1274
    %v1335 = vsub.f32 %v1239, %v1276
    %v1336 = vsub.f32 %v1240, %v1278
    %v1337 = vsub.f32 %v1241, %v1280
    %v1338 = vsub.f32 %v1242, %v1282
    %v1339 = vsub.f32 %v1243, %v1284
    %v1340 = vsub.f32 %v1244, %v1286
    %v1341 = vsub.f32 %v1245, %v1288
    %v1342 = vsub.f32 %v1246, %v1290
    %v1343 = vsub.f32 %v1247, %v1292
    %v1344 = vsub.f32 %v1248, %v1294
    %v1345 = vsub.f32 %v1249, %v1296
    %v1346 = vsub.f32 %v1250, %v1298
    %v1347 = vsub.f32 %v1251, %v1300
    %v1348 = vsub.f32 %v1252, %v1302
    %v1349 = vsub.f32 %v1253, %v1304
    %v1350 = vsub.f32 %v1254, %v1306
    %v1351 = vsub.f32 %v1255, %v1308
    %v1352 = vsub.f32 %v1256, %v1310
    %v1353 = vsub.f32 %v1257, %v1312
    %v1354 = vsub.f32 %v1258, %v1314
    %v1355 = vsub.f32 %v1259, %v1316
    %v1356 = vsub.f32 %v1260, %v1318
    %v1357 = vsub.f32 %v1261, %v1320
    %v1358 = vsub.f32 %v1262, %v1322
    %v1359 = vsub.f32 %v1263, %v1324
    %v1360 = vsub.f32 %v1264, %v1326
    %v1361 = vsub.f32 %v1265, %v1328
    %v1362 = vsub.f32 %v1266, %v1330
    %v1363 = vmul.f32 %v1331, 1.442695
    %v1364 = vpow.pop %v1363
    %v1365 = vmul.f32 %v1332, 1.442695
    %v1366 = vpow.pop %v1365
    %v1367 = vmul.f32 %v1333, 1.442695
    %v1368 = vpow.pop %v1367
    %v1369 = vmul.f32 %v1334, 1.442695
    %v1370 = vpow.pop %v1369
    %v1371 = vmul.f32 %v1335, 1.442695
    %v1372 = vpow.pop %v1371
    %v1373 = vmul.f32 %v1336, 1.442695
    %v1374 = vpow.pop %v1373
    %v1375 = vmul.f32 %v1337, 1.442695
    %v1376 = vpow.pop %v1375
    %v1377 = vmul.f32 %v1338, 1.442695
    %v1378 = vpow.pop %v1377
    %v1379 = vmul.f32 %v1339, 1.442695
    %v1380 = vpow.pop %v1379
    %v1381 = vmul.f32 %v1340, 1.442695
    %v1382 = vpow.pop %v1381
    %v1383 = vmul.f32 %v1341, 1.442695
    %v1384 = vpow.pop %v1383
    %v1385 = vmul.f32 %v1342, 1.442695
    %v1386 = vpow.pop %v1385
    %v1387 = vmul.f32 %v1343, 1.442695
    %v1388 = vpow.pop %v1387
    %v1389 = vmul.f32 %v1344, 1.442695
    %v1390 = vpow.pop %v1389
    %v1391 = vmul.f32 %v1345, 1.442695
    %v1392 = vpow.pop %v1391
    %v1393 = vmul.f32 %v1346, 1.442695
    %v1394 = vpow.pop %v1393
    %v1395 = vmul.f32 %v1347, 1.442695
    %v1396 = vpow.pop %v1395
    %v1397 = vmul.f32 %v1348, 1.442695
    %v1398 = vpow.pop %v1397
    %v1399 = vmul.f32 %v1349, 1.442695
    %v1400 = vpow.pop %v1399
    %v1401 = vmul.f32 %v1350, 1.442695
    %v1402 = vpow.pop %v1401
    %v1403 = vmul.f32 %v1351, 1.442695
    %v1404 = vpow.pop %v1403
    %v1405 = vmul.f32 %v1352, 1.442695
    %v1406 = vpow.pop %v1405
    %v1407 = vmul.f32 %v1353, 1.442695
    %v1408 = vpow.pop %v1407
    %v1409 = vmul.f32 %v1354, 1.442695
    %v1410 = vpow.pop %v1409
    %v1411 = vmul.f32 %v1355, 1.442695
    %v1412 = vpow.pop %v1411
    %v1413 = vmul.f32 %v1356, 1.442695
    %v1414 = vpow.pop %v1413
    %v1415 = vmul.f32 %v1357, 1.442695
    %v1416 = vpow.pop %v1415
    %v1417 = vmul.f32 %v1358, 1.442695
    %v1418 = vpow.pop %v1417
    %v1419 = vmul.f32 %v1359, 1.442695
    %v1420 = vpow.pop %v1419
    %v1421 = vmul.f32 %v1360, 1.442695
    %v1422 = vpow.pop %v1421
    %v1423 = vmul.f32 %v1361, 1.442695
    %v1424 = vpow.pop %v1423
    %v1425 = vmul.f32 %v1362, 1.442695
    %v1426 = vpow.pop %v1425
    %1427 = vadd.xlane.f32.xlu0 %v1364
    %v1428 = vpop.xlane.xlu0 %1427
    %1429 = vadd.xlane.f32.xlu0 %v1366
    %v1430 = vpop.xlane.xlu0 %1429
    %1431 = vadd.xlane.f32.xlu0 %v1368
    %v1432 = vpop.xlane.xlu0 %1431
    %1433 = vadd.xlane.f32.xlu0 %v1370
    %v1434 = vpop.xlane.xlu0 %1433
    %1435 = vadd.xlane.f32.xlu0 %v1372
    %v1436 = vpop.xlane.xlu0 %1435
    %1437 = vadd.xlane.f32.xlu0 %v1374
    %v1438 = vpop.xlane.xlu0 %1437
    %1439 = vadd.xlane.f32.xlu0 %v1376
    %v1440 = vpop.xlane.xlu0 %1439
    %1441 = vadd.xlane.f32.xlu0 %v1378
    %v1442 = vpop.xlane.xlu0 %1441
    %1443 = vadd.xlane.f32.xlu0 %v1380
    %v1444 = vpop.xlane.xlu0 %1443
    %1445 = vadd.xlane.f32.xlu0 %v1382
    %v1446 = vpop.xlane.xlu0 %1445
    %1447 = vadd.xlane.f32.xlu0 %v1384
    %v1448 = vpop.xlane.xlu0 %1447
    %1449 = vadd.xlane.f32.xlu0 %v1386
    %v1450 = vpop.xlane.xlu0 %1449
    %1451 = vadd.xlane.f32.xlu0 %v1388
    %v1452 = vpop.xlane.xlu0 %1451
    %1453 = vadd.xlane.f32.xlu0 %v1390
    %v1454 = vpop.xlane.xlu0 %1453
    %1455 = vadd.xlane.f32.xlu0 %v1392
    %v1456 = vpop.xlane.xlu0 %1455
    %1457 = vadd.xlane.f32.xlu0 %v1394
    %v1458 = vpop.xlane.xlu0 %1457
    %1459 = vadd.xlane.f32.xlu0 %v1396
    %v1460 = vpop.xlane.xlu0 %1459
    %1461 = vadd.xlane.f32.xlu0 %v1398
    %v1462 = vpop.xlane.xlu0 %1461
    %1463 = vadd.xlane.f32.xlu0 %v1400
    %v1464 = vpop.xlane.xlu0 %1463
    %1465 = vadd.xlane.f32.xlu0 %v1402
    %v1466 = vpop.xlane.xlu0 %1465
    %1467 = vadd.xlane.f32.xlu0 %v1404
    %v1468 = vpop.xlane.xlu0 %1467
    %1469 = vadd.xlane.f32.xlu0 %v1406
    %v1470 = vpop.xlane.xlu0 %1469
    %1471 = vadd.xlane.f32.xlu0 %v1408
    %v1472 = vpop.xlane.xlu0 %1471
    %1473 = vadd.xlane.f32.xlu0 %v1410
    %v1474 = vpop.xlane.xlu0 %1473
    %1475 = vadd.xlane.f32.xlu0 %v1412
    %v1476 = vpop.xlane.xlu0 %1475
    %1477 = vadd.xlane.f32.xlu0 %v1414
    %v1478 = vpop.xlane.xlu0 %1477
    %1479 = vadd.xlane.f32.xlu0 %v1416
    %v1480 = vpop.xlane.xlu0 %1479
    %1481 = vadd.xlane.f32.xlu0 %v1418
    %v1482 = vpop.xlane.xlu0 %1481
    %1483 = vadd.xlane.f32.xlu0 %v1420
    %v1484 = vpop.xlane.xlu0 %1483
    %1485 = vadd.xlane.f32.xlu0 %v1422
    %v1486 = vpop.xlane.xlu0 %1485
    %1487 = vadd.xlane.f32.xlu0 %v1424
    %v1488 = vpop.xlane.xlu0 %1487
    %1489 = vadd.xlane.f32.xlu0 %v1426
    %v1490 = vpop.xlane.xlu0 %1489
    %v1491 = vrcp.pop %v1428
    %v1492 = vrcp.pop %v1430
    %v1493 = vrcp.pop %v1432
    %v1494 = vrcp.pop %v1434
    %v1495 = vrcp.pop %v1436
    %v1496 = vrcp.pop %v1438
    %v1497 = vrcp.pop %v1440
    %v1498 = vrcp.pop %v1442
    %v1499 = vrcp.pop %v1444
    %v1500 = vrcp.pop %v1446
    %v1501 = vrcp.pop %v1448
    %v1502 = vrcp.pop %v1450
    %v1503 = vrcp.pop %v1452
    %v1504 = vrcp.pop %v1454
    %v1505 = vrcp.pop %v1456
    %v1506 = vrcp.pop %v1458
    %v1507 = vrcp.pop %v1460
    %v1508 = vrcp.pop %v1462
    %v1509 = vrcp.pop %v1464
    %v1510 = vrcp.pop %v1466
    %v1511 = vrcp.pop %v1468
    %v1512 = vrcp.pop %v1470
    %v1513 = vrcp.pop %v1472
    %v1514 = vrcp.pop %v1474
    %v1515 = vrcp.pop %v1476
    %v1516 = vrcp.pop %v1478
    %v1517 = vrcp.pop %v1480
    %v1518 = vrcp.pop %v1482
    %v1519 = vrcp.pop %v1484
    %v1520 = vrcp.pop %v1486
    %v1521 = vrcp.pop %v1488
    %v1522 = vrcp.pop %v1490
    %v1523 = vmul.f32 %v1364, %v1491
    %v1524 = vmul.f32 %v1366, %v1492
    %v1525 = vmul.f32 %v1368, %v1493
    %v1526 = vmul.f32 %v1370, %v1494
    %v1527 = vmul.f32 %v1372, %v1495
    %v1528 = vmul.f32 %v1374, %v1496
    %v1529 = vmul.f32 %v1376, %v1497
    %v1530 = vmul.f32 %v1378, %v1498
    %v1531 = vmul.f32 %v1380, %v1499
    %v1532 = vmul.f32 %v1382, %v1500
    %v1533 = vmul.f32 %v1384, %v1501
    %v1534 = vmul.f32 %v1386, %v1502
    %v1535 = vmul.f32 %v1388, %v1503
    %v1536 = vmul.f32 %v1390, %v1504
    %v1537 = vmul.f32 %v1392, %v1505
    %v1538 = vmul.f32 %v1394, %v1506
    %v1539 = vmul.f32 %v1396, %v1507
    %v1540 = vmul.f32 %v1398, %v1508
    %v1541 = vmul.f32 %v1400, %v1509
    %v1542 = vmul.f32 %v1402, %v1510
    %v1543 = vmul.f32 %v1404, %v1511
    %v1544 = vmul.f32 %v1406, %v1512
    %v1545 = vmul.f32 %v1408, %v1513
    %v1546 = vmul.f32 %v1410, %v1514
    %v1547 = vmul.f32 %v1412, %v1515
    %v1548 = vmul.f32 %v1414, %v1516
    %v1549 = vmul.f32 %v1416, %v1517
    %v1550 = vmul.f32 %v1418, %v1518
    %v1551 = vmul.f32 %v1420, %v1519
    %v1552 = vmul.f32 %v1422, %v1520
    %v1553 = vmul.f32 %v1424, %v1521
    %v1554 = vmul.f32 %v1426, %v1522
    %v1555 = vmul.f32 %v1523, %v1228
    %v1556 = vmul.f32 %v1524, %v1228
    %v1557 = vmul.f32 %v1525, %v1228
    %v1558 = vmul.f32 %v1526, %v1228
    %v1559 = vmul.f32 %v1527, %v1228
    %v1560 = vmul.f32 %v1528, %v1228
    %v1561 = vmul.f32 %v1529, %v1228
    %v1562 = vmul.f32 %v1530, %v1228
    %v1563 = vmul.f32 %v1531, %v1228
    %v1564 = vmul.f32 %v1532, %v1228
    %v1565 = vmul.f32 %v1533, %v1228
    %v1566 = vmul.f32 %v1534, %v1228
    %v1567 = vmul.f32 %v1535, %v1228
    %v1568 = vmul.f32 %v1536, %v1228
    %v1569 = vmul.f32 %v1537, %v1228
    %v1570 = vmul.f32 %v1538, %v1228
    %v1571 = vmul.f32 %v1539, %v1232
    %v1572 = vmul.f32 %v1540, %v1232
    %v1573 = vmul.f32 %v1541, %v1232
    %v1574 = vmul.f32 %v1542, %v1232
    %v1575 = vmul.f32 %v1543, %v1232
    %v1576 = vmul.f32 %v1544, %v1232
    %v1577 = vmul.f32 %v1545, %v1232
    %v1578 = vmul.f32 %v1546, %v1232
    %v1579 = vmul.f32 %v1547, %v1232
    %v1580 = vmul.f32 %v1548, %v1232
    %v1581 = vmul.f32 %v1549, %v1232
    %v1582 = vmul.f32 %v1550, %v1232
    %v1583 = vmul.f32 %v1551, %v1232
    %v1584 = vmul.f32 %v1552, %v1232
    %v1585 = vmul.f32 %v1553, %v1232
    %v1586 = vmul.f32 %v1554, %v1232
    %1587 = vadd.xlane.f32.xlu0 %v1555
    %v1588 = vpop.xlane.xlu0 %1587
    %1589 = vadd.xlane.f32.xlu0 %v1556
    %v1590 = vpop.xlane.xlu0 %1589
    %1591 = vadd.xlane.f32.xlu0 %v1557
    %v1592 = vpop.xlane.xlu0 %1591
    %1593 = vadd.xlane.f32.xlu0 %v1558
    %v1594 = vpop.xlane.xlu0 %1593
    %1595 = vadd.xlane.f32.xlu0 %v1559
    %v1596 = vpop.xlane.xlu0 %1595
    %1597 = vadd.xlane.f32.xlu0 %v1560
    %v1598 = vpop.xlane.xlu0 %1597
    %1599 = vadd.xlane.f32.xlu0 %v1561
    %v1600 = vpop.xlane.xlu0 %1599
    %1601 = vadd.xlane.f32.xlu0 %v1562
    %v1602 = vpop.xlane.xlu0 %1601
    %1603 = vadd.xlane.f32.xlu0 %v1563
    %v1604 = vpop.xlane.xlu0 %1603
    %1605 = vadd.xlane.f32.xlu0 %v1564
    %v1606 = vpop.xlane.xlu0 %1605
    %1607 = vadd.xlane.f32.xlu0 %v1565
    %v1608 = vpop.xlane.xlu0 %1607
    %1609 = vadd.xlane.f32.xlu0 %v1566
    %v1610 = vpop.xlane.xlu0 %1609
    %1611 = vadd.xlane.f32.xlu0 %v1567
    %v1612 = vpop.xlane.xlu0 %1611
    %1613 = vadd.xlane.f32.xlu0 %v1568
    %v1614 = vpop.xlane.xlu0 %1613
    %1615 = vadd.xlane.f32.xlu0 %v1569
    %v1616 = vpop.xlane.xlu0 %1615
    %1617 = vadd.xlane.f32.xlu0 %v1570
    %v1618 = vpop.xlane.xlu0 %1617
    %1619 = vadd.xlane.f32.xlu0 %v1571
    %v1620 = vpop.xlane.xlu0 %1619
    %1621 = vadd.xlane.f32.xlu0 %v1572
    %v1622 = vpop.xlane.xlu0 %1621
    %1623 = vadd.xlane.f32.xlu0 %v1573
    %v1624 = vpop.xlane.xlu0 %1623
    %1625 = vadd.xlane.f32.xlu0 %v1574
    %v1626 = vpop.xlane.xlu0 %1625
    %1627 = vadd.xlane.f32.xlu0 %v1575
    %v1628 = vpop.xlane.xlu0 %1627
    %1629 = vadd.xlane.f32.xlu0 %v1576
    %v1630 = vpop.xlane.xlu0 %1629
    %1631 = vadd.xlane.f32.xlu0 %v1577
    %v1632 = vpop.xlane.xlu0 %1631
    %1633 = vadd.xlane.f32.xlu0 %v1578
    %v1634 = vpop.xlane.xlu0 %1633
    %1635 = vadd.xlane.f32.xlu0 %v1579
    %v1636 = vpop.xlane.xlu0 %1635
    %1637 = vadd.xlane.f32.xlu0 %v1580
    %v1638 = vpop.xlane.xlu0 %1637
    %1639 = vadd.xlane.f32.xlu0 %v1581
    %v1640 = vpop.xlane.xlu0 %1639
    %1641 = vadd.xlane.f32.xlu0 %v1582
    %v1642 = vpop.xlane.xlu0 %1641
    %1643 = vadd.xlane.f32.xlu0 %v1583
    %v1644 = vpop.xlane.xlu0 %1643
    %1645 = vadd.xlane.f32.xlu0 %v1584
    %v1646 = vpop.xlane.xlu0 %1645
    %1647 = vadd.xlane.f32.xlu0 %v1585
    %v1648 = vpop.xlane.xlu0 %1647
    %1649 = vadd.xlane.f32.xlu0 %v1586
    %v1650 = vpop.xlane.xlu0 %1649
    %v1651 = vadd.f32 %v1588, 1e-13
    %v1652 = vadd.f32 %v1590, 1e-13
    %v1653 = vadd.f32 %v1592, 1e-13
    %v1654 = vadd.f32 %v1594, 1e-13
    %v1655 = vadd.f32 %v1596, 1e-13
    %v1656 = vadd.f32 %v1598, 1e-13
    %v1657 = vadd.f32 %v1600, 1e-13
    %v1658 = vadd.f32 %v1602, 1e-13
    %v1659 = vadd.f32 %v1604, 1e-13
    %v1660 = vadd.f32 %v1606, 1e-13
    %v1661 = vadd.f32 %v1608, 1e-13
    %v1662 = vadd.f32 %v1610, 1e-13
    %v1663 = vadd.f32 %v1612, 1e-13
    %v1664 = vadd.f32 %v1614, 1e-13
    %v1665 = vadd.f32 %v1616, 1e-13
    %v1666 = vadd.f32 %v1618, 1e-13
    %v1667 = vadd.f32 %v1620, 1e-13
    %v1668 = vadd.f32 %v1622, 1e-13
    %v1669 = vadd.f32 %v1624, 1e-13
    %v1670 = vadd.f32 %v1626, 1e-13
    %v1671 = vadd.f32 %v1628, 1e-13
    %v1672 = vadd.f32 %v1630, 1e-13
    %v1673 = vadd.f32 %v1632, 1e-13
    %v1674 = vadd.f32 %v1634, 1e-13
    %v1675 = vadd.f32 %v1636, 1e-13
    %v1676 = vadd.f32 %v1638, 1e-13
    %v1677 = vadd.f32 %v1640, 1e-13
    %v1678 = vadd.f32 %v1642, 1e-13
    %v1679 = vadd.f32 %v1644, 1e-13
    %v1680 = vadd.f32 %v1646, 1e-13
    %v1681 = vadd.f32 %v1648, 1e-13
    %v1682 = vadd.f32 %v1650, 1e-13
    %v1683 = vrcp.pop %v1651
    %v1684 = vrcp.pop %v1652
    %v1685 = vrcp.pop %v1653
    %v1686 = vrcp.pop %v1654
    %v1687 = vrcp.pop %v1655
    %v1688 = vrcp.pop %v1656
    %v1689 = vrcp.pop %v1657
    %v1690 = vrcp.pop %v1658
    %v1691 = vrcp.pop %v1659
    %v1692 = vrcp.pop %v1660
    %v1693 = vrcp.pop %v1661
    %v1694 = vrcp.pop %v1662
    %v1695 = vrcp.pop %v1663
    %v1696 = vrcp.pop %v1664
    %v1697 = vrcp.pop %v1665
    %v1698 = vrcp.pop %v1666
    %v1699 = vrcp.pop %v1667
    %v1700 = vrcp.pop %v1668
    %v1701 = vrcp.pop %v1669
    %v1702 = vrcp.pop %v1670
    %v1703 = vrcp.pop %v1671
    %v1704 = vrcp.pop %v1672
    %v1705 = vrcp.pop %v1673
    %v1706 = vrcp.pop %v1674
    %v1707 = vrcp.pop %v1675
    %v1708 = vrcp.pop %v1676
    %v1709 = vrcp.pop %v1677
    %v1710 = vrcp.pop %v1678
    %v1711 = vrcp.pop %v1679
    %v1712 = vrcp.pop %v1680
    %v1713 = vrcp.pop %v1681
    %v1714 = vrcp.pop %v1682
    %v1715 = vmul.f32 %v1555, %v1683
    %v1716 = vmul.f32 %v1556, %v1684
    %v1717 = vmul.f32 %v1557, %v1685
    %v1718 = vmul.f32 %v1558, %v1686
    %v1719 = vmul.f32 %v1559, %v1687
    %v1720 = vmul.f32 %v1560, %v1688
    %v1721 = vmul.f32 %v1561, %v1689
    %v1722 = vmul.f32 %v1562, %v1690
    %v1723 = vmul.f32 %v1563, %v1691
    %v1724 = vmul.f32 %v1564, %v1692
    %v1725 = vmul.f32 %v1565, %v1693
    %v1726 = vmul.f32 %v1566, %v1694
    %v1727 = vmul.f32 %v1567, %v1695
    %v1728 = vmul.f32 %v1568, %v1696
    %v1729 = vmul.f32 %v1569, %v1697
    %v1730 = vmul.f32 %v1570, %v1698
    %v1731 = vmul.f32 %v1571, %v1699
    %v1732 = vmul.f32 %v1572, %v1700
    %v1733 = vmul.f32 %v1573, %v1701
    %v1734 = vmul.f32 %v1574, %v1702
    %v1735 = vmul.f32 %v1575, %v1703
    %v1736 = vmul.f32 %v1576, %v1704
    %v1737 = vmul.f32 %v1577, %v1705
    %v1738 = vmul.f32 %v1578, %v1706
    %v1739 = vmul.f32 %v1579, %v1707
    %v1740 = vmul.f32 %v1580, %v1708
    %v1741 = vmul.f32 %v1581, %v1709
    %v1742 = vmul.f32 %v1582, %v1710
    %v1743 = vmul.f32 %v1583, %v1711
    %v1744 = vmul.f32 %v1584, %v1712
    %v1745 = vmul.f32 %v1585, %v1713
    %v1746 = vmul.f32 %v1586, %v1714
    %1747 = vmatprep.subr.mxu0 0.0
    %1748 = vmatpush1.msra.mxu0 %v86
    %1749 = vmatprep.subr.mxu0 0.0
    %1750 = vmatpush1.msra.mxu0 %v85
    %1751 = vmatprep.subr.mxu0 0.0
    %1752 = vmatpush1.msra.mxu0 %v84
    %1753 = vmatprep.subr.mxu0 0.0
    %1754 = vmatpush1.msra.mxu0 %v83
    %1755 = vmatprep.subr.mxu0 0.0
    %1756 = vmatpush1.msra.mxu0 %v82
    %1757 = vmatprep.subr.mxu0 0.0
    %1758 = vmatpush1.msra.mxu0 %v81
    %1759 = vmatprep.subr.mxu0 0.0
    %1760 = vmatpush1.msra.mxu0 %v80
    %1761 = vmatprep.subr.mxu0 0.0
    %1762 = vmatpush1.msra.mxu0 %v79
    %1763 = vmatprep.subr.mxu0 0.0
    %1764 = vmatpush1.msra.mxu0 %v78
    %1765 = vmatprep.subr.mxu0 0.0
    %1766 = vmatpush1.msra.mxu0 %v77
    %1767 = vmatprep.subr.mxu0 0.0
    %1768 = vmatpush1.msra.mxu0 %v76
    %1769 = vmatprep.subr.mxu0 0.0
    %1770 = vmatpush1.msra.mxu0 %v75
    %1771 = vmatprep.subr.mxu0 0.0
    %1772 = vmatpush1.msra.mxu0 %v74
    %1773 = vmatprep.subr.mxu0 0.0
    %1774 = vmatpush1.msra.mxu0 %v73
    %1775 = vmatprep.subr.mxu0 0.0
    %1776 = vmatpush1.msra.mxu0 %v72
    %1777 = vmatprep.subr.mxu0 0.0
    %1778 = vmatpush1.msra.mxu0 %v71
    %1779 = vmatprep.subr.mxu0 0.0
    %1780 = vmatpush2.msra.mxu0 0.0
    %1781 = vmatprep.subr.mxu0 0.0
    %1782 = vmatpush2.msra.mxu0 0.0
    %1783 = vmatprep.subr.mxu0 0.0
    %1784 = vmatpush2.msra.mxu0 0.0
    %1785 = vmatprep.subr.mxu0 0.0
    %1786 = vmatpush2.msra.mxu0 0.0
    %1787 = vmatprep.subr.mxu0 0.0
    %1788 = vmatpush2.msra.mxu0 0.0
    %1789 = vmatprep.subr.mxu0 0.0
    %1790 = vmatpush2.msra.mxu0 0.0
    %1791 = vmatprep.subr.mxu0 0.0
    %1792 = vmatpush2.msra.mxu0 0.0
    %1793 = vmatprep.subr.mxu0 0.0
    %1794 = vmatpush2.msra.mxu0 0.0
    %1795 = vmatprep.subr.mxu0 0.0
    %1796 = vmatpush2.msra.mxu0 0.0
    %1797 = vmatprep.subr.mxu0 0.0
    %1798 = vmatpush2.msra.mxu0 0.0
    %1799 = vmatprep.subr.mxu0 0.0
    %1800 = vmatpush2.msra.mxu0 0.0
    %1801 = vmatprep.subr.mxu0 0.0
    %1802 = vmatpush2.msra.mxu0 0.0
    %1803 = vmatprep.subr.mxu0 0.0
    %1804 = vmatpush2.msra.mxu0 0.0
    %1805 = vmatprep.subr.mxu0 0.0
    %1806 = vmatpush2.msra.mxu0 0.0
    %1807 = vmatprep.subr.mxu0 0.0
    %1808 = vmatpush2.msra.mxu0 0.0
    %1809 = vmatprep.subr.mxu0 0.0
    %1810 = vmatpush2.msra.mxu0 0.0
    %1811 = vmatprep.mubr.f32.mxu0 0.0
    %1812 = vmatmul.mubr.f32.gmra.mxu0 %v1715
    %v1813 = vpop.f32.mrf.mxu0
    %v1814 = vadd.f32 0.0, %v1813
    %v1815 = vpop.f32.mrf.mxu0
    %1816 = vmatprep.mubr.f32.mxu0 0.0
    %1817 = vmatmul.mubr.f32.gmra.mxu0 %v1716
    %v1818 = vpop.f32.mrf.mxu0
    %v1819 = vadd.f32 0.0, %v1818
    %v1820 = vpop.f32.mrf.mxu0
    %1821 = vmatprep.mubr.f32.mxu0 0.0
    %1822 = vmatmul.mubr.f32.gmra.mxu0 %v1717
    %v1823 = vpop.f32.mrf.mxu0
    %v1824 = vadd.f32 0.0, %v1823
    %v1825 = vpop.f32.mrf.mxu0
    %1826 = vmatprep.mubr.f32.mxu0 0.0
    %1827 = vmatmul.mubr.f32.gmra.mxu0 %v1718
    %v1828 = vpop.f32.mrf.mxu0
    %v1829 = vadd.f32 0.0, %v1828
    %v1830 = vpop.f32.mrf.mxu0
    %1831 = vmatprep.mubr.f32.mxu0 0.0
    %1832 = vmatmul.mubr.f32.gmra.mxu0 %v1719
    %v1833 = vpop.f32.mrf.mxu0
    %v1834 = vadd.f32 0.0, %v1833
    %v1835 = vpop.f32.mrf.mxu0
    %1836 = vmatprep.mubr.f32.mxu0 0.0
    %1837 = vmatmul.mubr.f32.gmra.mxu0 %v1720
    %v1838 = vpop.f32.mrf.mxu0
    %v1839 = vadd.f32 0.0, %v1838
    %v1840 = vpop.f32.mrf.mxu0
    %1841 = vmatprep.mubr.f32.mxu0 0.0
    %1842 = vmatmul.mubr.f32.gmra.mxu0 %v1721
    %v1843 = vpop.f32.mrf.mxu0
    %v1844 = vadd.f32 0.0, %v1843
    %v1845 = vpop.f32.mrf.mxu0
    %1846 = vmatprep.mubr.f32.mxu0 0.0
    %1847 = vmatmul.mubr.f32.gmra.mxu0 %v1722
    %v1848 = vpop.f32.mrf.mxu0
    %v1849 = vadd.f32 0.0, %v1848
    %v1850 = vpop.f32.mrf.mxu0
    %1851 = vmatprep.mubr.f32.mxu0 0.0
    %1852 = vmatmul.mubr.f32.gmra.mxu0 %v1723
    %v1853 = vpop.f32.mrf.mxu0
    %v1854 = vadd.f32 0.0, %v1853
    %v1855 = vpop.f32.mrf.mxu0
    %1856 = vmatprep.mubr.f32.mxu0 0.0
    %1857 = vmatmul.mubr.f32.gmra.mxu0 %v1724
    %v1858 = vpop.f32.mrf.mxu0
    %v1859 = vadd.f32 0.0, %v1858
    %v1860 = vpop.f32.mrf.mxu0
    %1861 = vmatprep.mubr.f32.mxu0 0.0
    %1862 = vmatmul.mubr.f32.gmra.mxu0 %v1725
    %v1863 = vpop.f32.mrf.mxu0
    %v1864 = vadd.f32 0.0, %v1863
    %v1865 = vpop.f32.mrf.mxu0
    %1866 = vmatprep.mubr.f32.mxu0 0.0
    %1867 = vmatmul.mubr.f32.gmra.mxu0 %v1726
    %v1868 = vpop.f32.mrf.mxu0
    %v1869 = vadd.f32 0.0, %v1868
    %v1870 = vpop.f32.mrf.mxu0
    %1871 = vmatprep.mubr.f32.mxu0 0.0
    %1872 = vmatmul.mubr.f32.gmra.mxu0 %v1727
    %v1873 = vpop.f32.mrf.mxu0
    %v1874 = vadd.f32 0.0, %v1873
    %v1875 = vpop.f32.mrf.mxu0
    %1876 = vmatprep.mubr.f32.mxu0 0.0
    %1877 = vmatmul.mubr.f32.gmra.mxu0 %v1728
    %v1878 = vpop.f32.mrf.mxu0
    %v1879 = vadd.f32 0.0, %v1878
    %v1880 = vpop.f32.mrf.mxu0
    %1881 = vmatprep.mubr.f32.mxu0 0.0
    %1882 = vmatmul.mubr.f32.gmra.mxu0 %v1729
    %v1883 = vpop.f32.mrf.mxu0
    %v1884 = vadd.f32 0.0, %v1883
    %v1885 = vpop.f32.mrf.mxu0
    %1886 = vmatprep.mubr.f32.mxu0 0.0
    %1887 = vmatmul.mubr.f32.gmra.mxu0 %v1730
    %v1888 = vpop.f32.mrf.mxu0
    %v1889 = vadd.f32 0.0, %v1888
    %v1890 = vpop.f32.mrf.mxu0
    %1891 = vdwg.mxu0
    %1892 = vmatprep.subr.mxu0 0.0
    %1893 = vmatpush1.msra.mxu0 %v102
    %1894 = vmatprep.subr.mxu0 0.0
    %1895 = vmatpush1.msra.mxu0 %v101
    %1896 = vmatprep.subr.mxu0 0.0
    %1897 = vmatpush1.msra.mxu0 %v100
    %1898 = vmatprep.subr.mxu0 0.0
    %1899 = vmatpush1.msra.mxu0 %v99
    %1900 = vmatprep.subr.mxu0 0.0
    %1901 = vmatpush1.msra.mxu0 %v98
    %1902 = vmatprep.subr.mxu0 0.0
    %1903 = vmatpush1.msra.mxu0 %v97
    %1904 = vmatprep.subr.mxu0 0.0
    %1905 = vmatpush1.msra.mxu0 %v96
    %1906 = vmatprep.subr.mxu0 0.0
    %1907 = vmatpush1.msra.mxu0 %v95
    %1908 = vmatprep.subr.mxu0 0.0
    %1909 = vmatpush1.msra.mxu0 %v94
    %1910 = vmatprep.subr.mxu0 0.0
    %1911 = vmatpush1.msra.mxu0 %v93
    %1912 = vmatprep.subr.mxu0 0.0
    %1913 = vmatpush1.msra.mxu0 %v92
    %1914 = vmatprep.subr.mxu0 0.0
    %1915 = vmatpush1.msra.mxu0 %v91
    %1916 = vmatprep.subr.mxu0 0.0
    %1917 = vmatpush1.msra.mxu0 %v90
    %1918 = vmatprep.subr.mxu0 0.0
    %1919 = vmatpush1.msra.mxu0 %v89
    %1920 = vmatprep.subr.mxu0 0.0
    %1921 = vmatpush1.msra.mxu0 %v88
    %1922 = vmatprep.subr.mxu0 0.0
    %1923 = vmatpush1.msra.mxu0 %v87
    %1924 = vmatprep.subr.mxu0 0.0
    %1925 = vmatpush2.msra.mxu0 0.0
    %1926 = vmatprep.subr.mxu0 0.0
    %1927 = vmatpush2.msra.mxu0 0.0
    %1928 = vmatprep.subr.mxu0 0.0
    %1929 = vmatpush2.msra.mxu0 0.0
    %1930 = vmatprep.subr.mxu0 0.0
    %1931 = vmatpush2.msra.mxu0 0.0
    %1932 = vmatprep.subr.mxu0 0.0
    %1933 = vmatpush2.msra.mxu0 0.0
    %1934 = vmatprep.subr.mxu0 0.0
    %1935 = vmatpush2.msra.mxu0 0.0
    %1936 = vmatprep.subr.mxu0 0.0
    %1937 = vmatpush2.msra.mxu0 0.0
    %1938 = vmatprep.subr.mxu0 0.0
    %1939 = vmatpush2.msra.mxu0 0.0
    %1940 = vmatprep.subr.mxu0 0.0
    %1941 = vmatpush2.msra.mxu0 0.0
    %1942 = vmatprep.subr.mxu0 0.0
    %1943 = vmatpush2.msra.mxu0 0.0
    %1944 = vmatprep.subr.mxu0 0.0
    %1945 = vmatpush2.msra.mxu0 0.0
    %1946 = vmatprep.subr.mxu0 0.0
    %1947 = vmatpush2.msra.mxu0 0.0
    %1948 = vmatprep.subr.mxu0 0.0
    %1949 = vmatpush2.msra.mxu0 0.0
    %1950 = vmatprep.subr.mxu0 0.0
    %1951 = vmatpush2.msra.mxu0 0.0
    %1952 = vmatprep.subr.mxu0 0.0
    %1953 = vmatpush2.msra.mxu0 0.0
    %1954 = vmatprep.subr.mxu0 0.0
    %1955 = vmatpush2.msra.mxu0 0.0
    %1956 = vmatprep.mubr.f32.mxu0 0.0
    %1957 = vmatmul.mubr.f32.gmra.mxu0 %v1731
    %v1958 = vpop.f32.mrf.mxu0
    %v1959 = vadd.f32 0.0, %v1958
    %v1960 = vpop.f32.mrf.mxu0
    %1961 = vmatprep.mubr.f32.mxu0 0.0
    %1962 = vmatmul.mubr.f32.gmra.mxu0 %v1732
    %v1963 = vpop.f32.mrf.mxu0
    %v1964 = vadd.f32 0.0, %v1963
    %v1965 = vpop.f32.mrf.mxu0
    %1966 = vmatprep.mubr.f32.mxu0 0.0
    %1967 = vmatmul.mubr.f32.gmra.mxu0 %v1733
    %v1968 = vpop.f32.mrf.mxu0
    %v1969 = vadd.f32 0.0, %v1968
    %v1970 = vpop.f32.mrf.mxu0
    %1971 = vmatprep.mubr.f32.mxu0 0.0
    %1972 = vmatmul.mubr.f32.gmra.mxu0 %v1734
    %v1973 = vpop.f32.mrf.mxu0
    %v1974 = vadd.f32 0.0, %v1973
    %v1975 = vpop.f32.mrf.mxu0
    %1976 = vmatprep.mubr.f32.mxu0 0.0
    %1977 = vmatmul.mubr.f32.gmra.mxu0 %v1735
    %v1978 = vpop.f32.mrf.mxu0
    %v1979 = vadd.f32 0.0, %v1978
    %v1980 = vpop.f32.mrf.mxu0
    %1981 = vmatprep.mubr.f32.mxu0 0.0
    %1982 = vmatmul.mubr.f32.gmra.mxu0 %v1736
    %v1983 = vpop.f32.mrf.mxu0
    %v1984 = vadd.f32 0.0, %v1983
    %v1985 = vpop.f32.mrf.mxu0
    %1986 = vmatprep.mubr.f32.mxu0 0.0
    %1987 = vmatmul.mubr.f32.gmra.mxu0 %v1737
    %v1988 = vpop.f32.mrf.mxu0
    %v1989 = vadd.f32 0.0, %v1988
    %v1990 = vpop.f32.mrf.mxu0
    %1991 = vmatprep.mubr.f32.mxu0 0.0
    %1992 = vmatmul.mubr.f32.gmra.mxu0 %v1738
    %v1993 = vpop.f32.mrf.mxu0
    %v1994 = vadd.f32 0.0, %v1993
    %v1995 = vpop.f32.mrf.mxu0
    %1996 = vmatprep.mubr.f32.mxu0 0.0
    %1997 = vmatmul.mubr.f32.gmra.mxu0 %v1739
    %v1998 = vpop.f32.mrf.mxu0
    %v1999 = vadd.f32 0.0, %v1998
    %v2000 = vpop.f32.mrf.mxu0
    %2001 = vmatprep.mubr.f32.mxu0 0.0
    %2002 = vmatmul.mubr.f32.gmra.mxu0 %v1740
    %v2003 = vpop.f32.mrf.mxu0
    %v2004 = vadd.f32 0.0, %v2003
    %v2005 = vpop.f32.mrf.mxu0
    %2006 = vmatprep.mubr.f32.mxu0 0.0
    %2007 = vmatmul.mubr.f32.gmra.mxu0 %v1741
    %v2008 = vpop.f32.mrf.mxu0
    %v2009 = vadd.f32 0.0, %v2008
    %v2010 = vpop.f32.mrf.mxu0
    %2011 = vmatprep.mubr.f32.mxu0 0.0
    %2012 = vmatmul.mubr.f32.gmra.mxu0 %v1742
    %v2013 = vpop.f32.mrf.mxu0
    %v2014 = vadd.f32 0.0, %v2013
    %v2015 = vpop.f32.mrf.mxu0
    %2016 = vmatprep.mubr.f32.mxu0 0.0
    %2017 = vmatmul.mubr.f32.gmra.mxu0 %v1743
    %v2018 = vpop.f32.mrf.mxu0
    %v2019 = vadd.f32 0.0, %v2018
    %v2020 = vpop.f32.mrf.mxu0
    %2021 = vmatprep.mubr.f32.mxu0 0.0
    %2022 = vmatmul.mubr.f32.gmra.mxu0 %v1744
    %v2023 = vpop.f32.mrf.mxu0
    %v2024 = vadd.f32 0.0, %v2023
    %v2025 = vpop.f32.mrf.mxu0
    %2026 = vmatprep.mubr.f32.mxu0 0.0
    %2027 = vmatmul.mubr.f32.gmra.mxu0 %v1745
    %v2028 = vpop.f32.mrf.mxu0
    %v2029 = vadd.f32 0.0, %v2028
    %v2030 = vpop.f32.mrf.mxu0
    %2031 = vmatprep.mubr.f32.mxu0 0.0
    %2032 = vmatmul.mubr.f32.gmra.mxu0 %v1746
    %v2033 = vpop.f32.mrf.mxu0
    %v2034 = vadd.f32 0.0, %v2033
    %v2035 = vpop.f32.mrf.mxu0
    %2036 = vdwg.mxu0
    %v2037 = vmul.f32 %v39, %v1814
    %v2038 = vmul.f32 %v40, %v1819
    %v2039 = vmul.f32 %v41, %v1824
    %v2040 = vmul.f32 %v42, %v1829
    %v2041 = vmul.f32 %v43, %v1834
    %v2042 = vmul.f32 %v44, %v1839
    %v2043 = vmul.f32 %v45, %v1844
    %v2044 = vmul.f32 %v46, %v1849
    %v2045 = vmul.f32 %v47, %v1854
    %v2046 = vmul.f32 %v48, %v1859
    %v2047 = vmul.f32 %v49, %v1864
    %v2048 = vmul.f32 %v50, %v1869
    %v2049 = vmul.f32 %v51, %v1874
    %v2050 = vmul.f32 %v52, %v1879
    %v2051 = vmul.f32 %v53, %v1884
    %v2052 = vmul.f32 %v54, %v1889
    %v2053 = vmul.f32 %v55, %v1959
    %v2054 = vmul.f32 %v56, %v1964
    %v2055 = vmul.f32 %v57, %v1969
    %v2056 = vmul.f32 %v58, %v1974
    %v2057 = vmul.f32 %v59, %v1979
    %v2058 = vmul.f32 %v60, %v1984
    %v2059 = vmul.f32 %v61, %v1989
    %v2060 = vmul.f32 %v62, %v1994
    %v2061 = vmul.f32 %v63, %v1999
    %v2062 = vmul.f32 %v64, %v2004
    %v2063 = vmul.f32 %v65, %v2009
    %v2064 = vmul.f32 %v66, %v2014
    %v2065 = vmul.f32 %v67, %v2019
    %v2066 = vmul.f32 %v68, %v2024
    %v2067 = vmul.f32 %v69, %v2029
    %v2068 = vmul.f32 %v70, %v2034
    %v2069 = vlaneseq
    %v2070 = vshrl.u32 %v2069, 7
    %v2071 = vsub.s32 0, %v2070
    %v2072 = vrot.slane %v106, %v2071
    %v2073 = vmul.f32 %v39, %v2072
    %v2074 = vmul.f32 %v40, %v2072
    %v2075 = vmul.f32 %v41, %v2072
    %v2076 = vmul.f32 %v42, %v2072
    %v2077 = vmul.f32 %v43, %v2072
    %v2078 = vmul.f32 %v44, %v2072
    %v2079 = vmul.f32 %v45, %v2072
    %v2080 = vmul.f32 %v46, %v2072
    %v2081 = vmul.f32 %v47, %v2072
    %v2082 = vmul.f32 %v48, %v2072
    %v2083 = vmul.f32 %v49, %v2072
    %v2084 = vmul.f32 %v50, %v2072
    %v2085 = vmul.f32 %v51, %v2072
    %v2086 = vmul.f32 %v52, %v2072
    %v2087 = vmul.f32 %v53, %v2072
    %v2088 = vmul.f32 %v54, %v2072
    %v2089 = vmul.f32 %v55, %v2072
    %v2090 = vmul.f32 %v56, %v2072
    %v2091 = vmul.f32 %v57, %v2072
    %v2092 = vmul.f32 %v58, %v2072
    %v2093 = vmul.f32 %v59, %v2072
    %v2094 = vmul.f32 %v60, %v2072
    %v2095 = vmul.f32 %v61, %v2072
    %v2096 = vmul.f32 %v62, %v2072
    %v2097 = vmul.f32 %v63, %v2072
    %v2098 = vmul.f32 %v64, %v2072
    %v2099 = vmul.f32 %v65, %v2072
    %v2100 = vmul.f32 %v66, %v2072
    %v2101 = vmul.f32 %v67, %v2072
    %v2102 = vmul.f32 %v68, %v2072
    %v2103 = vmul.f32 %v69, %v2072
    %v2104 = vmul.f32 %v70, %v2072
    %v2105 = vlaneseq
    %v2106 = vshrl.u32 %v2105, 7
    %v2107 = vsub.s32 1, %v2106
    %v2108 = vrot.slane %v106, %v2107
    %v2109 = vmul.f32 %v1814, %v2108
    %v2110 = vmul.f32 %v1819, %v2108
    %v2111 = vmul.f32 %v1824, %v2108
    %v2112 = vmul.f32 %v1829, %v2108
    %v2113 = vmul.f32 %v1834, %v2108
    %v2114 = vmul.f32 %v1839, %v2108
    %v2115 = vmul.f32 %v1844, %v2108
    %v2116 = vmul.f32 %v1849, %v2108
    %v2117 = vmul.f32 %v1854, %v2108
    %v2118 = vmul.f32 %v1859, %v2108
    %v2119 = vmul.f32 %v1864, %v2108
    %v2120 = vmul.f32 %v1869, %v2108
    %v2121 = vmul.f32 %v1874, %v2108
    %v2122 = vmul.f32 %v1879, %v2108
    %v2123 = vmul.f32 %v1884, %v2108
    %v2124 = vmul.f32 %v1889, %v2108
    %v2125 = vmul.f32 %v1959, %v2108
    %v2126 = vmul.f32 %v1964, %v2108
    %v2127 = vmul.f32 %v1969, %v2108
    %v2128 = vmul.f32 %v1974, %v2108
    %v2129 = vmul.f32 %v1979, %v2108
    %v2130 = vmul.f32 %v1984, %v2108
    %v2131 = vmul.f32 %v1989, %v2108
    %v2132 = vmul.f32 %v1994, %v2108
    %v2133 = vmul.f32 %v1999, %v2108
    %v2134 = vmul.f32 %v2004, %v2108
    %v2135 = vmul.f32 %v2009, %v2108
    %v2136 = vmul.f32 %v2014, %v2108
    %v2137 = vmul.f32 %v2019, %v2108
    %v2138 = vmul.f32 %v2024, %v2108
    %v2139 = vmul.f32 %v2029, %v2108
    %v2140 = vmul.f32 %v2034, %v2108
    %v2141 = vadd.f32 %v2073, %v2109
    %v2142 = vadd.f32 %v2074, %v2110
    %v2143 = vadd.f32 %v2075, %v2111
    %v2144 = vadd.f32 %v2076, %v2112
    %v2145 = vadd.f32 %v2077, %v2113
    %v2146 = vadd.f32 %v2078, %v2114
    %v2147 = vadd.f32 %v2079, %v2115
    %v2148 = vadd.f32 %v2080, %v2116
    %v2149 = vadd.f32 %v2081, %v2117
    %v2150 = vadd.f32 %v2082, %v2118
    %v2151 = vadd.f32 %v2083, %v2119
    %v2152 = vadd.f32 %v2084, %v2120
    %v2153 = vadd.f32 %v2085, %v2121
    %v2154 = vadd.f32 %v2086, %v2122
    %v2155 = vadd.f32 %v2087, %v2123
    %v2156 = vadd.f32 %v2088, %v2124
    %v2157 = vadd.f32 %v2089, %v2125
    %v2158 = vadd.f32 %v2090, %v2126
    %v2159 = vadd.f32 %v2091, %v2127
    %v2160 = vadd.f32 %v2092, %v2128
    %v2161 = vadd.f32 %v2093, %v2129
    %v2162 = vadd.f32 %v2094, %v2130
    %v2163 = vadd.f32 %v2095, %v2131
    %v2164 = vadd.f32 %v2096, %v2132
    %v2165 = vadd.f32 %v2097, %v2133
    %v2166 = vadd.f32 %v2098, %v2134
    %v2167 = vadd.f32 %v2099, %v2135
    %v2168 = vadd.f32 %v2100, %v2136
    %v2169 = vadd.f32 %v2101, %v2137
    %v2170 = vadd.f32 %v2102, %v2138
    %v2171 = vadd.f32 %v2103, %v2139
    %v2172 = vadd.f32 %v2104, %v2140
    %v2173 = vlaneseq
    %v2174 = vshrl.u32 %v2173, 7
    %v2175 = vsub.s32 2, %v2174
    %v2176 = vrot.slane %v106, %v2175
    %v2177 = vmul.f32 %v2037, %v2176
    %v2178 = vmul.f32 %v2038, %v2176
    %v2179 = vmul.f32 %v2039, %v2176
    %v2180 = vmul.f32 %v2040, %v2176
    %v2181 = vmul.f32 %v2041, %v2176
    %v2182 = vmul.f32 %v2042, %v2176
    %v2183 = vmul.f32 %v2043, %v2176
    %v2184 = vmul.f32 %v2044, %v2176
    %v2185 = vmul.f32 %v2045, %v2176
    %v2186 = vmul.f32 %v2046, %v2176
    %v2187 = vmul.f32 %v2047, %v2176
    %v2188 = vmul.f32 %v2048, %v2176
    %v2189 = vmul.f32 %v2049, %v2176
    %v2190 = vmul.f32 %v2050, %v2176
    %v2191 = vmul.f32 %v2051, %v2176
    %v2192 = vmul.f32 %v2052, %v2176
    %v2193 = vmul.f32 %v2053, %v2176
    %v2194 = vmul.f32 %v2054, %v2176
    %v2195 = vmul.f32 %v2055, %v2176
    %v2196 = vmul.f32 %v2056, %v2176
    %v2197 = vmul.f32 %v2057, %v2176
    %v2198 = vmul.f32 %v2058, %v2176
    %v2199 = vmul.f32 %v2059, %v2176
    %v2200 = vmul.f32 %v2060, %v2176
    %v2201 = vmul.f32 %v2061, %v2176
    %v2202 = vmul.f32 %v2062, %v2176
    %v2203 = vmul.f32 %v2063, %v2176
    %v2204 = vmul.f32 %v2064, %v2176
    %v2205 = vmul.f32 %v2065, %v2176
    %v2206 = vmul.f32 %v2066, %v2176
    %v2207 = vmul.f32 %v2067, %v2176
    %v2208 = vmul.f32 %v2068, %v2176
    %v2209 = vadd.f32 %v2141, %v2177
    %v2210 = vadd.f32 %v2142, %v2178
    %v2211 = vadd.f32 %v2143, %v2179
    %v2212 = vadd.f32 %v2144, %v2180
    %v2213 = vadd.f32 %v2145, %v2181
    %v2214 = vadd.f32 %v2146, %v2182
    %v2215 = vadd.f32 %v2147, %v2183
    %v2216 = vadd.f32 %v2148, %v2184
    %v2217 = vadd.f32 %v2149, %v2185
    %v2218 = vadd.f32 %v2150, %v2186
    %v2219 = vadd.f32 %v2151, %v2187
    %v2220 = vadd.f32 %v2152, %v2188
    %v2221 = vadd.f32 %v2153, %v2189
    %v2222 = vadd.f32 %v2154, %v2190
    %v2223 = vadd.f32 %v2155, %v2191
    %v2224 = vadd.f32 %v2156, %v2192
    %v2225 = vadd.f32 %v2157, %v2193
    %v2226 = vadd.f32 %v2158, %v2194
    %v2227 = vadd.f32 %v2159, %v2195
    %v2228 = vadd.f32 %v2160, %v2196
    %v2229 = vadd.f32 %v2161, %v2197
    %v2230 = vadd.f32 %v2162, %v2198
    %v2231 = vadd.f32 %v2163, %v2199
    %v2232 = vadd.f32 %v2164, %v2200
    %v2233 = vadd.f32 %v2165, %v2201
    %v2234 = vadd.f32 %v2166, %v2202
    %v2235 = vadd.f32 %v2167, %v2203
    %v2236 = vadd.f32 %v2168, %v2204
    %v2237 = vadd.f32 %v2169, %v2205
    %v2238 = vadd.f32 %v2170, %v2206
    %v2239 = vadd.f32 %v2171, %v2207
    %v2240 = vadd.f32 %v2172, %v2208
    %v2241 = vsel %vm147, %v2209, 0.0
    %2242 = vadd.xlane.f32.xlu0 %v2241
    %v2243 = vpop.xlane.xlu0 %2242
    %v2244 = vsel %vm147, %v2210, 0.0
    %2245 = vadd.xlane.f32.xlu0 %v2244
    %v2246 = vpop.xlane.xlu0 %2245
    %v2247 = vsel %vm147, %v2211, 0.0
    %2248 = vadd.xlane.f32.xlu0 %v2247
    %v2249 = vpop.xlane.xlu0 %2248
    %v2250 = vsel %vm147, %v2212, 0.0
    %2251 = vadd.xlane.f32.xlu0 %v2250
    %v2252 = vpop.xlane.xlu0 %2251
    %v2253 = vsel %vm147, %v2213, 0.0
    %2254 = vadd.xlane.f32.xlu0 %v2253
    %v2255 = vpop.xlane.xlu0 %2254
    %v2256 = vsel %vm147, %v2214, 0.0
    %2257 = vadd.xlane.f32.xlu0 %v2256
    %v2258 = vpop.xlane.xlu0 %2257
    %v2259 = vsel %vm147, %v2215, 0.0
    %2260 = vadd.xlane.f32.xlu0 %v2259
    %v2261 = vpop.xlane.xlu0 %2260
    %v2262 = vsel %vm147, %v2216, 0.0
    %2263 = vadd.xlane.f32.xlu0 %v2262
    %v2264 = vpop.xlane.xlu0 %2263
    %v2265 = vsel %vm147, %v2217, 0.0
    %2266 = vadd.xlane.f32.xlu0 %v2265
    %v2267 = vpop.xlane.xlu0 %2266
    %v2268 = vsel %vm147, %v2218, 0.0
    %2269 = vadd.xlane.f32.xlu0 %v2268
    %v2270 = vpop.xlane.xlu0 %2269
    %v2271 = vsel %vm147, %v2219, 0.0
    %2272 = vadd.xlane.f32.xlu0 %v2271
    %v2273 = vpop.xlane.xlu0 %2272
    %v2274 = vsel %vm147, %v2220, 0.0
    %2275 = vadd.xlane.f32.xlu0 %v2274
    %v2276 = vpop.xlane.xlu0 %2275
    %v2277 = vsel %vm147, %v2221, 0.0
    %2278 = vadd.xlane.f32.xlu0 %v2277
    %v2279 = vpop.xlane.xlu0 %2278
    %v2280 = vsel %vm147, %v2222, 0.0
    %2281 = vadd.xlane.f32.xlu0 %v2280
    %v2282 = vpop.xlane.xlu0 %2281
    %v2283 = vsel %vm147, %v2223, 0.0
    %2284 = vadd.xlane.f32.xlu0 %v2283
    %v2285 = vpop.xlane.xlu0 %2284
    %v2286 = vsel %vm147, %v2224, 0.0
    %2287 = vadd.xlane.f32.xlu0 %v2286
    %v2288 = vpop.xlane.xlu0 %2287
    %v2289 = vsel %vm147, %v2225, 0.0
    %2290 = vadd.xlane.f32.xlu0 %v2289
    %v2291 = vpop.xlane.xlu0 %2290
    %v2292 = vsel %vm147, %v2226, 0.0
    %2293 = vadd.xlane.f32.xlu0 %v2292
    %v2294 = vpop.xlane.xlu0 %2293
    %v2295 = vsel %vm147, %v2227, 0.0
    %2296 = vadd.xlane.f32.xlu0 %v2295
    %v2297 = vpop.xlane.xlu0 %2296
    %v2298 = vsel %vm147, %v2228, 0.0
    %2299 = vadd.xlane.f32.xlu0 %v2298
    %v2300 = vpop.xlane.xlu0 %2299
    %v2301 = vsel %vm147, %v2229, 0.0
    %2302 = vadd.xlane.f32.xlu0 %v2301
    %v2303 = vpop.xlane.xlu0 %2302
    %v2304 = vsel %vm147, %v2230, 0.0
    %2305 = vadd.xlane.f32.xlu0 %v2304
    %v2306 = vpop.xlane.xlu0 %2305
    %v2307 = vsel %vm147, %v2231, 0.0
    %2308 = vadd.xlane.f32.xlu0 %v2307
    %v2309 = vpop.xlane.xlu0 %2308
    %v2310 = vsel %vm147, %v2232, 0.0
    %2311 = vadd.xlane.f32.xlu0 %v2310
    %v2312 = vpop.xlane.xlu0 %2311
    %v2313 = vsel %vm147, %v2233, 0.0
    %2314 = vadd.xlane.f32.xlu0 %v2313
    %v2315 = vpop.xlane.xlu0 %2314
    %v2316 = vsel %vm147, %v2234, 0.0
    %2317 = vadd.xlane.f32.xlu0 %v2316
    %v2318 = vpop.xlane.xlu0 %2317
    %v2319 = vsel %vm147, %v2235, 0.0
    %2320 = vadd.xlane.f32.xlu0 %v2319
    %v2321 = vpop.xlane.xlu0 %2320
    %v2322 = vsel %vm147, %v2236, 0.0
    %2323 = vadd.xlane.f32.xlu0 %v2322
    %v2324 = vpop.xlane.xlu0 %2323
    %v2325 = vsel %vm147, %v2237, 0.0
    %2326 = vadd.xlane.f32.xlu0 %v2325
    %v2327 = vpop.xlane.xlu0 %2326
    %v2328 = vsel %vm147, %v2238, 0.0
    %2329 = vadd.xlane.f32.xlu0 %v2328
    %v2330 = vpop.xlane.xlu0 %2329
    %v2331 = vsel %vm147, %v2239, 0.0
    %2332 = vadd.xlane.f32.xlu0 %v2331
    %v2333 = vpop.xlane.xlu0 %2332
    %v2334 = vsel %vm147, %v2240, 0.0
    %2335 = vadd.xlane.f32.xlu0 %v2334
    %v2336 = vpop.xlane.xlu0 %2335
    %v2337 = vstv %s109
    %v2338 = vadd.f32 %v2243, %v2337
    %v2339 = vadd.f32 %v2246, %v2337
    %v2340 = vadd.f32 %v2249, %v2337
    %v2341 = vadd.f32 %v2252, %v2337
    %v2342 = vadd.f32 %v2255, %v2337
    %v2343 = vadd.f32 %v2258, %v2337
    %v2344 = vadd.f32 %v2261, %v2337
    %v2345 = vadd.f32 %v2264, %v2337
    %v2346 = vadd.f32 %v2267, %v2337
    %v2347 = vadd.f32 %v2270, %v2337
    %v2348 = vadd.f32 %v2273, %v2337
    %v2349 = vadd.f32 %v2276, %v2337
    %v2350 = vadd.f32 %v2279, %v2337
    %v2351 = vadd.f32 %v2282, %v2337
    %v2352 = vadd.f32 %v2285, %v2337
    %v2353 = vadd.f32 %v2288, %v2337
    %v2354 = vadd.f32 %v2291, %v2337
    %v2355 = vadd.f32 %v2294, %v2337
    %v2356 = vadd.f32 %v2297, %v2337
    %v2357 = vadd.f32 %v2300, %v2337
    %v2358 = vadd.f32 %v2303, %v2337
    %v2359 = vadd.f32 %v2306, %v2337
    %v2360 = vadd.f32 %v2309, %v2337
    %v2361 = vadd.f32 %v2312, %v2337
    %v2362 = vadd.f32 %v2315, %v2337
    %v2363 = vadd.f32 %v2318, %v2337
    %v2364 = vadd.f32 %v2321, %v2337
    %v2365 = vadd.f32 %v2324, %v2337
    %v2366 = vadd.f32 %v2327, %v2337
    %v2367 = vadd.f32 %v2330, %v2337
    %v2368 = vadd.f32 %v2333, %v2337
    %v2369 = vadd.f32 %v2336, %v2337
    %v2370 = vlaneseq
    %v2371 = vshrl.u32 %v2370, 7
    %v2372 = vsub.s32 0, %v2371
    %v2373 = vrot.slane %v107, %v2372
    %v2374 = vmul.f32 %v39, %v2373
    %v2375 = vmul.f32 %v40, %v2373
    %v2376 = vmul.f32 %v41, %v2373
    %v2377 = vmul.f32 %v42, %v2373
    %v2378 = vmul.f32 %v43, %v2373
    %v2379 = vmul.f32 %v44, %v2373
    %v2380 = vmul.f32 %v45, %v2373
    %v2381 = vmul.f32 %v46, %v2373
    %v2382 = vmul.f32 %v47, %v2373
    %v2383 = vmul.f32 %v48, %v2373
    %v2384 = vmul.f32 %v49, %v2373
    %v2385 = vmul.f32 %v50, %v2373
    %v2386 = vmul.f32 %v51, %v2373
    %v2387 = vmul.f32 %v52, %v2373
    %v2388 = vmul.f32 %v53, %v2373
    %v2389 = vmul.f32 %v54, %v2373
    %v2390 = vmul.f32 %v55, %v2373
    %v2391 = vmul.f32 %v56, %v2373
    %v2392 = vmul.f32 %v57, %v2373
    %v2393 = vmul.f32 %v58, %v2373
    %v2394 = vmul.f32 %v59, %v2373
    %v2395 = vmul.f32 %v60, %v2373
    %v2396 = vmul.f32 %v61, %v2373
    %v2397 = vmul.f32 %v62, %v2373
    %v2398 = vmul.f32 %v63, %v2373
    %v2399 = vmul.f32 %v64, %v2373
    %v2400 = vmul.f32 %v65, %v2373
    %v2401 = vmul.f32 %v66, %v2373
    %v2402 = vmul.f32 %v67, %v2373
    %v2403 = vmul.f32 %v68, %v2373
    %v2404 = vmul.f32 %v69, %v2373
    %v2405 = vmul.f32 %v70, %v2373
    %v2406 = vlaneseq
    %v2407 = vshrl.u32 %v2406, 7
    %v2408 = vsub.s32 1, %v2407
    %v2409 = vrot.slane %v107, %v2408
    %v2410 = vmul.f32 %v1814, %v2409
    %v2411 = vmul.f32 %v1819, %v2409
    %v2412 = vmul.f32 %v1824, %v2409
    %v2413 = vmul.f32 %v1829, %v2409
    %v2414 = vmul.f32 %v1834, %v2409
    %v2415 = vmul.f32 %v1839, %v2409
    %v2416 = vmul.f32 %v1844, %v2409
    %v2417 = vmul.f32 %v1849, %v2409
    %v2418 = vmul.f32 %v1854, %v2409
    %v2419 = vmul.f32 %v1859, %v2409
    %v2420 = vmul.f32 %v1864, %v2409
    %v2421 = vmul.f32 %v1869, %v2409
    %v2422 = vmul.f32 %v1874, %v2409
    %v2423 = vmul.f32 %v1879, %v2409
    %v2424 = vmul.f32 %v1884, %v2409
    %v2425 = vmul.f32 %v1889, %v2409
    %v2426 = vmul.f32 %v1959, %v2409
    %v2427 = vmul.f32 %v1964, %v2409
    %v2428 = vmul.f32 %v1969, %v2409
    %v2429 = vmul.f32 %v1974, %v2409
    %v2430 = vmul.f32 %v1979, %v2409
    %v2431 = vmul.f32 %v1984, %v2409
    %v2432 = vmul.f32 %v1989, %v2409
    %v2433 = vmul.f32 %v1994, %v2409
    %v2434 = vmul.f32 %v1999, %v2409
    %v2435 = vmul.f32 %v2004, %v2409
    %v2436 = vmul.f32 %v2009, %v2409
    %v2437 = vmul.f32 %v2014, %v2409
    %v2438 = vmul.f32 %v2019, %v2409
    %v2439 = vmul.f32 %v2024, %v2409
    %v2440 = vmul.f32 %v2029, %v2409
    %v2441 = vmul.f32 %v2034, %v2409
    %v2442 = vadd.f32 %v2374, %v2410
    %v2443 = vadd.f32 %v2375, %v2411
    %v2444 = vadd.f32 %v2376, %v2412
    %v2445 = vadd.f32 %v2377, %v2413
    %v2446 = vadd.f32 %v2378, %v2414
    %v2447 = vadd.f32 %v2379, %v2415
    %v2448 = vadd.f32 %v2380, %v2416
    %v2449 = vadd.f32 %v2381, %v2417
    %v2450 = vadd.f32 %v2382, %v2418
    %v2451 = vadd.f32 %v2383, %v2419
    %v2452 = vadd.f32 %v2384, %v2420
    %v2453 = vadd.f32 %v2385, %v2421
    %v2454 = vadd.f32 %v2386, %v2422
    %v2455 = vadd.f32 %v2387, %v2423
    %v2456 = vadd.f32 %v2388, %v2424
    %v2457 = vadd.f32 %v2389, %v2425
    %v2458 = vadd.f32 %v2390, %v2426
    %v2459 = vadd.f32 %v2391, %v2427
    %v2460 = vadd.f32 %v2392, %v2428
    %v2461 = vadd.f32 %v2393, %v2429
    %v2462 = vadd.f32 %v2394, %v2430
    %v2463 = vadd.f32 %v2395, %v2431
    %v2464 = vadd.f32 %v2396, %v2432
    %v2465 = vadd.f32 %v2397, %v2433
    %v2466 = vadd.f32 %v2398, %v2434
    %v2467 = vadd.f32 %v2399, %v2435
    %v2468 = vadd.f32 %v2400, %v2436
    %v2469 = vadd.f32 %v2401, %v2437
    %v2470 = vadd.f32 %v2402, %v2438
    %v2471 = vadd.f32 %v2403, %v2439
    %v2472 = vadd.f32 %v2404, %v2440
    %v2473 = vadd.f32 %v2405, %v2441
    %v2474 = vlaneseq
    %v2475 = vshrl.u32 %v2474, 7
    %v2476 = vsub.s32 2, %v2475
    %v2477 = vrot.slane %v107, %v2476
    %v2478 = vmul.f32 %v2037, %v2477
    %v2479 = vmul.f32 %v2038, %v2477
    %v2480 = vmul.f32 %v2039, %v2477
    %v2481 = vmul.f32 %v2040, %v2477
    %v2482 = vmul.f32 %v2041, %v2477
    %v2483 = vmul.f32 %v2042, %v2477
    %v2484 = vmul.f32 %v2043, %v2477
    %v2485 = vmul.f32 %v2044, %v2477
    %v2486 = vmul.f32 %v2045, %v2477
    %v2487 = vmul.f32 %v2046, %v2477
    %v2488 = vmul.f32 %v2047, %v2477
    %v2489 = vmul.f32 %v2048, %v2477
    %v2490 = vmul.f32 %v2049, %v2477
    %v2491 = vmul.f32 %v2050, %v2477
    %v2492 = vmul.f32 %v2051, %v2477
    %v2493 = vmul.f32 %v2052, %v2477
    %v2494 = vmul.f32 %v2053, %v2477
    %v2495 = vmul.f32 %v2054, %v2477
    %v2496 = vmul.f32 %v2055, %v2477
    %v2497 = vmul.f32 %v2056, %v2477
    %v2498 = vmul.f32 %v2057, %v2477
    %v2499 = vmul.f32 %v2058, %v2477
    %v2500 = vmul.f32 %v2059, %v2477
    %v2501 = vmul.f32 %v2060, %v2477
    %v2502 = vmul.f32 %v2061, %v2477
    %v2503 = vmul.f32 %v2062, %v2477
    %v2504 = vmul.f32 %v2063, %v2477
    %v2505 = vmul.f32 %v2064, %v2477
    %v2506 = vmul.f32 %v2065, %v2477
    %v2507 = vmul.f32 %v2066, %v2477
    %v2508 = vmul.f32 %v2067, %v2477
    %v2509 = vmul.f32 %v2068, %v2477
    %v2510 = vadd.f32 %v2442, %v2478
    %v2511 = vadd.f32 %v2443, %v2479
    %v2512 = vadd.f32 %v2444, %v2480
    %v2513 = vadd.f32 %v2445, %v2481
    %v2514 = vadd.f32 %v2446, %v2482
    %v2515 = vadd.f32 %v2447, %v2483
    %v2516 = vadd.f32 %v2448, %v2484
    %v2517 = vadd.f32 %v2449, %v2485
    %v2518 = vadd.f32 %v2450, %v2486
    %v2519 = vadd.f32 %v2451, %v2487
    %v2520 = vadd.f32 %v2452, %v2488
    %v2521 = vadd.f32 %v2453, %v2489
    %v2522 = vadd.f32 %v2454, %v2490
    %v2523 = vadd.f32 %v2455, %v2491
    %v2524 = vadd.f32 %v2456, %v2492
    %v2525 = vadd.f32 %v2457, %v2493
    %v2526 = vadd.f32 %v2458, %v2494
    %v2527 = vadd.f32 %v2459, %v2495
    %v2528 = vadd.f32 %v2460, %v2496
    %v2529 = vadd.f32 %v2461, %v2497
    %v2530 = vadd.f32 %v2462, %v2498
    %v2531 = vadd.f32 %v2463, %v2499
    %v2532 = vadd.f32 %v2464, %v2500
    %v2533 = vadd.f32 %v2465, %v2501
    %v2534 = vadd.f32 %v2466, %v2502
    %v2535 = vadd.f32 %v2467, %v2503
    %v2536 = vadd.f32 %v2468, %v2504
    %v2537 = vadd.f32 %v2469, %v2505
    %v2538 = vadd.f32 %v2470, %v2506
    %v2539 = vadd.f32 %v2471, %v2507
    %v2540 = vadd.f32 %v2472, %v2508
    %v2541 = vadd.f32 %v2473, %v2509
    %v2542 = vsel %vm147, %v2510, 0.0
    %2543 = vadd.xlane.f32.xlu0 %v2542
    %v2544 = vpop.xlane.xlu0 %2543
    %v2545 = vsel %vm147, %v2511, 0.0
    %2546 = vadd.xlane.f32.xlu0 %v2545
    %v2547 = vpop.xlane.xlu0 %2546
    %v2548 = vsel %vm147, %v2512, 0.0
    %2549 = vadd.xlane.f32.xlu0 %v2548
    %v2550 = vpop.xlane.xlu0 %2549
    %v2551 = vsel %vm147, %v2513, 0.0
    %2552 = vadd.xlane.f32.xlu0 %v2551
    %v2553 = vpop.xlane.xlu0 %2552
    %v2554 = vsel %vm147, %v2514, 0.0
    %2555 = vadd.xlane.f32.xlu0 %v2554
    %v2556 = vpop.xlane.xlu0 %2555
    %v2557 = vsel %vm147, %v2515, 0.0
    %2558 = vadd.xlane.f32.xlu0 %v2557
    %v2559 = vpop.xlane.xlu0 %2558
    %v2560 = vsel %vm147, %v2516, 0.0
    %2561 = vadd.xlane.f32.xlu0 %v2560
    %v2562 = vpop.xlane.xlu0 %2561
    %v2563 = vsel %vm147, %v2517, 0.0
    %2564 = vadd.xlane.f32.xlu0 %v2563
    %v2565 = vpop.xlane.xlu0 %2564
    %v2566 = vsel %vm147, %v2518, 0.0
    %2567 = vadd.xlane.f32.xlu0 %v2566
    %v2568 = vpop.xlane.xlu0 %2567
    %v2569 = vsel %vm147, %v2519, 0.0
    %2570 = vadd.xlane.f32.xlu0 %v2569
    %v2571 = vpop.xlane.xlu0 %2570
    %v2572 = vsel %vm147, %v2520, 0.0
    %2573 = vadd.xlane.f32.xlu0 %v2572
    %v2574 = vpop.xlane.xlu0 %2573
    %v2575 = vsel %vm147, %v2521, 0.0
    %2576 = vadd.xlane.f32.xlu0 %v2575
    %v2577 = vpop.xlane.xlu0 %2576
    %v2578 = vsel %vm147, %v2522, 0.0
    %2579 = vadd.xlane.f32.xlu0 %v2578
    %v2580 = vpop.xlane.xlu0 %2579
    %v2581 = vsel %vm147, %v2523, 0.0
    %2582 = vadd.xlane.f32.xlu0 %v2581
    %v2583 = vpop.xlane.xlu0 %2582
    %v2584 = vsel %vm147, %v2524, 0.0
    %2585 = vadd.xlane.f32.xlu0 %v2584
    %v2586 = vpop.xlane.xlu0 %2585
    %v2587 = vsel %vm147, %v2525, 0.0
    %2588 = vadd.xlane.f32.xlu0 %v2587
    %v2589 = vpop.xlane.xlu0 %2588
    %v2590 = vsel %vm147, %v2526, 0.0
    %2591 = vadd.xlane.f32.xlu0 %v2590
    %v2592 = vpop.xlane.xlu0 %2591
    %v2593 = vsel %vm147, %v2527, 0.0
    %2594 = vadd.xlane.f32.xlu0 %v2593
    %v2595 = vpop.xlane.xlu0 %2594
    %v2596 = vsel %vm147, %v2528, 0.0
    %2597 = vadd.xlane.f32.xlu0 %v2596
    %v2598 = vpop.xlane.xlu0 %2597
    %v2599 = vsel %vm147, %v2529, 0.0
    %2600 = vadd.xlane.f32.xlu0 %v2599
    %v2601 = vpop.xlane.xlu0 %2600
    %v2602 = vsel %vm147, %v2530, 0.0
    %2603 = vadd.xlane.f32.xlu0 %v2602
    %v2604 = vpop.xlane.xlu0 %2603
    %v2605 = vsel %vm147, %v2531, 0.0
    %2606 = vadd.xlane.f32.xlu0 %v2605
    %v2607 = vpop.xlane.xlu0 %2606
    %v2608 = vsel %vm147, %v2532, 0.0
    %2609 = vadd.xlane.f32.xlu0 %v2608
    %v2610 = vpop.xlane.xlu0 %2609
    %v2611 = vsel %vm147, %v2533, 0.0
    %2612 = vadd.xlane.f32.xlu0 %v2611
    %v2613 = vpop.xlane.xlu0 %2612
    %v2614 = vsel %vm147, %v2534, 0.0
    %2615 = vadd.xlane.f32.xlu0 %v2614
    %v2616 = vpop.xlane.xlu0 %2615
    %v2617 = vsel %vm147, %v2535, 0.0
    %2618 = vadd.xlane.f32.xlu0 %v2617
    %v2619 = vpop.xlane.xlu0 %2618
    %v2620 = vsel %vm147, %v2536, 0.0
    %2621 = vadd.xlane.f32.xlu0 %v2620
    %v2622 = vpop.xlane.xlu0 %2621
    %v2623 = vsel %vm147, %v2537, 0.0
    %2624 = vadd.xlane.f32.xlu0 %v2623
    %v2625 = vpop.xlane.xlu0 %2624
    %v2626 = vsel %vm147, %v2538, 0.0
    %2627 = vadd.xlane.f32.xlu0 %v2626
    %v2628 = vpop.xlane.xlu0 %2627
    %v2629 = vsel %vm147, %v2539, 0.0
    %2630 = vadd.xlane.f32.xlu0 %v2629
    %v2631 = vpop.xlane.xlu0 %2630
    %v2632 = vsel %vm147, %v2540, 0.0
    %2633 = vadd.xlane.f32.xlu0 %v2632
    %v2634 = vpop.xlane.xlu0 %2633
    %v2635 = vsel %vm147, %v2541, 0.0
    %2636 = vadd.xlane.f32.xlu0 %v2635
    %v2637 = vpop.xlane.xlu0 %2636
    %v2638 = vstv %s110
    %v2639 = vadd.f32 %v2544, %v2638
    %v2640 = vadd.f32 %v2547, %v2638
    %v2641 = vadd.f32 %v2550, %v2638
    %v2642 = vadd.f32 %v2553, %v2638
    %v2643 = vadd.f32 %v2556, %v2638
    %v2644 = vadd.f32 %v2559, %v2638
    %v2645 = vadd.f32 %v2562, %v2638
    %v2646 = vadd.f32 %v2565, %v2638
    %v2647 = vadd.f32 %v2568, %v2638
    %v2648 = vadd.f32 %v2571, %v2638
    %v2649 = vadd.f32 %v2574, %v2638
    %v2650 = vadd.f32 %v2577, %v2638
    %v2651 = vadd.f32 %v2580, %v2638
    %v2652 = vadd.f32 %v2583, %v2638
    %v2653 = vadd.f32 %v2586, %v2638
    %v2654 = vadd.f32 %v2589, %v2638
    %v2655 = vadd.f32 %v2592, %v2638
    %v2656 = vadd.f32 %v2595, %v2638
    %v2657 = vadd.f32 %v2598, %v2638
    %v2658 = vadd.f32 %v2601, %v2638
    %v2659 = vadd.f32 %v2604, %v2638
    %v2660 = vadd.f32 %v2607, %v2638
    %v2661 = vadd.f32 %v2610, %v2638
    %v2662 = vadd.f32 %v2613, %v2638
    %v2663 = vadd.f32 %v2616, %v2638
    %v2664 = vadd.f32 %v2619, %v2638
    %v2665 = vadd.f32 %v2622, %v2638
    %v2666 = vadd.f32 %v2625, %v2638
    %v2667 = vadd.f32 %v2628, %v2638
    %v2668 = vadd.f32 %v2631, %v2638
    %v2669 = vadd.f32 %v2634, %v2638
    %v2670 = vadd.f32 %v2637, %v2638
    %v2671 = vsub.f32 1.0, %v103
    %v2673 = vlaneseq
    %v2674 = vshrl.u32 %v2673, 7
    %v2675 = vsub.s32 0, %v2674
    %v2676 = vrot.slane %v103, %v2675
    %2678 = vbcast.lane.b32.xlu0 %v2676, 256
    %v2679 = vpop.permute.xlu0 %2678
    %s2681 = sor.u32 256, 8
    %2682 = vbcast.lane.b32.xlu0 %v2676, %s2681
    %v2683 = vpop.permute.xlu0 %2682
    %s2685 = sor.u32 256, 16
    %2686 = vbcast.lane.b32.xlu0 %v2676, %s2685
    %v2687 = vpop.permute.xlu0 %2686
    %s2689 = sor.u32 256, 24
    %2690 = vbcast.lane.b32.xlu0 %v2676, %s2689
    %v2691 = vpop.permute.xlu0 %2690
    %s2693 = sor.u32 256, 32
    %2694 = vbcast.lane.b32.xlu0 %v2676, %s2693
    %v2695 = vpop.permute.xlu0 %2694
    %s2697 = sor.u32 256, 40
    %2698 = vbcast.lane.b32.xlu0 %v2676, %s2697
    %v2699 = vpop.permute.xlu0 %2698
    %s2701 = sor.u32 256, 48
    %2702 = vbcast.lane.b32.xlu0 %v2676, %s2701
    %v2703 = vpop.permute.xlu0 %2702
    %s2705 = sor.u32 256, 56
    %2706 = vbcast.lane.b32.xlu0 %v2676, %s2705
    %v2707 = vpop.permute.xlu0 %2706
    %s2709 = sor.u32 256, 64
    %2710 = vbcast.lane.b32.xlu0 %v2676, %s2709
    %v2711 = vpop.permute.xlu0 %2710
    %s2713 = sor.u32 256, 72
    %2714 = vbcast.lane.b32.xlu0 %v2676, %s2713
    %v2715 = vpop.permute.xlu0 %2714
    %s2717 = sor.u32 256, 80
    %2718 = vbcast.lane.b32.xlu0 %v2676, %s2717
    %v2719 = vpop.permute.xlu0 %2718
    %s2721 = sor.u32 256, 88
    %2722 = vbcast.lane.b32.xlu0 %v2676, %s2721
    %v2723 = vpop.permute.xlu0 %2722
    %s2725 = sor.u32 256, 96
    %2726 = vbcast.lane.b32.xlu0 %v2676, %s2725
    %v2727 = vpop.permute.xlu0 %2726
    %s2729 = sor.u32 256, 104
    %2730 = vbcast.lane.b32.xlu0 %v2676, %s2729
    %v2731 = vpop.permute.xlu0 %2730
    %s2733 = sor.u32 256, 112
    %2734 = vbcast.lane.b32.xlu0 %v2676, %s2733
    %v2735 = vpop.permute.xlu0 %2734
    %s2737 = sor.u32 256, 120
    %2738 = vbcast.lane.b32.xlu0 %v2676, %s2737
    %v2739 = vpop.permute.xlu0 %2738
    %v2740 = vlaneseq
    %v2741 = vshrl.u32 %v2740, 7
    %v2742 = vsub.s32 1, %v2741
    %v2743 = vrot.slane %v103, %v2742
    %2745 = vbcast.lane.b32.xlu0 %v2743, 256
    %v2746 = vpop.permute.xlu0 %2745
    %s2748 = sor.u32 256, 8
    %2749 = vbcast.lane.b32.xlu0 %v2743, %s2748
    %v2750 = vpop.permute.xlu0 %2749
    %s2752 = sor.u32 256, 16
    %2753 = vbcast.lane.b32.xlu0 %v2743, %s2752
    %v2754 = vpop.permute.xlu0 %2753
    %s2756 = sor.u32 256, 24
    %2757 = vbcast.lane.b32.xlu0 %v2743, %s2756
    %v2758 = vpop.permute.xlu0 %2757
    %s2760 = sor.u32 256, 32
    %2761 = vbcast.lane.b32.xlu0 %v2743, %s2760
    %v2762 = vpop.permute.xlu0 %2761
    %s2764 = sor.u32 256, 40
    %2765 = vbcast.lane.b32.xlu0 %v2743, %s2764
    %v2766 = vpop.permute.xlu0 %2765
    %s2768 = sor.u32 256, 48
    %2769 = vbcast.lane.b32.xlu0 %v2743, %s2768
    %v2770 = vpop.permute.xlu0 %2769
    %s2772 = sor.u32 256, 56
    %2773 = vbcast.lane.b32.xlu0 %v2743, %s2772
    %v2774 = vpop.permute.xlu0 %2773
    %s2776 = sor.u32 256, 64
    %2777 = vbcast.lane.b32.xlu0 %v2743, %s2776
    %v2778 = vpop.permute.xlu0 %2777
    %s2780 = sor.u32 256, 72
    %2781 = vbcast.lane.b32.xlu0 %v2743, %s2780
    %v2782 = vpop.permute.xlu0 %2781
    %s2784 = sor.u32 256, 80
    %2785 = vbcast.lane.b32.xlu0 %v2743, %s2784
    %v2786 = vpop.permute.xlu0 %2785
    %s2788 = sor.u32 256, 88
    %2789 = vbcast.lane.b32.xlu0 %v2743, %s2788
    %v2790 = vpop.permute.xlu0 %2789
    %s2792 = sor.u32 256, 96
    %2793 = vbcast.lane.b32.xlu0 %v2743, %s2792
    %v2794 = vpop.permute.xlu0 %2793
    %s2796 = sor.u32 256, 104
    %2797 = vbcast.lane.b32.xlu0 %v2743, %s2796
    %v2798 = vpop.permute.xlu0 %2797
    %s2800 = sor.u32 256, 112
    %2801 = vbcast.lane.b32.xlu0 %v2743, %s2800
    %v2802 = vpop.permute.xlu0 %2801
    %s2804 = sor.u32 256, 120
    %2805 = vbcast.lane.b32.xlu0 %v2743, %s2804
    %v2806 = vpop.permute.xlu0 %2805
    %v2839 = vmul.f32 %v2338, %v2679
    %v2840 = vmul.f32 %v2339, %v2683
    %v2841 = vmul.f32 %v2340, %v2687
    %v2842 = vmul.f32 %v2341, %v2691
    %v2843 = vmul.f32 %v2342, %v2695
    %v2844 = vmul.f32 %v2343, %v2699
    %v2845 = vmul.f32 %v2344, %v2703
    %v2846 = vmul.f32 %v2345, %v2707
    %v2847 = vmul.f32 %v2346, %v2711
    %v2848 = vmul.f32 %v2347, %v2715
    %v2849 = vmul.f32 %v2348, %v2719
    %v2850 = vmul.f32 %v2349, %v2723
    %v2851 = vmul.f32 %v2350, %v2727
    %v2852 = vmul.f32 %v2351, %v2731
    %v2853 = vmul.f32 %v2352, %v2735
    %v2854 = vmul.f32 %v2353, %v2739
    %v2855 = vmul.f32 %v2354, %v2746
    %v2856 = vmul.f32 %v2355, %v2750
    %v2857 = vmul.f32 %v2356, %v2754
    %v2858 = vmul.f32 %v2357, %v2758
    %v2859 = vmul.f32 %v2358, %v2762
    %v2860 = vmul.f32 %v2359, %v2766
    %v2861 = vmul.f32 %v2360, %v2770
    %v2862 = vmul.f32 %v2361, %v2774
    %v2863 = vmul.f32 %v2362, %v2778
    %v2864 = vmul.f32 %v2363, %v2782
    %v2865 = vmul.f32 %v2364, %v2786
    %v2866 = vmul.f32 %v2365, %v2790
    %v2867 = vmul.f32 %v2366, %v2794
    %v2868 = vmul.f32 %v2367, %v2798
    %v2869 = vmul.f32 %v2368, %v2802
    %v2870 = vmul.f32 %v2369, %v2806
    %v2871 = vmul.f32 %v2671, -10000000.0
    %v2873 = vlaneseq
    %v2874 = vshrl.u32 %v2873, 7
    %v2875 = vsub.s32 0, %v2874
    %v2876 = vrot.slane %v2871, %v2875
    %2878 = vbcast.lane.b32.xlu0 %v2876, 256
    %v2879 = vpop.permute.xlu0 %2878
    %s2881 = sor.u32 256, 8
    %2882 = vbcast.lane.b32.xlu0 %v2876, %s2881
    %v2883 = vpop.permute.xlu0 %2882
    %s2885 = sor.u32 256, 16
    %2886 = vbcast.lane.b32.xlu0 %v2876, %s2885
    %v2887 = vpop.permute.xlu0 %2886
    %s2889 = sor.u32 256, 24
    %2890 = vbcast.lane.b32.xlu0 %v2876, %s2889
    %v2891 = vpop.permute.xlu0 %2890
    %s2893 = sor.u32 256, 32
    %2894 = vbcast.lane.b32.xlu0 %v2876, %s2893
    %v2895 = vpop.permute.xlu0 %2894
    %s2897 = sor.u32 256, 40
    %2898 = vbcast.lane.b32.xlu0 %v2876, %s2897
    %v2899 = vpop.permute.xlu0 %2898
    %s2901 = sor.u32 256, 48
    %2902 = vbcast.lane.b32.xlu0 %v2876, %s2901
    %v2903 = vpop.permute.xlu0 %2902
    %s2905 = sor.u32 256, 56
    %2906 = vbcast.lane.b32.xlu0 %v2876, %s2905
    %v2907 = vpop.permute.xlu0 %2906
    %s2909 = sor.u32 256, 64
    %2910 = vbcast.lane.b32.xlu0 %v2876, %s2909
    %v2911 = vpop.permute.xlu0 %2910
    %s2913 = sor.u32 256, 72
    %2914 = vbcast.lane.b32.xlu0 %v2876, %s2913
    %v2915 = vpop.permute.xlu0 %2914
    %s2917 = sor.u32 256, 80
    %2918 = vbcast.lane.b32.xlu0 %v2876, %s2917
    %v2919 = vpop.permute.xlu0 %2918
    %s2921 = sor.u32 256, 88
    %2922 = vbcast.lane.b32.xlu0 %v2876, %s2921
    %v2923 = vpop.permute.xlu0 %2922
    %s2925 = sor.u32 256, 96
    %2926 = vbcast.lane.b32.xlu0 %v2876, %s2925
    %v2927 = vpop.permute.xlu0 %2926
    %s2929 = sor.u32 256, 104
    %2930 = vbcast.lane.b32.xlu0 %v2876, %s2929
    %v2931 = vpop.permute.xlu0 %2930
    %s2933 = sor.u32 256, 112
    %2934 = vbcast.lane.b32.xlu0 %v2876, %s2933
    %v2935 = vpop.permute.xlu0 %2934
    %s2937 = sor.u32 256, 120
    %2938 = vbcast.lane.b32.xlu0 %v2876, %s2937
    %v2939 = vpop.permute.xlu0 %2938
    %v2940 = vlaneseq
    %v2941 = vshrl.u32 %v2940, 7
    %v2942 = vsub.s32 1, %v2941
    %v2943 = vrot.slane %v2871, %v2942
    %2945 = vbcast.lane.b32.xlu0 %v2943, 256
    %v2946 = vpop.permute.xlu0 %2945
    %s2948 = sor.u32 256, 8
    %2949 = vbcast.lane.b32.xlu0 %v2943, %s2948
    %v2950 = vpop.permute.xlu0 %2949
    %s2952 = sor.u32 256, 16
    %2953 = vbcast.lane.b32.xlu0 %v2943, %s2952
    %v2954 = vpop.permute.xlu0 %2953
    %s2956 = sor.u32 256, 24
    %2957 = vbcast.lane.b32.xlu0 %v2943, %s2956
    %v2958 = vpop.permute.xlu0 %2957
    %s2960 = sor.u32 256, 32
    %2961 = vbcast.lane.b32.xlu0 %v2943, %s2960
    %v2962 = vpop.permute.xlu0 %2961
    %s2964 = sor.u32 256, 40
    %2965 = vbcast.lane.b32.xlu0 %v2943, %s2964
    %v2966 = vpop.permute.xlu0 %2965
    %s2968 = sor.u32 256, 48
    %2969 = vbcast.lane.b32.xlu0 %v2943, %s2968
    %v2970 = vpop.permute.xlu0 %2969
    %s2972 = sor.u32 256, 56
    %2973 = vbcast.lane.b32.xlu0 %v2943, %s2972
    %v2974 = vpop.permute.xlu0 %2973
    %s2976 = sor.u32 256, 64
    %2977 = vbcast.lane.b32.xlu0 %v2943, %s2976
    %v2978 = vpop.permute.xlu0 %2977
    %s2980 = sor.u32 256, 72
    %2981 = vbcast.lane.b32.xlu0 %v2943, %s2980
    %v2982 = vpop.permute.xlu0 %2981
    %s2984 = sor.u32 256, 80
    %2985 = vbcast.lane.b32.xlu0 %v2943, %s2984
    %v2986 = vpop.permute.xlu0 %2985
    %s2988 = sor.u32 256, 88
    %2989 = vbcast.lane.b32.xlu0 %v2943, %s2988
    %v2990 = vpop.permute.xlu0 %2989
    %s2992 = sor.u32 256, 96
    %2993 = vbcast.lane.b32.xlu0 %v2943, %s2992
    %v2994 = vpop.permute.xlu0 %2993
    %s2996 = sor.u32 256, 104
    %2997 = vbcast.lane.b32.xlu0 %v2943, %s2996
    %v2998 = vpop.permute.xlu0 %2997
    %s3000 = sor.u32 256, 112
    %3001 = vbcast.lane.b32.xlu0 %v2943, %s3000
    %v3002 = vpop.permute.xlu0 %3001
    %s3004 = sor.u32 256, 120
    %3005 = vbcast.lane.b32.xlu0 %v2943, %s3004
    %v3006 = vpop.permute.xlu0 %3005
    %v3039 = vadd.f32 %v2839, %v2879
    %v3040 = vadd.f32 %v2840, %v2883
    %v3041 = vadd.f32 %v2841, %v2887
    %v3042 = vadd.f32 %v2842, %v2891
    %v3043 = vadd.f32 %v2843, %v2895
    %v3044 = vadd.f32 %v2844, %v2899
    %v3045 = vadd.f32 %v2845, %v2903
    %v3046 = vadd.f32 %v2846, %v2907
    %v3047 = vadd.f32 %v2847, %v2911
    %v3048 = vadd.f32 %v2848, %v2915
    %v3049 = vadd.f32 %v2849, %v2919
    %v3050 = vadd.f32 %v2850, %v2923
    %v3051 = vadd.f32 %v2851, %v2927
    %v3052 = vadd.f32 %v2852, %v2931
    %v3053 = vadd.f32 %v2853, %v2935
    %v3054 = vadd.f32 %v2854, %v2939
    %v3055 = vadd.f32 %v2855, %v2946
    %v3056 = vadd.f32 %v2856, %v2950
    %v3057 = vadd.f32 %v2857, %v2954
    %v3058 = vadd.f32 %v2858, %v2958
    %v3059 = vadd.f32 %v2859, %v2962
    %v3060 = vadd.f32 %v2860, %v2966
    %v3061 = vadd.f32 %v2861, %v2970
    %v3062 = vadd.f32 %v2862, %v2974
    %v3063 = vadd.f32 %v2863, %v2978
    %v3064 = vadd.f32 %v2864, %v2982
    %v3065 = vadd.f32 %v2865, %v2986
    %v3066 = vadd.f32 %v2866, %v2990
    %v3067 = vadd.f32 %v2867, %v2994
    %v3068 = vadd.f32 %v2868, %v2998
    %v3069 = vadd.f32 %v2869, %v3002
    %v3070 = vadd.f32 %v2870, %v3006
    %v3071 = vmul.f32 %v2639, %v2679
    %v3072 = vmul.f32 %v2640, %v2683
    %v3073 = vmul.f32 %v2641, %v2687
    %v3074 = vmul.f32 %v2642, %v2691
    %v3075 = vmul.f32 %v2643, %v2695
    %v3076 = vmul.f32 %v2644, %v2699
    %v3077 = vmul.f32 %v2645, %v2703
    %v3078 = vmul.f32 %v2646, %v2707
    %v3079 = vmul.f32 %v2647, %v2711
    %v3080 = vmul.f32 %v2648, %v2715
    %v3081 = vmul.f32 %v2649, %v2719
    %v3082 = vmul.f32 %v2650, %v2723
    %v3083 = vmul.f32 %v2651, %v2727
    %v3084 = vmul.f32 %v2652, %v2731
    %v3085 = vmul.f32 %v2653, %v2735
    %v3086 = vmul.f32 %v2654, %v2739
    %v3087 = vmul.f32 %v2655, %v2746
    %v3088 = vmul.f32 %v2656, %v2750
    %v3089 = vmul.f32 %v2657, %v2754
    %v3090 = vmul.f32 %v2658, %v2758
    %v3091 = vmul.f32 %v2659, %v2762
    %v3092 = vmul.f32 %v2660, %v2766
    %v3093 = vmul.f32 %v2661, %v2770
    %v3094 = vmul.f32 %v2662, %v2774
    %v3095 = vmul.f32 %v2663, %v2778
    %v3096 = vmul.f32 %v2664, %v2782
    %v3097 = vmul.f32 %v2665, %v2786
    %v3098 = vmul.f32 %v2666, %v2790
    %v3099 = vmul.f32 %v2667, %v2794
    %v3100 = vmul.f32 %v2668, %v2798
    %v3101 = vmul.f32 %v2669, %v2802
    %v3102 = vmul.f32 %v2670, %v2806
    %v3103 = vadd.f32 %v3071, %v2879
    %v3104 = vadd.f32 %v3072, %v2883
    %v3105 = vadd.f32 %v3073, %v2887
    %v3106 = vadd.f32 %v3074, %v2891
    %v3107 = vadd.f32 %v3075, %v2895
    %v3108 = vadd.f32 %v3076, %v2899
    %v3109 = vadd.f32 %v3077, %v2903
    %v3110 = vadd.f32 %v3078, %v2907
    %v3111 = vadd.f32 %v3079, %v2911
    %v3112 = vadd.f32 %v3080, %v2915
    %v3113 = vadd.f32 %v3081, %v2919
    %v3114 = vadd.f32 %v3082, %v2923
    %v3115 = vadd.f32 %v3083, %v2927
    %v3116 = vadd.f32 %v3084, %v2931
    %v3117 = vadd.f32 %v3085, %v2935
    %v3118 = vadd.f32 %v3086, %v2939
    %v3119 = vadd.f32 %v3087, %v2946
    %v3120 = vadd.f32 %v3088, %v2950
    %v3121 = vadd.f32 %v3089, %v2954
    %v3122 = vadd.f32 %v3090, %v2958
    %v3123 = vadd.f32 %v3091, %v2962
    %v3124 = vadd.f32 %v3092, %v2966
    %v3125 = vadd.f32 %v3093, %v2970
    %v3126 = vadd.f32 %v3094, %v2974
    %v3127 = vadd.f32 %v3095, %v2978
    %v3128 = vadd.f32 %v3096, %v2982
    %v3129 = vadd.f32 %v3097, %v2986
    %v3130 = vadd.f32 %v3098, %v2990
    %v3131 = vadd.f32 %v3099, %v2994
    %v3132 = vadd.f32 %v3100, %v2998
    %v3133 = vadd.f32 %v3101, %v3002
    %v3134 = vadd.f32 %v3102, %v3006
    %v3135 = vmul.f32 %v2671, -103.616325
    %3168 = vset.pattern.permute.xlu0 0
    %3169 = vperm.xlu0 %3168, %v3039
    %v3170 = vpop.permute.xlu0 %3169
    %3171 = vset.pattern.permute.xlu0 0
    %3172 = vperm.xlu0 %3171, %v3040
    %v3173 = vpop.permute.xlu0 %3172
    %3174 = vset.pattern.permute.xlu0 0
    %3175 = vperm.xlu0 %3174, %v3041
    %v3176 = vpop.permute.xlu0 %3175
    %3177 = vset.pattern.permute.xlu0 0
    %3178 = vperm.xlu0 %3177, %v3042
    %v3179 = vpop.permute.xlu0 %3178
    %3180 = vset.pattern.permute.xlu0 0
    %3181 = vperm.xlu0 %3180, %v3043
    %v3182 = vpop.permute.xlu0 %3181
    %3183 = vset.pattern.permute.xlu0 0
    %3184 = vperm.xlu0 %3183, %v3044
    %v3185 = vpop.permute.xlu0 %3184
    %3186 = vset.pattern.permute.xlu0 0
    %3187 = vperm.xlu0 %3186, %v3045
    %v3188 = vpop.permute.xlu0 %3187
    %3189 = vset.pattern.permute.xlu0 0
    %3190 = vperm.xlu0 %3189, %v3046
    %v3191 = vpop.permute.xlu0 %3190
    %3192 = vset.pattern.permute.xlu0 0
    %3193 = vperm.xlu0 %3192, %v3047
    %v3194 = vpop.permute.xlu0 %3193
    %3195 = vset.pattern.permute.xlu0 0
    %3196 = vperm.xlu0 %3195, %v3048
    %v3197 = vpop.permute.xlu0 %3196
    %3198 = vset.pattern.permute.xlu0 0
    %3199 = vperm.xlu0 %3198, %v3049
    %v3200 = vpop.permute.xlu0 %3199
    %3201 = vset.pattern.permute.xlu0 0
    %3202 = vperm.xlu0 %3201, %v3050
    %v3203 = vpop.permute.xlu0 %3202
    %3204 = vset.pattern.permute.xlu0 0
    %3205 = vperm.xlu0 %3204, %v3051
    %v3206 = vpop.permute.xlu0 %3205
    %3207 = vset.pattern.permute.xlu0 0
    %3208 = vperm.xlu0 %3207, %v3052
    %v3209 = vpop.permute.xlu0 %3208
    %3210 = vset.pattern.permute.xlu0 0
    %3211 = vperm.xlu0 %3210, %v3053
    %v3212 = vpop.permute.xlu0 %3211
    %3213 = vset.pattern.permute.xlu0 0
    %3214 = vperm.xlu0 %3213, %v3054
    %v3215 = vpop.permute.xlu0 %3214
    %3216 = vset.pattern.permute.xlu0 0
    %3217 = vperm.xlu0 %3216, %v3055
    %v3218 = vpop.permute.xlu0 %3217
    %3219 = vset.pattern.permute.xlu0 0
    %3220 = vperm.xlu0 %3219, %v3056
    %v3221 = vpop.permute.xlu0 %3220
    %3222 = vset.pattern.permute.xlu0 0
    %3223 = vperm.xlu0 %3222, %v3057
    %v3224 = vpop.permute.xlu0 %3223
    %3225 = vset.pattern.permute.xlu0 0
    %3226 = vperm.xlu0 %3225, %v3058
    %v3227 = vpop.permute.xlu0 %3226
    %3228 = vset.pattern.permute.xlu0 0
    %3229 = vperm.xlu0 %3228, %v3059
    %v3230 = vpop.permute.xlu0 %3229
    %3231 = vset.pattern.permute.xlu0 0
    %3232 = vperm.xlu0 %3231, %v3060
    %v3233 = vpop.permute.xlu0 %3232
    %3234 = vset.pattern.permute.xlu0 0
    %3235 = vperm.xlu0 %3234, %v3061
    %v3236 = vpop.permute.xlu0 %3235
    %3237 = vset.pattern.permute.xlu0 0
    %3238 = vperm.xlu0 %3237, %v3062
    %v3239 = vpop.permute.xlu0 %3238
    %3240 = vset.pattern.permute.xlu0 0
    %3241 = vperm.xlu0 %3240, %v3063
    %v3242 = vpop.permute.xlu0 %3241
    %3243 = vset.pattern.permute.xlu0 0
    %3244 = vperm.xlu0 %3243, %v3064
    %v3245 = vpop.permute.xlu0 %3244
    %3246 = vset.pattern.permute.xlu0 0
    %3247 = vperm.xlu0 %3246, %v3065
    %v3248 = vpop.permute.xlu0 %3247
    %3249 = vset.pattern.permute.xlu0 0
    %3250 = vperm.xlu0 %3249, %v3066
    %v3251 = vpop.permute.xlu0 %3250
    %3252 = vset.pattern.permute.xlu0 0
    %3253 = vperm.xlu0 %3252, %v3067
    %v3254 = vpop.permute.xlu0 %3253
    %3255 = vset.pattern.permute.xlu0 0
    %3256 = vperm.xlu0 %3255, %v3068
    %v3257 = vpop.permute.xlu0 %3256
    %3258 = vset.pattern.permute.xlu0 0
    %3259 = vperm.xlu0 %3258, %v3069
    %v3260 = vpop.permute.xlu0 %3259
    %3261 = vset.pattern.permute.xlu0 0
    %3262 = vperm.xlu0 %3261, %v3070
    %v3263 = vpop.permute.xlu0 %3262
    %v3264 = vlaneseq
    %v3265 = vshrl.u32 %v3264, 7
    %v3266 = vsub.s32 %v927, %v3265
    %v3267 = vrot.slane %v3170, %v3266
    %v3268 = vlaneseq
    %v3269 = vshrl.u32 %v3268, 7
    %v3270 = vsub.s32 %v932, %v3269
    %v3271 = vrot.slane %v3173, %v3270
    %v3272 = vsel %vm937, %v3271, %v3267
    %v3273 = vlaneseq
    %v3274 = vshrl.u32 %v3273, 7
    %v3275 = vsub.s32 %v939, %v3274
    %v3276 = vrot.slane %v3176, %v3275
    %v3277 = vsel %vm944, %v3276, %v3272
    %v3278 = vlaneseq
    %v3279 = vshrl.u32 %v3278, 7
    %v3280 = vsub.s32 %v946, %v3279
    %v3281 = vrot.slane %v3179, %v3280
    %v3282 = vsel %vm951, %v3281, %v3277
    %v3283 = vlaneseq
    %v3284 = vshrl.u32 %v3283, 7
    %v3285 = vsub.s32 %v953, %v3284
    %v3286 = vrot.slane %v3182, %v3285
    %v3287 = vsel %vm958, %v3286, %v3282
    %v3288 = vlaneseq
    %v3289 = vshrl.u32 %v3288, 7
    %v3290 = vsub.s32 %v960, %v3289
    %v3291 = vrot.slane %v3185, %v3290
    %v3292 = vsel %vm965, %v3291, %v3287
    %v3293 = vlaneseq
    %v3294 = vshrl.u32 %v3293, 7
    %v3295 = vsub.s32 %v967, %v3294
    %v3296 = vrot.slane %v3188, %v3295
    %v3297 = vsel %vm972, %v3296, %v3292
    %v3298 = vlaneseq
    %v3299 = vshrl.u32 %v3298, 7
    %v3300 = vsub.s32 %v974, %v3299
    %v3301 = vrot.slane %v3191, %v3300
    %v3302 = vsel %vm979, %v3301, %v3297
    %v3303 = vlaneseq
    %v3304 = vshrl.u32 %v3303, 7
    %v3305 = vsub.s32 %v981, %v3304
    %v3306 = vrot.slane %v3194, %v3305
    %v3307 = vsel %vm986, %v3306, %v3302
    %v3308 = vlaneseq
    %v3309 = vshrl.u32 %v3308, 7
    %v3310 = vsub.s32 %v988, %v3309
    %v3311 = vrot.slane %v3197, %v3310
    %v3312 = vsel %vm993, %v3311, %v3307
    %v3313 = vlaneseq
    %v3314 = vshrl.u32 %v3313, 7
    %v3315 = vsub.s32 %v995, %v3314
    %v3316 = vrot.slane %v3200, %v3315
    %v3317 = vsel %vm1000, %v3316, %v3312
    %v3318 = vlaneseq
    %v3319 = vshrl.u32 %v3318, 7
    %v3320 = vsub.s32 %v1002, %v3319
    %v3321 = vrot.slane %v3203, %v3320
    %v3322 = vsel %vm1007, %v3321, %v3317
    %v3323 = vlaneseq
    %v3324 = vshrl.u32 %v3323, 7
    %v3325 = vsub.s32 %v1009, %v3324
    %v3326 = vrot.slane %v3206, %v3325
    %v3327 = vsel %vm1014, %v3326, %v3322
    %v3328 = vlaneseq
    %v3329 = vshrl.u32 %v3328, 7
    %v3330 = vsub.s32 %v1016, %v3329
    %v3331 = vrot.slane %v3209, %v3330
    %v3332 = vsel %vm1021, %v3331, %v3327
    %v3333 = vlaneseq
    %v3334 = vshrl.u32 %v3333, 7
    %v3335 = vsub.s32 %v1023, %v3334
    %v3336 = vrot.slane %v3212, %v3335
    %v3337 = vsel %vm1028, %v3336, %v3332
    %v3338 = vlaneseq
    %v3339 = vshrl.u32 %v3338, 7
    %v3340 = vsub.s32 %v1030, %v3339
    %v3341 = vrot.slane %v3215, %v3340
    %v3342 = vsel %vm1035, %v3341, %v3337
    %v3343 = vlaneseq
    %v3344 = vshrl.u32 %v3343, 7
    %v3345 = vsub.s32 %v927, %v3344
    %v3346 = vrot.slane %v3218, %v3345
    %v3347 = vlaneseq
    %v3348 = vshrl.u32 %v3347, 7
    %v3349 = vsub.s32 %v932, %v3348
    %v3350 = vrot.slane %v3221, %v3349
    %v3351 = vsel %vm937, %v3350, %v3346
    %v3352 = vlaneseq
    %v3353 = vshrl.u32 %v3352, 7
    %v3354 = vsub.s32 %v939, %v3353
    %v3355 = vrot.slane %v3224, %v3354
    %v3356 = vsel %vm944, %v3355, %v3351
    %v3357 = vlaneseq
    %v3358 = vshrl.u32 %v3357, 7
    %v3359 = vsub.s32 %v946, %v3358
    %v3360 = vrot.slane %v3227, %v3359
    %v3361 = vsel %vm951, %v3360, %v3356
    %v3362 = vlaneseq
    %v3363 = vshrl.u32 %v3362, 7
    %v3364 = vsub.s32 %v953, %v3363
    %v3365 = vrot.slane %v3230, %v3364
    %v3366 = vsel %vm958, %v3365, %v3361
    %v3367 = vlaneseq
    %v3368 = vshrl.u32 %v3367, 7
    %v3369 = vsub.s32 %v960, %v3368
    %v3370 = vrot.slane %v3233, %v3369
    %v3371 = vsel %vm965, %v3370, %v3366
    %v3372 = vlaneseq
    %v3373 = vshrl.u32 %v3372, 7
    %v3374 = vsub.s32 %v967, %v3373
    %v3375 = vrot.slane %v3236, %v3374
    %v3376 = vsel %vm972, %v3375, %v3371
    %v3377 = vlaneseq
    %v3378 = vshrl.u32 %v3377, 7
    %v3379 = vsub.s32 %v974, %v3378
    %v3380 = vrot.slane %v3239, %v3379
    %v3381 = vsel %vm979, %v3380, %v3376
    %v3382 = vlaneseq
    %v3383 = vshrl.u32 %v3382, 7
    %v3384 = vsub.s32 %v981, %v3383
    %v3385 = vrot.slane %v3242, %v3384
    %v3386 = vsel %vm986, %v3385, %v3381
    %v3387 = vlaneseq
    %v3388 = vshrl.u32 %v3387, 7
    %v3389 = vsub.s32 %v988, %v3388
    %v3390 = vrot.slane %v3245, %v3389
    %v3391 = vsel %vm993, %v3390, %v3386
    %v3392 = vlaneseq
    %v3393 = vshrl.u32 %v3392, 7
    %v3394 = vsub.s32 %v995, %v3393
    %v3395 = vrot.slane %v3248, %v3394
    %v3396 = vsel %vm1000, %v3395, %v3391
    %v3397 = vlaneseq
    %v3398 = vshrl.u32 %v3397, 7
    %v3399 = vsub.s32 %v1002, %v3398
    %v3400 = vrot.slane %v3251, %v3399
    %v3401 = vsel %vm1007, %v3400, %v3396
    %v3402 = vlaneseq
    %v3403 = vshrl.u32 %v3402, 7
    %v3404 = vsub.s32 %v1009, %v3403
    %v3405 = vrot.slane %v3254, %v3404
    %v3406 = vsel %vm1014, %v3405, %v3401
    %v3407 = vlaneseq
    %v3408 = vshrl.u32 %v3407, 7
    %v3409 = vsub.s32 %v1016, %v3408
    %v3410 = vrot.slane %v3257, %v3409
    %v3411 = vsel %vm1021, %v3410, %v3406
    %v3412 = vlaneseq
    %v3413 = vshrl.u32 %v3412, 7
    %v3414 = vsub.s32 %v1023, %v3413
    %v3415 = vrot.slane %v3260, %v3414
    %v3416 = vsel %vm1028, %v3415, %v3411
    %v3417 = vlaneseq
    %v3418 = vshrl.u32 %v3417, 7
    %v3419 = vsub.s32 %v1030, %v3418
    %v3420 = vrot.slane %v3263, %v3419
    %v3421 = vsel %vm1035, %v3420, %v3416
    %v3422 = vsel %vm1116, %v3421, %v3342
    %3424 = vst [vmem:[%s7] sm:$0x3] %v3422
    %3457 = vset.pattern.permute.xlu0 0
    %3458 = vperm.xlu0 %3457, %v3103
    %v3459 = vpop.permute.xlu0 %3458
    %3460 = vset.pattern.permute.xlu0 0
    %3461 = vperm.xlu0 %3460, %v3104
    %v3462 = vpop.permute.xlu0 %3461
    %3463 = vset.pattern.permute.xlu0 0
    %3464 = vperm.xlu0 %3463, %v3105
    %v3465 = vpop.permute.xlu0 %3464
    %3466 = vset.pattern.permute.xlu0 0
    %3467 = vperm.xlu0 %3466, %v3106
    %v3468 = vpop.permute.xlu0 %3467
    %3469 = vset.pattern.permute.xlu0 0
    %3470 = vperm.xlu0 %3469, %v3107
    %v3471 = vpop.permute.xlu0 %3470
    %3472 = vset.pattern.permute.xlu0 0
    %3473 = vperm.xlu0 %3472, %v3108
    %v3474 = vpop.permute.xlu0 %3473
    %3475 = vset.pattern.permute.xlu0 0
    %3476 = vperm.xlu0 %3475, %v3109
    %v3477 = vpop.permute.xlu0 %3476
    %3478 = vset.pattern.permute.xlu0 0
    %3479 = vperm.xlu0 %3478, %v3110
    %v3480 = vpop.permute.xlu0 %3479
    %3481 = vset.pattern.permute.xlu0 0
    %3482 = vperm.xlu0 %3481, %v3111
    %v3483 = vpop.permute.xlu0 %3482
    %3484 = vset.pattern.permute.xlu0 0
    %3485 = vperm.xlu0 %3484, %v3112
    %v3486 = vpop.permute.xlu0 %3485
    %3487 = vset.pattern.permute.xlu0 0
    %3488 = vperm.xlu0 %3487, %v3113
    %v3489 = vpop.permute.xlu0 %3488
    %3490 = vset.pattern.permute.xlu0 0
    %3491 = vperm.xlu0 %3490, %v3114
    %v3492 = vpop.permute.xlu0 %3491
    %3493 = vset.pattern.permute.xlu0 0
    %3494 = vperm.xlu0 %3493, %v3115
    %v3495 = vpop.permute.xlu0 %3494
    %3496 = vset.pattern.permute.xlu0 0
    %3497 = vperm.xlu0 %3496, %v3116
    %v3498 = vpop.permute.xlu0 %3497
    %3499 = vset.pattern.permute.xlu0 0
    %3500 = vperm.xlu0 %3499, %v3117
    %v3501 = vpop.permute.xlu0 %3500
    %3502 = vset.pattern.permute.xlu0 0
    %3503 = vperm.xlu0 %3502, %v3118
    %v3504 = vpop.permute.xlu0 %3503
    %3505 = vset.pattern.permute.xlu0 0
    %3506 = vperm.xlu0 %3505, %v3119
    %v3507 = vpop.permute.xlu0 %3506
    %3508 = vset.pattern.permute.xlu0 0
    %3509 = vperm.xlu0 %3508, %v3120
    %v3510 = vpop.permute.xlu0 %3509
    %3511 = vset.pattern.permute.xlu0 0
    %3512 = vperm.xlu0 %3511, %v3121
    %v3513 = vpop.permute.xlu0 %3512
    %3514 = vset.pattern.permute.xlu0 0
    %3515 = vperm.xlu0 %3514, %v3122
    %v3516 = vpop.permute.xlu0 %3515
    %3517 = vset.pattern.permute.xlu0 0
    %3518 = vperm.xlu0 %3517, %v3123
    %v3519 = vpop.permute.xlu0 %3518
    %3520 = vset.pattern.permute.xlu0 0
    %3521 = vperm.xlu0 %3520, %v3124
    %v3522 = vpop.permute.xlu0 %3521
    %3523 = vset.pattern.permute.xlu0 0
    %3524 = vperm.xlu0 %3523, %v3125
    %v3525 = vpop.permute.xlu0 %3524
    %3526 = vset.pattern.permute.xlu0 0
    %3527 = vperm.xlu0 %3526, %v3126
    %v3528 = vpop.permute.xlu0 %3527
    %3529 = vset.pattern.permute.xlu0 0
    %3530 = vperm.xlu0 %3529, %v3127
    %v3531 = vpop.permute.xlu0 %3530
    %3532 = vset.pattern.permute.xlu0 0
    %3533 = vperm.xlu0 %3532, %v3128
    %v3534 = vpop.permute.xlu0 %3533
    %3535 = vset.pattern.permute.xlu0 0
    %3536 = vperm.xlu0 %3535, %v3129
    %v3537 = vpop.permute.xlu0 %3536
    %3538 = vset.pattern.permute.xlu0 0
    %3539 = vperm.xlu0 %3538, %v3130
    %v3540 = vpop.permute.xlu0 %3539
    %3541 = vset.pattern.permute.xlu0 0
    %3542 = vperm.xlu0 %3541, %v3131
    %v3543 = vpop.permute.xlu0 %3542
    %3544 = vset.pattern.permute.xlu0 0
    %3545 = vperm.xlu0 %3544, %v3132
    %v3546 = vpop.permute.xlu0 %3545
    %3547 = vset.pattern.permute.xlu0 0
    %3548 = vperm.xlu0 %3547, %v3133
    %v3549 = vpop.permute.xlu0 %3548
    %3550 = vset.pattern.permute.xlu0 0
    %3551 = vperm.xlu0 %3550, %v3134
    %v3552 = vpop.permute.xlu0 %3551
    %v3553 = vlaneseq
    %v3554 = vshrl.u32 %v3553, 7
    %v3555 = vsub.s32 %v927, %v3554
    %v3556 = vrot.slane %v3459, %v3555
    %v3557 = vlaneseq
    %v3558 = vshrl.u32 %v3557, 7
    %v3559 = vsub.s32 %v932, %v3558
    %v3560 = vrot.slane %v3462, %v3559
    %v3561 = vsel %vm937, %v3560, %v3556
    %v3562 = vlaneseq
    %v3563 = vshrl.u32 %v3562, 7
    %v3564 = vsub.s32 %v939, %v3563
    %v3565 = vrot.slane %v3465, %v3564
    %v3566 = vsel %vm944, %v3565, %v3561
    %v3567 = vlaneseq
    %v3568 = vshrl.u32 %v3567, 7
    %v3569 = vsub.s32 %v946, %v3568
    %v3570 = vrot.slane %v3468, %v3569
    %v3571 = vsel %vm951, %v3570, %v3566
    %v3572 = vlaneseq
    %v3573 = vshrl.u32 %v3572, 7
    %v3574 = vsub.s32 %v953, %v3573
    %v3575 = vrot.slane %v3471, %v3574
    %v3576 = vsel %vm958, %v3575, %v3571
    %v3577 = vlaneseq
    %v3578 = vshrl.u32 %v3577, 7
    %v3579 = vsub.s32 %v960, %v3578
    %v3580 = vrot.slane %v3474, %v3579
    %v3581 = vsel %vm965, %v3580, %v3576
    %v3582 = vlaneseq
    %v3583 = vshrl.u32 %v3582, 7
    %v3584 = vsub.s32 %v967, %v3583
    %v3585 = vrot.slane %v3477, %v3584
    %v3586 = vsel %vm972, %v3585, %v3581
    %v3587 = vlaneseq
    %v3588 = vshrl.u32 %v3587, 7
    %v3589 = vsub.s32 %v974, %v3588
    %v3590 = vrot.slane %v3480, %v3589
    %v3591 = vsel %vm979, %v3590, %v3586
    %v3592 = vlaneseq
    %v3593 = vshrl.u32 %v3592, 7
    %v3594 = vsub.s32 %v981, %v3593
    %v3595 = vrot.slane %v3483, %v3594
    %v3596 = vsel %vm986, %v3595, %v3591
    %v3597 = vlaneseq
    %v3598 = vshrl.u32 %v3597, 7
    %v3599 = vsub.s32 %v988, %v3598
    %v3600 = vrot.slane %v3486, %v3599
    %v3601 = vsel %vm993, %v3600, %v3596
    %v3602 = vlaneseq
    %v3603 = vshrl.u32 %v3602, 7
    %v3604 = vsub.s32 %v995, %v3603
    %v3605 = vrot.slane %v3489, %v3604
    %v3606 = vsel %vm1000, %v3605, %v3601
    %v3607 = vlaneseq
    %v3608 = vshrl.u32 %v3607, 7
    %v3609 = vsub.s32 %v1002, %v3608
    %v3610 = vrot.slane %v3492, %v3609
    %v3611 = vsel %vm1007, %v3610, %v3606
    %v3612 = vlaneseq
    %v3613 = vshrl.u32 %v3612, 7
    %v3614 = vsub.s32 %v1009, %v3613
    %v3615 = vrot.slane %v3495, %v3614
    %v3616 = vsel %vm1014, %v3615, %v3611
    %v3617 = vlaneseq
    %v3618 = vshrl.u32 %v3617, 7
    %v3619 = vsub.s32 %v1016, %v3618
    %v3620 = vrot.slane %v3498, %v3619
    %v3621 = vsel %vm1021, %v3620, %v3616
    %v3622 = vlaneseq
    %v3623 = vshrl.u32 %v3622, 7
    %v3624 = vsub.s32 %v1023, %v3623
    %v3625 = vrot.slane %v3501, %v3624
    %v3626 = vsel %vm1028, %v3625, %v3621
    %v3627 = vlaneseq
    %v3628 = vshrl.u32 %v3627, 7
    %v3629 = vsub.s32 %v1030, %v3628
    %v3630 = vrot.slane %v3504, %v3629
    %v3631 = vsel %vm1035, %v3630, %v3626
    %v3632 = vlaneseq
    %v3633 = vshrl.u32 %v3632, 7
    %v3634 = vsub.s32 %v927, %v3633
    %v3635 = vrot.slane %v3507, %v3634
    %v3636 = vlaneseq
    %v3637 = vshrl.u32 %v3636, 7
    %v3638 = vsub.s32 %v932, %v3637
    %v3639 = vrot.slane %v3510, %v3638
    %v3640 = vsel %vm937, %v3639, %v3635
    %v3641 = vlaneseq
    %v3642 = vshrl.u32 %v3641, 7
    %v3643 = vsub.s32 %v939, %v3642
    %v3644 = vrot.slane %v3513, %v3643
    %v3645 = vsel %vm944, %v3644, %v3640
    %v3646 = vlaneseq
    %v3647 = vshrl.u32 %v3646, 7
    %v3648 = vsub.s32 %v946, %v3647
    %v3649 = vrot.slane %v3516, %v3648
    %v3650 = vsel %vm951, %v3649, %v3645
    %v3651 = vlaneseq
    %v3652 = vshrl.u32 %v3651, 7
    %v3653 = vsub.s32 %v953, %v3652
    %v3654 = vrot.slane %v3519, %v3653
    %v3655 = vsel %vm958, %v3654, %v3650
    %v3656 = vlaneseq
    %v3657 = vshrl.u32 %v3656, 7
    %v3658 = vsub.s32 %v960, %v3657
    %v3659 = vrot.slane %v3522, %v3658
    %v3660 = vsel %vm965, %v3659, %v3655
    %v3661 = vlaneseq
    %v3662 = vshrl.u32 %v3661, 7
    %v3663 = vsub.s32 %v967, %v3662
    %v3664 = vrot.slane %v3525, %v3663
    %v3665 = vsel %vm972, %v3664, %v3660
    %v3666 = vlaneseq
    %v3667 = vshrl.u32 %v3666, 7
    %v3668 = vsub.s32 %v974, %v3667
    %v3669 = vrot.slane %v3528, %v3668
    %v3670 = vsel %vm979, %v3669, %v3665
    %v3671 = vlaneseq
    %v3672 = vshrl.u32 %v3671, 7
    %v3673 = vsub.s32 %v981, %v3672
    %v3674 = vrot.slane %v3531, %v3673
    %v3675 = vsel %vm986, %v3674, %v3670
    %v3676 = vlaneseq
    %v3677 = vshrl.u32 %v3676, 7
    %v3678 = vsub.s32 %v988, %v3677
    %v3679 = vrot.slane %v3534, %v3678
    %v3680 = vsel %vm993, %v3679, %v3675
    %v3681 = vlaneseq
    %v3682 = vshrl.u32 %v3681, 7
    %v3683 = vsub.s32 %v995, %v3682
    %v3684 = vrot.slane %v3537, %v3683
    %v3685 = vsel %vm1000, %v3684, %v3680
    %v3686 = vlaneseq
    %v3687 = vshrl.u32 %v3686, 7
    %v3688 = vsub.s32 %v1002, %v3687
    %v3689 = vrot.slane %v3540, %v3688
    %v3690 = vsel %vm1007, %v3689, %v3685
    %v3691 = vlaneseq
    %v3692 = vshrl.u32 %v3691, 7
    %v3693 = vsub.s32 %v1009, %v3692
    %v3694 = vrot.slane %v3543, %v3693
    %v3695 = vsel %vm1014, %v3694, %v3690
    %v3696 = vlaneseq
    %v3697 = vshrl.u32 %v3696, 7
    %v3698 = vsub.s32 %v1016, %v3697
    %v3699 = vrot.slane %v3546, %v3698
    %v3700 = vsel %vm1021, %v3699, %v3695
    %v3701 = vlaneseq
    %v3702 = vshrl.u32 %v3701, 7
    %v3703 = vsub.s32 %v1023, %v3702
    %v3704 = vrot.slane %v3549, %v3703
    %v3705 = vsel %vm1028, %v3704, %v3700
    %v3706 = vlaneseq
    %v3707 = vshrl.u32 %v3706, 7
    %v3708 = vsub.s32 %v1030, %v3707
    %v3709 = vrot.slane %v3552, %v3708
    %v3710 = vsel %vm1035, %v3709, %v3705
    %v3711 = vsel %vm1116, %v3710, %v3631
    %s3713 = scalar_lea.vmem %s7, 2
    %3714 = vst [vmem:[%s3713] sm:$0x3] %v3711
    %v3716 = vlaneseq
    %v3717 = vshrl.u32 %v3716, 7
    %v3718 = vsub.s32 0, %v3717
    %v3719 = vrot.slane %v3135, %v3718
    %3721 = vbcast.lane.b32.xlu0 %v3719, 256
    %v3722 = vpop.permute.xlu0 %3721
    %s3724 = sor.u32 256, 8
    %3725 = vbcast.lane.b32.xlu0 %v3719, %s3724
    %v3726 = vpop.permute.xlu0 %3725
    %s3728 = sor.u32 256, 16
    %3729 = vbcast.lane.b32.xlu0 %v3719, %s3728
    %v3730 = vpop.permute.xlu0 %3729
    %s3732 = sor.u32 256, 24
    %3733 = vbcast.lane.b32.xlu0 %v3719, %s3732
    %v3734 = vpop.permute.xlu0 %3733
    %s3736 = sor.u32 256, 32
    %3737 = vbcast.lane.b32.xlu0 %v3719, %s3736
    %v3738 = vpop.permute.xlu0 %3737
    %s3740 = sor.u32 256, 40
    %3741 = vbcast.lane.b32.xlu0 %v3719, %s3740
    %v3742 = vpop.permute.xlu0 %3741
    %s3744 = sor.u32 256, 48
    %3745 = vbcast.lane.b32.xlu0 %v3719, %s3744
    %v3746 = vpop.permute.xlu0 %3745
    %s3748 = sor.u32 256, 56
    %3749 = vbcast.lane.b32.xlu0 %v3719, %s3748
    %v3750 = vpop.permute.xlu0 %3749
    %s3752 = sor.u32 256, 64
    %3753 = vbcast.lane.b32.xlu0 %v3719, %s3752
    %v3754 = vpop.permute.xlu0 %3753
    %s3756 = sor.u32 256, 72
    %3757 = vbcast.lane.b32.xlu0 %v3719, %s3756
    %v3758 = vpop.permute.xlu0 %3757
    %s3760 = sor.u32 256, 80
    %3761 = vbcast.lane.b32.xlu0 %v3719, %s3760
    %v3762 = vpop.permute.xlu0 %3761
    %s3764 = sor.u32 256, 88
    %3765 = vbcast.lane.b32.xlu0 %v3719, %s3764
    %v3766 = vpop.permute.xlu0 %3765
    %s3768 = sor.u32 256, 96
    %3769 = vbcast.lane.b32.xlu0 %v3719, %s3768
    %v3770 = vpop.permute.xlu0 %3769
    %s3772 = sor.u32 256, 104
    %3773 = vbcast.lane.b32.xlu0 %v3719, %s3772
    %v3774 = vpop.permute.xlu0 %3773
    %s3776 = sor.u32 256, 112
    %3777 = vbcast.lane.b32.xlu0 %v3719, %s3776
    %v3778 = vpop.permute.xlu0 %3777
    %s3780 = sor.u32 256, 120
    %3781 = vbcast.lane.b32.xlu0 %v3719, %s3780
    %v3782 = vpop.permute.xlu0 %3781
    %v3783 = vlaneseq
    %v3784 = vshrl.u32 %v3783, 7
    %v3785 = vsub.s32 1, %v3784
    %v3786 = vrot.slane %v3135, %v3785
    %3788 = vbcast.lane.b32.xlu0 %v3786, 256
    %v3789 = vpop.permute.xlu0 %3788
    %s3791 = sor.u32 256, 8
    %3792 = vbcast.lane.b32.xlu0 %v3786, %s3791
    %v3793 = vpop.permute.xlu0 %3792
    %s3795 = sor.u32 256, 16
    %3796 = vbcast.lane.b32.xlu0 %v3786, %s3795
    %v3797 = vpop.permute.xlu0 %3796
    %s3799 = sor.u32 256, 24
    %3800 = vbcast.lane.b32.xlu0 %v3786, %s3799
    %v3801 = vpop.permute.xlu0 %3800
    %s3803 = sor.u32 256, 32
    %3804 = vbcast.lane.b32.xlu0 %v3786, %s3803
    %v3805 = vpop.permute.xlu0 %3804
    %s3807 = sor.u32 256, 40
    %3808 = vbcast.lane.b32.xlu0 %v3786, %s3807
    %v3809 = vpop.permute.xlu0 %3808
    %s3811 = sor.u32 256, 48
    %3812 = vbcast.lane.b32.xlu0 %v3786, %s3811
    %v3813 = vpop.permute.xlu0 %3812
    %s3815 = sor.u32 256, 56
    %3816 = vbcast.lane.b32.xlu0 %v3786, %s3815
    %v3817 = vpop.permute.xlu0 %3816
    %s3819 = sor.u32 256, 64
    %3820 = vbcast.lane.b32.xlu0 %v3786, %s3819
    %v3821 = vpop.permute.xlu0 %3820
    %s3823 = sor.u32 256, 72
    %3824 = vbcast.lane.b32.xlu0 %v3786, %s3823
    %v3825 = vpop.permute.xlu0 %3824
    %s3827 = sor.u32 256, 80
    %3828 = vbcast.lane.b32.xlu0 %v3786, %s3827
    %v3829 = vpop.permute.xlu0 %3828
    %s3831 = sor.u32 256, 88
    %3832 = vbcast.lane.b32.xlu0 %v3786, %s3831
    %v3833 = vpop.permute.xlu0 %3832
    %s3835 = sor.u32 256, 96
    %3836 = vbcast.lane.b32.xlu0 %v3786, %s3835
    %v3837 = vpop.permute.xlu0 %3836
    %s3839 = sor.u32 256, 104
    %3840 = vbcast.lane.b32.xlu0 %v3786, %s3839
    %v3841 = vpop.permute.xlu0 %3840
    %s3843 = sor.u32 256, 112
    %3844 = vbcast.lane.b32.xlu0 %v3786, %s3843
    %v3845 = vpop.permute.xlu0 %3844
    %s3847 = sor.u32 256, 120
    %3848 = vbcast.lane.b32.xlu0 %v3786, %s3847
    %v3849 = vpop.permute.xlu0 %3848
    %v3882 = vadd.f32 %v3039, %v3722
    %v3883 = vadd.f32 %v3040, %v3726
    %v3884 = vadd.f32 %v3041, %v3730
    %v3885 = vadd.f32 %v3042, %v3734
    %v3886 = vadd.f32 %v3043, %v3738
    %v3887 = vadd.f32 %v3044, %v3742
    %v3888 = vadd.f32 %v3045, %v3746
    %v3889 = vadd.f32 %v3046, %v3750
    %v3890 = vadd.f32 %v3047, %v3754
    %v3891 = vadd.f32 %v3048, %v3758
    %v3892 = vadd.f32 %v3049, %v3762
    %v3893 = vadd.f32 %v3050, %v3766
    %v3894 = vadd.f32 %v3051, %v3770
    %v3895 = vadd.f32 %v3052, %v3774
    %v3896 = vadd.f32 %v3053, %v3778
    %v3897 = vadd.f32 %v3054, %v3782
    %v3898 = vadd.f32 %v3055, %v3789
    %v3899 = vadd.f32 %v3056, %v3793
    %v3900 = vadd.f32 %v3057, %v3797
    %v3901 = vadd.f32 %v3058, %v3801
    %v3902 = vadd.f32 %v3059, %v3805
    %v3903 = vadd.f32 %v3060, %v3809
    %v3904 = vadd.f32 %v3061, %v3813
    %v3905 = vadd.f32 %v3062, %v3817
    %v3906 = vadd.f32 %v3063, %v3821
    %v3907 = vadd.f32 %v3064, %v3825
    %v3908 = vadd.f32 %v3065, %v3829
    %v3909 = vadd.f32 %v3066, %v3833
    %v3910 = vadd.f32 %v3067, %v3837
    %v3911 = vadd.f32 %v3068, %v3841
    %v3912 = vadd.f32 %v3069, %v3845
    %v3913 = vadd.f32 %v3070, %v3849
    %3946 = vset.pattern.permute.xlu0 0
    %3947 = vperm.xlu0 %3946, %v3882
    %v3948 = vpop.permute.xlu0 %3947
    %3949 = vset.pattern.permute.xlu0 0
    %3950 = vperm.xlu0 %3949, %v3883
    %v3951 = vpop.permute.xlu0 %3950
    %3952 = vset.pattern.permute.xlu0 0
    %3953 = vperm.xlu0 %3952, %v3884
    %v3954 = vpop.permute.xlu0 %3953
    %3955 = vset.pattern.permute.xlu0 0
    %3956 = vperm.xlu0 %3955, %v3885
    %v3957 = vpop.permute.xlu0 %3956
    %3958 = vset.pattern.permute.xlu0 0
    %3959 = vperm.xlu0 %3958, %v3886
    %v3960 = vpop.permute.xlu0 %3959
    %3961 = vset.pattern.permute.xlu0 0
    %3962 = vperm.xlu0 %3961, %v3887
    %v3963 = vpop.permute.xlu0 %3962
    %3964 = vset.pattern.permute.xlu0 0
    %3965 = vperm.xlu0 %3964, %v3888
    %v3966 = vpop.permute.xlu0 %3965
    %3967 = vset.pattern.permute.xlu0 0
    %3968 = vperm.xlu0 %3967, %v3889
    %v3969 = vpop.permute.xlu0 %3968
    %3970 = vset.pattern.permute.xlu0 0
    %3971 = vperm.xlu0 %3970, %v3890
    %v3972 = vpop.permute.xlu0 %3971
    %3973 = vset.pattern.permute.xlu0 0
    %3974 = vperm.xlu0 %3973, %v3891
    %v3975 = vpop.permute.xlu0 %3974
    %3976 = vset.pattern.permute.xlu0 0
    %3977 = vperm.xlu0 %3976, %v3892
    %v3978 = vpop.permute.xlu0 %3977
    %3979 = vset.pattern.permute.xlu0 0
    %3980 = vperm.xlu0 %3979, %v3893
    %v3981 = vpop.permute.xlu0 %3980
    %3982 = vset.pattern.permute.xlu0 0
    %3983 = vperm.xlu0 %3982, %v3894
    %v3984 = vpop.permute.xlu0 %3983
    %3985 = vset.pattern.permute.xlu0 0
    %3986 = vperm.xlu0 %3985, %v3895
    %v3987 = vpop.permute.xlu0 %3986
    %3988 = vset.pattern.permute.xlu0 0
    %3989 = vperm.xlu0 %3988, %v3896
    %v3990 = vpop.permute.xlu0 %3989
    %3991 = vset.pattern.permute.xlu0 0
    %3992 = vperm.xlu0 %3991, %v3897
    %v3993 = vpop.permute.xlu0 %3992
    %3994 = vset.pattern.permute.xlu0 0
    %3995 = vperm.xlu0 %3994, %v3898
    %v3996 = vpop.permute.xlu0 %3995
    %3997 = vset.pattern.permute.xlu0 0
    %3998 = vperm.xlu0 %3997, %v3899
    %v3999 = vpop.permute.xlu0 %3998
    %4000 = vset.pattern.permute.xlu0 0
    %4001 = vperm.xlu0 %4000, %v3900
    %v4002 = vpop.permute.xlu0 %4001
    %4003 = vset.pattern.permute.xlu0 0
    %4004 = vperm.xlu0 %4003, %v3901
    %v4005 = vpop.permute.xlu0 %4004
    %4006 = vset.pattern.permute.xlu0 0
    %4007 = vperm.xlu0 %4006, %v3902
    %v4008 = vpop.permute.xlu0 %4007
    %4009 = vset.pattern.permute.xlu0 0
    %4010 = vperm.xlu0 %4009, %v3903
    %v4011 = vpop.permute.xlu0 %4010
    %4012 = vset.pattern.permute.xlu0 0
    %4013 = vperm.xlu0 %4012, %v3904
    %v4014 = vpop.permute.xlu0 %4013
    %4015 = vset.pattern.permute.xlu0 0
    %4016 = vperm.xlu0 %4015, %v3905
    %v4017 = vpop.permute.xlu0 %4016
    %4018 = vset.pattern.permute.xlu0 0
    %4019 = vperm.xlu0 %4018, %v3906
    %v4020 = vpop.permute.xlu0 %4019
    %4021 = vset.pattern.permute.xlu0 0
    %4022 = vperm.xlu0 %4021, %v3907
    %v4023 = vpop.permute.xlu0 %4022
    %4024 = vset.pattern.permute.xlu0 0
    %4025 = vperm.xlu0 %4024, %v3908
    %v4026 = vpop.permute.xlu0 %4025
    %4027 = vset.pattern.permute.xlu0 0
    %4028 = vperm.xlu0 %4027, %v3909
    %v4029 = vpop.permute.xlu0 %4028
    %4030 = vset.pattern.permute.xlu0 0
    %4031 = vperm.xlu0 %4030, %v3910
    %v4032 = vpop.permute.xlu0 %4031
    %4033 = vset.pattern.permute.xlu0 0
    %4034 = vperm.xlu0 %4033, %v3911
    %v4035 = vpop.permute.xlu0 %4034
    %4036 = vset.pattern.permute.xlu0 0
    %4037 = vperm.xlu0 %4036, %v3912
    %v4038 = vpop.permute.xlu0 %4037
    %4039 = vset.pattern.permute.xlu0 0
    %4040 = vperm.xlu0 %4039, %v3913
    %v4041 = vpop.permute.xlu0 %4040
    %v4042 = vlaneseq
    %v4043 = vshrl.u32 %v4042, 7
    %v4044 = vsub.s32 %v927, %v4043
    %v4045 = vrot.slane %v3948, %v4044
    %v4046 = vlaneseq
    %v4047 = vshrl.u32 %v4046, 7
    %v4048 = vsub.s32 %v932, %v4047
    %v4049 = vrot.slane %v3951, %v4048
    %v4050 = vsel %vm937, %v4049, %v4045
    %v4051 = vlaneseq
    %v4052 = vshrl.u32 %v4051, 7
    %v4053 = vsub.s32 %v939, %v4052
    %v4054 = vrot.slane %v3954, %v4053
    %v4055 = vsel %vm944, %v4054, %v4050
    %v4056 = vlaneseq
    %v4057 = vshrl.u32 %v4056, 7
    %v4058 = vsub.s32 %v946, %v4057
    %v4059 = vrot.slane %v3957, %v4058
    %v4060 = vsel %vm951, %v4059, %v4055
    %v4061 = vlaneseq
    %v4062 = vshrl.u32 %v4061, 7
    %v4063 = vsub.s32 %v953, %v4062
    %v4064 = vrot.slane %v3960, %v4063
    %v4065 = vsel %vm958, %v4064, %v4060
    %v4066 = vlaneseq
    %v4067 = vshrl.u32 %v4066, 7
    %v4068 = vsub.s32 %v960, %v4067
    %v4069 = vrot.slane %v3963, %v4068
    %v4070 = vsel %vm965, %v4069, %v4065
    %v4071 = vlaneseq
    %v4072 = vshrl.u32 %v4071, 7
    %v4073 = vsub.s32 %v967, %v4072
    %v4074 = vrot.slane %v3966, %v4073
    %v4075 = vsel %vm972, %v4074, %v4070
    %v4076 = vlaneseq
    %v4077 = vshrl.u32 %v4076, 7
    %v4078 = vsub.s32 %v974, %v4077
    %v4079 = vrot.slane %v3969, %v4078
    %v4080 = vsel %vm979, %v4079, %v4075
    %v4081 = vlaneseq
    %v4082 = vshrl.u32 %v4081, 7
    %v4083 = vsub.s32 %v981, %v4082
    %v4084 = vrot.slane %v3972, %v4083
    %v4085 = vsel %vm986, %v4084, %v4080
    %v4086 = vlaneseq
    %v4087 = vshrl.u32 %v4086, 7
    %v4088 = vsub.s32 %v988, %v4087
    %v4089 = vrot.slane %v3975, %v4088
    %v4090 = vsel %vm993, %v4089, %v4085
    %v4091 = vlaneseq
    %v4092 = vshrl.u32 %v4091, 7
    %v4093 = vsub.s32 %v995, %v4092
    %v4094 = vrot.slane %v3978, %v4093
    %v4095 = vsel %vm1000, %v4094, %v4090
    %v4096 = vlaneseq
    %v4097 = vshrl.u32 %v4096, 7
    %v4098 = vsub.s32 %v1002, %v4097
    %v4099 = vrot.slane %v3981, %v4098
    %v4100 = vsel %vm1007, %v4099, %v4095
    %v4101 = vlaneseq
    %v4102 = vshrl.u32 %v4101, 7
    %v4103 = vsub.s32 %v1009, %v4102
    %v4104 = vrot.slane %v3984, %v4103
    %v4105 = vsel %vm1014, %v4104, %v4100
    %v4106 = vlaneseq
    %v4107 = vshrl.u32 %v4106, 7
    %v4108 = vsub.s32 %v1016, %v4107
    %v4109 = vrot.slane %v3987, %v4108
    %v4110 = vsel %vm1021, %v4109, %v4105
    %v4111 = vlaneseq
    %v4112 = vshrl.u32 %v4111, 7
    %v4113 = vsub.s32 %v1023, %v4112
    %v4114 = vrot.slane %v3990, %v4113
    %v4115 = vsel %vm1028, %v4114, %v4110
    %v4116 = vlaneseq
    %v4117 = vshrl.u32 %v4116, 7
    %v4118 = vsub.s32 %v1030, %v4117
    %v4119 = vrot.slane %v3993, %v4118
    %v4120 = vsel %vm1035, %v4119, %v4115
    %v4121 = vlaneseq
    %v4122 = vshrl.u32 %v4121, 7
    %v4123 = vsub.s32 %v927, %v4122
    %v4124 = vrot.slane %v3996, %v4123
    %v4125 = vlaneseq
    %v4126 = vshrl.u32 %v4125, 7
    %v4127 = vsub.s32 %v932, %v4126
    %v4128 = vrot.slane %v3999, %v4127
    %v4129 = vsel %vm937, %v4128, %v4124
    %v4130 = vlaneseq
    %v4131 = vshrl.u32 %v4130, 7
    %v4132 = vsub.s32 %v939, %v4131
    %v4133 = vrot.slane %v4002, %v4132
    %v4134 = vsel %vm944, %v4133, %v4129
    %v4135 = vlaneseq
    %v4136 = vshrl.u32 %v4135, 7
    %v4137 = vsub.s32 %v946, %v4136
    %v4138 = vrot.slane %v4005, %v4137
    %v4139 = vsel %vm951, %v4138, %v4134
    %v4140 = vlaneseq
    %v4141 = vshrl.u32 %v4140, 7
    %v4142 = vsub.s32 %v953, %v4141
    %v4143 = vrot.slane %v4008, %v4142
    %v4144 = vsel %vm958, %v4143, %v4139
    %v4145 = vlaneseq
    %v4146 = vshrl.u32 %v4145, 7
    %v4147 = vsub.s32 %v960, %v4146
    %v4148 = vrot.slane %v4011, %v4147
    %v4149 = vsel %vm965, %v4148, %v4144
    %v4150 = vlaneseq
    %v4151 = vshrl.u32 %v4150, 7
    %v4152 = vsub.s32 %v967, %v4151
    %v4153 = vrot.slane %v4014, %v4152
    %v4154 = vsel %vm972, %v4153, %v4149
    %v4155 = vlaneseq
    %v4156 = vshrl.u32 %v4155, 7
    %v4157 = vsub.s32 %v974, %v4156
    %v4158 = vrot.slane %v4017, %v4157
    %v4159 = vsel %vm979, %v4158, %v4154
    %v4160 = vlaneseq
    %v4161 = vshrl.u32 %v4160, 7
    %v4162 = vsub.s32 %v981, %v4161
    %v4163 = vrot.slane %v4020, %v4162
    %v4164 = vsel %vm986, %v4163, %v4159
    %v4165 = vlaneseq
    %v4166 = vshrl.u32 %v4165, 7
    %v4167 = vsub.s32 %v988, %v4166
    %v4168 = vrot.slane %v4023, %v4167
    %v4169 = vsel %vm993, %v4168, %v4164
    %v4170 = vlaneseq
    %v4171 = vshrl.u32 %v4170, 7
    %v4172 = vsub.s32 %v995, %v4171
    %v4173 = vrot.slane %v4026, %v4172
    %v4174 = vsel %vm1000, %v4173, %v4169
    %v4175 = vlaneseq
    %v4176 = vshrl.u32 %v4175, 7
    %v4177 = vsub.s32 %v1002, %v4176
    %v4178 = vrot.slane %v4029, %v4177
    %v4179 = vsel %vm1007, %v4178, %v4174
    %v4180 = vlaneseq
    %v4181 = vshrl.u32 %v4180, 7
    %v4182 = vsub.s32 %v1009, %v4181
    %v4183 = vrot.slane %v4032, %v4182
    %v4184 = vsel %vm1014, %v4183, %v4179
    %v4185 = vlaneseq
    %v4186 = vshrl.u32 %v4185, 7
    %v4187 = vsub.s32 %v1016, %v4186
    %v4188 = vrot.slane %v4035, %v4187
    %v4189 = vsel %vm1021, %v4188, %v4184
    %v4190 = vlaneseq
    %v4191 = vshrl.u32 %v4190, 7
    %v4192 = vsub.s32 %v1023, %v4191
    %v4193 = vrot.slane %v4038, %v4192
    %v4194 = vsel %vm1028, %v4193, %v4189
    %v4195 = vlaneseq
    %v4196 = vshrl.u32 %v4195, 7
    %v4197 = vsub.s32 %v1030, %v4196
    %v4198 = vrot.slane %v4041, %v4197
    %v4199 = vsel %vm1035, %v4198, %v4194
    %v4200 = vsel %vm1116, %v4199, %v4120
    %vm4202 = vcmask 1041408
    %v4203 = vsel %vm4202, %v4200, -inf
    %4204 = vmax.xlane.f32.xlu0 %v4203
    %v4205 = vpop.xlane.xlu0 %4204
    %v4207 = vlaneseq
    %v4208 = vshrl.u32 %v4207, 7
    %v4209 = vsub.s32 0, %v4208
    %v4210 = vrot.slane %v4205, %v4209
    %v4211 = vlaneseq
    %v4212 = vshrl.u32 %v4211, 7
    %v4213 = vsub.s32 1, %v4212
    %v4214 = vrot.slane %v4205, %v4213
    %v4217 = vsub.f32 %v3882, %v4210
    %v4218 = vsub.f32 %v3883, %v4210
    %v4219 = vsub.f32 %v3884, %v4210
    %v4220 = vsub.f32 %v3885, %v4210
    %v4221 = vsub.f32 %v3886, %v4210
    %v4222 = vsub.f32 %v3887, %v4210
    %v4223 = vsub.f32 %v3888, %v4210
    %v4224 = vsub.f32 %v3889, %v4210
    %v4225 = vsub.f32 %v3890, %v4210
    %v4226 = vsub.f32 %v3891, %v4210
    %v4227 = vsub.f32 %v3892, %v4210
    %v4228 = vsub.f32 %v3893, %v4210
    %v4229 = vsub.f32 %v3894, %v4210
    %v4230 = vsub.f32 %v3895, %v4210
    %v4231 = vsub.f32 %v3896, %v4210
    %v4232 = vsub.f32 %v3897, %v4210
    %v4233 = vsub.f32 %v3898, %v4214
    %v4234 = vsub.f32 %v3899, %v4214
    %v4235 = vsub.f32 %v3900, %v4214
    %v4236 = vsub.f32 %v3901, %v4214
    %v4237 = vsub.f32 %v3902, %v4214
    %v4238 = vsub.f32 %v3903, %v4214
    %v4239 = vsub.f32 %v3904, %v4214
    %v4240 = vsub.f32 %v3905, %v4214
    %v4241 = vsub.f32 %v3906, %v4214
    %v4242 = vsub.f32 %v3907, %v4214
    %v4243 = vsub.f32 %v3908, %v4214
    %v4244 = vsub.f32 %v3909, %v4214
    %v4245 = vsub.f32 %v3910, %v4214
    %v4246 = vsub.f32 %v3911, %v4214
    %v4247 = vsub.f32 %v3912, %v4214
    %v4248 = vsub.f32 %v3913, %v4214
    %v4249 = vmul.f32 %v4217, 1.442695
    %v4250 = vpow.pop %v4249
    %v4251 = vmul.f32 %v4218, 1.442695
    %v4252 = vpow.pop %v4251
    %v4253 = vmul.f32 %v4219, 1.442695
    %v4254 = vpow.pop %v4253
    %v4255 = vmul.f32 %v4220, 1.442695
    %v4256 = vpow.pop %v4255
    %v4257 = vmul.f32 %v4221, 1.442695
    %v4258 = vpow.pop %v4257
    %v4259 = vmul.f32 %v4222, 1.442695
    %v4260 = vpow.pop %v4259
    %v4261 = vmul.f32 %v4223, 1.442695
    %v4262 = vpow.pop %v4261
    %v4263 = vmul.f32 %v4224, 1.442695
    %v4264 = vpow.pop %v4263
    %v4265 = vmul.f32 %v4225, 1.442695
    %v4266 = vpow.pop %v4265
    %v4267 = vmul.f32 %v4226, 1.442695
    %v4268 = vpow.pop %v4267
    %v4269 = vmul.f32 %v4227, 1.442695
    %v4270 = vpow.pop %v4269
    %v4271 = vmul.f32 %v4228, 1.442695
    %v4272 = vpow.pop %v4271
    %v4273 = vmul.f32 %v4229, 1.442695
    %v4274 = vpow.pop %v4273
    %v4275 = vmul.f32 %v4230, 1.442695
    %v4276 = vpow.pop %v4275
    %v4277 = vmul.f32 %v4231, 1.442695
    %v4278 = vpow.pop %v4277
    %v4279 = vmul.f32 %v4232, 1.442695
    %v4280 = vpow.pop %v4279
    %v4281 = vmul.f32 %v4233, 1.442695
    %v4282 = vpow.pop %v4281
    %v4283 = vmul.f32 %v4234, 1.442695
    %v4284 = vpow.pop %v4283
    %v4285 = vmul.f32 %v4235, 1.442695
    %v4286 = vpow.pop %v4285
    %v4287 = vmul.f32 %v4236, 1.442695
    %v4288 = vpow.pop %v4287
    %v4289 = vmul.f32 %v4237, 1.442695
    %v4290 = vpow.pop %v4289
    %v4291 = vmul.f32 %v4238, 1.442695
    %v4292 = vpow.pop %v4291
    %v4293 = vmul.f32 %v4239, 1.442695
    %v4294 = vpow.pop %v4293
    %v4295 = vmul.f32 %v4240, 1.442695
    %v4296 = vpow.pop %v4295
    %v4297 = vmul.f32 %v4241, 1.442695
    %v4298 = vpow.pop %v4297
    %v4299 = vmul.f32 %v4242, 1.442695
    %v4300 = vpow.pop %v4299
    %v4301 = vmul.f32 %v4243, 1.442695
    %v4302 = vpow.pop %v4301
    %v4303 = vmul.f32 %v4244, 1.442695
    %v4304 = vpow.pop %v4303
    %v4305 = vmul.f32 %v4245, 1.442695
    %v4306 = vpow.pop %v4305
    %v4307 = vmul.f32 %v4246, 1.442695
    %v4308 = vpow.pop %v4307
    %v4309 = vmul.f32 %v4247, 1.442695
    %v4310 = vpow.pop %v4309
    %v4311 = vmul.f32 %v4248, 1.442695
    %v4312 = vpow.pop %v4311
    %4345 = vset.pattern.permute.xlu0 0
    %4346 = vperm.xlu0 %4345, %v4250
    %v4347 = vpop.permute.xlu0 %4346
    %4348 = vset.pattern.permute.xlu0 0
    %4349 = vperm.xlu0 %4348, %v4252
    %v4350 = vpop.permute.xlu0 %4349
    %4351 = vset.pattern.permute.xlu0 0
    %4352 = vperm.xlu0 %4351, %v4254
    %v4353 = vpop.permute.xlu0 %4352
    %4354 = vset.pattern.permute.xlu0 0
    %4355 = vperm.xlu0 %4354, %v4256
    %v4356 = vpop.permute.xlu0 %4355
    %4357 = vset.pattern.permute.xlu0 0
    %4358 = vperm.xlu0 %4357, %v4258
    %v4359 = vpop.permute.xlu0 %4358
    %4360 = vset.pattern.permute.xlu0 0
    %4361 = vperm.xlu0 %4360, %v4260
    %v4362 = vpop.permute.xlu0 %4361
    %4363 = vset.pattern.permute.xlu0 0
    %4364 = vperm.xlu0 %4363, %v4262
    %v4365 = vpop.permute.xlu0 %4364
    %4366 = vset.pattern.permute.xlu0 0
    %4367 = vperm.xlu0 %4366, %v4264
    %v4368 = vpop.permute.xlu0 %4367
    %4369 = vset.pattern.permute.xlu0 0
    %4370 = vperm.xlu0 %4369, %v4266
    %v4371 = vpop.permute.xlu0 %4370
    %4372 = vset.pattern.permute.xlu0 0
    %4373 = vperm.xlu0 %4372, %v4268
    %v4374 = vpop.permute.xlu0 %4373
    %4375 = vset.pattern.permute.xlu0 0
    %4376 = vperm.xlu0 %4375, %v4270
    %v4377 = vpop.permute.xlu0 %4376
    %4378 = vset.pattern.permute.xlu0 0
    %4379 = vperm.xlu0 %4378, %v4272
    %v4380 = vpop.permute.xlu0 %4379
    %4381 = vset.pattern.permute.xlu0 0
    %4382 = vperm.xlu0 %4381, %v4274
    %v4383 = vpop.permute.xlu0 %4382
    %4384 = vset.pattern.permute.xlu0 0
    %4385 = vperm.xlu0 %4384, %v4276
    %v4386 = vpop.permute.xlu0 %4385
    %4387 = vset.pattern.permute.xlu0 0
    %4388 = vperm.xlu0 %4387, %v4278
    %v4389 = vpop.permute.xlu0 %4388
    %4390 = vset.pattern.permute.xlu0 0
    %4391 = vperm.xlu0 %4390, %v4280
    %v4392 = vpop.permute.xlu0 %4391
    %4393 = vset.pattern.permute.xlu0 0
    %4394 = vperm.xlu0 %4393, %v4282
    %v4395 = vpop.permute.xlu0 %4394
    %4396 = vset.pattern.permute.xlu0 0
    %4397 = vperm.xlu0 %4396, %v4284
    %v4398 = vpop.permute.xlu0 %4397
    %4399 = vset.pattern.permute.xlu0 0
    %4400 = vperm.xlu0 %4399, %v4286
    %v4401 = vpop.permute.xlu0 %4400
    %4402 = vset.pattern.permute.xlu0 0
    %4403 = vperm.xlu0 %4402, %v4288
    %v4404 = vpop.permute.xlu0 %4403
    %4405 = vset.pattern.permute.xlu0 0
    %4406 = vperm.xlu0 %4405, %v4290
    %v4407 = vpop.permute.xlu0 %4406
    %4408 = vset.pattern.permute.xlu0 0
    %4409 = vperm.xlu0 %4408, %v4292
    %v4410 = vpop.permute.xlu0 %4409
    %4411 = vset.pattern.permute.xlu0 0
    %4412 = vperm.xlu0 %4411, %v4294
    %v4413 = vpop.permute.xlu0 %4412
    %4414 = vset.pattern.permute.xlu0 0
    %4415 = vperm.xlu0 %4414, %v4296
    %v4416 = vpop.permute.xlu0 %4415
    %4417 = vset.pattern.permute.xlu0 0
    %4418 = vperm.xlu0 %4417, %v4298
    %v4419 = vpop.permute.xlu0 %4418
    %4420 = vset.pattern.permute.xlu0 0
    %4421 = vperm.xlu0 %4420, %v4300
    %v4422 = vpop.permute.xlu0 %4421
    %4423 = vset.pattern.permute.xlu0 0
    %4424 = vperm.xlu0 %4423, %v4302
    %v4425 = vpop.permute.xlu0 %4424
    %4426 = vset.pattern.permute.xlu0 0
    %4427 = vperm.xlu0 %4426, %v4304
    %v4428 = vpop.permute.xlu0 %4427
    %4429 = vset.pattern.permute.xlu0 0
    %4430 = vperm.xlu0 %4429, %v4306
    %v4431 = vpop.permute.xlu0 %4430
    %4432 = vset.pattern.permute.xlu0 0
    %4433 = vperm.xlu0 %4432, %v4308
    %v4434 = vpop.permute.xlu0 %4433
    %4435 = vset.pattern.permute.xlu0 0
    %4436 = vperm.xlu0 %4435, %v4310
    %v4437 = vpop.permute.xlu0 %4436
    %4438 = vset.pattern.permute.xlu0 0
    %4439 = vperm.xlu0 %4438, %v4312
    %v4440 = vpop.permute.xlu0 %4439
    %v4441 = vlaneseq
    %v4442 = vshrl.u32 %v4441, 7
    %v4443 = vsub.s32 %v927, %v4442
    %v4444 = vrot.slane %v4347, %v4443
    %v4445 = vlaneseq
    %v4446 = vshrl.u32 %v4445, 7
    %v4447 = vsub.s32 %v932, %v4446
    %v4448 = vrot.slane %v4350, %v4447
    %v4449 = vsel %vm937, %v4448, %v4444
    %v4450 = vlaneseq
    %v4451 = vshrl.u32 %v4450, 7
    %v4452 = vsub.s32 %v939, %v4451
    %v4453 = vrot.slane %v4353, %v4452
    %v4454 = vsel %vm944, %v4453, %v4449
    %v4455 = vlaneseq
    %v4456 = vshrl.u32 %v4455, 7
    %v4457 = vsub.s32 %v946, %v4456
    %v4458 = vrot.slane %v4356, %v4457
    %v4459 = vsel %vm951, %v4458, %v4454
    %v4460 = vlaneseq
    %v4461 = vshrl.u32 %v4460, 7
    %v4462 = vsub.s32 %v953, %v4461
    %v4463 = vrot.slane %v4359, %v4462
    %v4464 = vsel %vm958, %v4463, %v4459
    %v4465 = vlaneseq
    %v4466 = vshrl.u32 %v4465, 7
    %v4467 = vsub.s32 %v960, %v4466
    %v4468 = vrot.slane %v4362, %v4467
    %v4469 = vsel %vm965, %v4468, %v4464
    %v4470 = vlaneseq
    %v4471 = vshrl.u32 %v4470, 7
    %v4472 = vsub.s32 %v967, %v4471
    %v4473 = vrot.slane %v4365, %v4472
    %v4474 = vsel %vm972, %v4473, %v4469
    %v4475 = vlaneseq
    %v4476 = vshrl.u32 %v4475, 7
    %v4477 = vsub.s32 %v974, %v4476
    %v4478 = vrot.slane %v4368, %v4477
    %v4479 = vsel %vm979, %v4478, %v4474
    %v4480 = vlaneseq
    %v4481 = vshrl.u32 %v4480, 7
    %v4482 = vsub.s32 %v981, %v4481
    %v4483 = vrot.slane %v4371, %v4482
    %v4484 = vsel %vm986, %v4483, %v4479
    %v4485 = vlaneseq
    %v4486 = vshrl.u32 %v4485, 7
    %v4487 = vsub.s32 %v988, %v4486
    %v4488 = vrot.slane %v4374, %v4487
    %v4489 = vsel %vm993, %v4488, %v4484
    %v4490 = vlaneseq
    %v4491 = vshrl.u32 %v4490, 7
    %v4492 = vsub.s32 %v995, %v4491
    %v4493 = vrot.slane %v4377, %v4492
    %v4494 = vsel %vm1000, %v4493, %v4489
    %v4495 = vlaneseq
    %v4496 = vshrl.u32 %v4495, 7
    %v4497 = vsub.s32 %v1002, %v4496
    %v4498 = vrot.slane %v4380, %v4497
    %v4499 = vsel %vm1007, %v4498, %v4494
    %v4500 = vlaneseq
    %v4501 = vshrl.u32 %v4500, 7
    %v4502 = vsub.s32 %v1009, %v4501
    %v4503 = vrot.slane %v4383, %v4502
    %v4504 = vsel %vm1014, %v4503, %v4499
    %v4505 = vlaneseq
    %v4506 = vshrl.u32 %v4505, 7
    %v4507 = vsub.s32 %v1016, %v4506
    %v4508 = vrot.slane %v4386, %v4507
    %v4509 = vsel %vm1021, %v4508, %v4504
    %v4510 = vlaneseq
    %v4511 = vshrl.u32 %v4510, 7
    %v4512 = vsub.s32 %v1023, %v4511
    %v4513 = vrot.slane %v4389, %v4512
    %v4514 = vsel %vm1028, %v4513, %v4509
    %v4515 = vlaneseq
    %v4516 = vshrl.u32 %v4515, 7
    %v4517 = vsub.s32 %v1030, %v4516
    %v4518 = vrot.slane %v4392, %v4517
    %v4519 = vsel %vm1035, %v4518, %v4514
    %v4520 = vlaneseq
    %v4521 = vshrl.u32 %v4520, 7
    %v4522 = vsub.s32 %v927, %v4521
    %v4523 = vrot.slane %v4395, %v4522
    %v4524 = vlaneseq
    %v4525 = vshrl.u32 %v4524, 7
    %v4526 = vsub.s32 %v932, %v4525
    %v4527 = vrot.slane %v4398, %v4526
    %v4528 = vsel %vm937, %v4527, %v4523
    %v4529 = vlaneseq
    %v4530 = vshrl.u32 %v4529, 7
    %v4531 = vsub.s32 %v939, %v4530
    %v4532 = vrot.slane %v4401, %v4531
    %v4533 = vsel %vm944, %v4532, %v4528
    %v4534 = vlaneseq
    %v4535 = vshrl.u32 %v4534, 7
    %v4536 = vsub.s32 %v946, %v4535
    %v4537 = vrot.slane %v4404, %v4536
    %v4538 = vsel %vm951, %v4537, %v4533
    %v4539 = vlaneseq
    %v4540 = vshrl.u32 %v4539, 7
    %v4541 = vsub.s32 %v953, %v4540
    %v4542 = vrot.slane %v4407, %v4541
    %v4543 = vsel %vm958, %v4542, %v4538
    %v4544 = vlaneseq
    %v4545 = vshrl.u32 %v4544, 7
    %v4546 = vsub.s32 %v960, %v4545
    %v4547 = vrot.slane %v4410, %v4546
    %v4548 = vsel %vm965, %v4547, %v4543
    %v4549 = vlaneseq
    %v4550 = vshrl.u32 %v4549, 7
    %v4551 = vsub.s32 %v967, %v4550
    %v4552 = vrot.slane %v4413, %v4551
    %v4553 = vsel %vm972, %v4552, %v4548
    %v4554 = vlaneseq
    %v4555 = vshrl.u32 %v4554, 7
    %v4556 = vsub.s32 %v974, %v4555
    %v4557 = vrot.slane %v4416, %v4556
    %v4558 = vsel %vm979, %v4557, %v4553
    %v4559 = vlaneseq
    %v4560 = vshrl.u32 %v4559, 7
    %v4561 = vsub.s32 %v981, %v4560
    %v4562 = vrot.slane %v4419, %v4561
    %v4563 = vsel %vm986, %v4562, %v4558
    %v4564 = vlaneseq
    %v4565 = vshrl.u32 %v4564, 7
    %v4566 = vsub.s32 %v988, %v4565
    %v4567 = vrot.slane %v4422, %v4566
    %v4568 = vsel %vm993, %v4567, %v4563
    %v4569 = vlaneseq
    %v4570 = vshrl.u32 %v4569, 7
    %v4571 = vsub.s32 %v995, %v4570
    %v4572 = vrot.slane %v4425, %v4571
    %v4573 = vsel %vm1000, %v4572, %v4568
    %v4574 = vlaneseq
    %v4575 = vshrl.u32 %v4574, 7
    %v4576 = vsub.s32 %v1002, %v4575
    %v4577 = vrot.slane %v4428, %v4576
    %v4578 = vsel %vm1007, %v4577, %v4573
    %v4579 = vlaneseq
    %v4580 = vshrl.u32 %v4579, 7
    %v4581 = vsub.s32 %v1009, %v4580
    %v4582 = vrot.slane %v4431, %v4581
    %v4583 = vsel %vm1014, %v4582, %v4578
    %v4584 = vlaneseq
    %v4585 = vshrl.u32 %v4584, 7
    %v4586 = vsub.s32 %v1016, %v4585
    %v4587 = vrot.slane %v4434, %v4586
    %v4588 = vsel %vm1021, %v4587, %v4583
    %v4589 = vlaneseq
    %v4590 = vshrl.u32 %v4589, 7
    %v4591 = vsub.s32 %v1023, %v4590
    %v4592 = vrot.slane %v4437, %v4591
    %v4593 = vsel %vm1028, %v4592, %v4588
    %v4594 = vlaneseq
    %v4595 = vshrl.u32 %v4594, 7
    %v4596 = vsub.s32 %v1030, %v4595
    %v4597 = vrot.slane %v4440, %v4596
    %v4598 = vsel %vm1035, %v4597, %v4593
    %v4599 = vsel %vm1116, %v4598, %v4519
    %v4601 = vsel %vm4202, %v4599, 0.0
    %4602 = vadd.xlane.f32.xlu0 %v4601
    %v4603 = vpop.xlane.xlu0 %4602
    %v4604 = vlog2.pop %v4603
    %v4605 = vmul.f32 %v4604, 0.6931472
    %v4606 = vadd.f32 %v4605, %v4205
    %v4608 = vlaneseq
    %v4609 = vshrl.u32 %v4608, 7
    %v4610 = vsub.s32 0, %v4609
    %v4611 = vrot.slane %v4606, %v4610
    %v4612 = vlaneseq
    %v4613 = vshrl.u32 %v4612, 7
    %v4614 = vsub.s32 1, %v4613
    %v4615 = vrot.slane %v4606, %v4614
    %v4618 = vsub.f32 %v3882, %v4611
    %v4619 = vsub.f32 %v3883, %v4611
    %v4620 = vsub.f32 %v3884, %v4611
    %v4621 = vsub.f32 %v3885, %v4611
    %v4622 = vsub.f32 %v3886, %v4611
    %v4623 = vsub.f32 %v3887, %v4611
    %v4624 = vsub.f32 %v3888, %v4611
    %v4625 = vsub.f32 %v3889, %v4611
    %v4626 = vsub.f32 %v3890, %v4611
    %v4627 = vsub.f32 %v3891, %v4611
    %v4628 = vsub.f32 %v3892, %v4611
    %v4629 = vsub.f32 %v3893, %v4611
    %v4630 = vsub.f32 %v3894, %v4611
    %v4631 = vsub.f32 %v3895, %v4611
    %v4632 = vsub.f32 %v3896, %v4611
    %v4633 = vsub.f32 %v3897, %v4611
    %v4634 = vsub.f32 %v3898, %v4615
    %v4635 = vsub.f32 %v3899, %v4615
    %v4636 = vsub.f32 %v3900, %v4615
    %v4637 = vsub.f32 %v3901, %v4615
    %v4638 = vsub.f32 %v3902, %v4615
    %v4639 = vsub.f32 %v3903, %v4615
    %v4640 = vsub.f32 %v3904, %v4615
    %v4641 = vsub.f32 %v3905, %v4615
    %v4642 = vsub.f32 %v3906, %v4615
    %v4643 = vsub.f32 %v3907, %v4615
    %v4644 = vsub.f32 %v3908, %v4615
    %v4645 = vsub.f32 %v3909, %v4615
    %v4646 = vsub.f32 %v3910, %v4615
    %v4647 = vsub.f32 %v3911, %v4615
    %v4648 = vsub.f32 %v3912, %v4615
    %v4649 = vsub.f32 %v3913, %v4615
    %4682 = vset.pattern.permute.xlu0 0
    %4683 = vperm.xlu0 %4682, %v4618
    %v4684 = vpop.permute.xlu0 %4683
    %4685 = vset.pattern.permute.xlu0 0
    %4686 = vperm.xlu0 %4685, %v4619
    %v4687 = vpop.permute.xlu0 %4686
    %4688 = vset.pattern.permute.xlu0 0
    %4689 = vperm.xlu0 %4688, %v4620
    %v4690 = vpop.permute.xlu0 %4689
    %4691 = vset.pattern.permute.xlu0 0
    %4692 = vperm.xlu0 %4691, %v4621
    %v4693 = vpop.permute.xlu0 %4692
    %4694 = vset.pattern.permute.xlu0 0
    %4695 = vperm.xlu0 %4694, %v4622
    %v4696 = vpop.permute.xlu0 %4695
    %4697 = vset.pattern.permute.xlu0 0
    %4698 = vperm.xlu0 %4697, %v4623
    %v4699 = vpop.permute.xlu0 %4698
    %4700 = vset.pattern.permute.xlu0 0
    %4701 = vperm.xlu0 %4700, %v4624
    %v4702 = vpop.permute.xlu0 %4701
    %4703 = vset.pattern.permute.xlu0 0
    %4704 = vperm.xlu0 %4703, %v4625
    %v4705 = vpop.permute.xlu0 %4704
    %4706 = vset.pattern.permute.xlu0 0
    %4707 = vperm.xlu0 %4706, %v4626
    %v4708 = vpop.permute.xlu0 %4707
    %4709 = vset.pattern.permute.xlu0 0
    %4710 = vperm.xlu0 %4709, %v4627
    %v4711 = vpop.permute.xlu0 %4710
    %4712 = vset.pattern.permute.xlu0 0
    %4713 = vperm.xlu0 %4712, %v4628
    %v4714 = vpop.permute.xlu0 %4713
    %4715 = vset.pattern.permute.xlu0 0
    %4716 = vperm.xlu0 %4715, %v4629
    %v4717 = vpop.permute.xlu0 %4716
    %4718 = vset.pattern.permute.xlu0 0
    %4719 = vperm.xlu0 %4718, %v4630
    %v4720 = vpop.permute.xlu0 %4719
    %4721 = vset.pattern.permute.xlu0 0
    %4722 = vperm.xlu0 %4721, %v4631
    %v4723 = vpop.permute.xlu0 %4722
    %4724 = vset.pattern.permute.xlu0 0
    %4725 = vperm.xlu0 %4724, %v4632
    %v4726 = vpop.permute.xlu0 %4725
    %4727 = vset.pattern.permute.xlu0 0
    %4728 = vperm.xlu0 %4727, %v4633
    %v4729 = vpop.permute.xlu0 %4728
    %4730 = vset.pattern.permute.xlu0 0
    %4731 = vperm.xlu0 %4730, %v4634
    %v4732 = vpop.permute.xlu0 %4731
    %4733 = vset.pattern.permute.xlu0 0
    %4734 = vperm.xlu0 %4733, %v4635
    %v4735 = vpop.permute.xlu0 %4734
    %4736 = vset.pattern.permute.xlu0 0
    %4737 = vperm.xlu0 %4736, %v4636
    %v4738 = vpop.permute.xlu0 %4737
    %4739 = vset.pattern.permute.xlu0 0
    %4740 = vperm.xlu0 %4739, %v4637
    %v4741 = vpop.permute.xlu0 %4740
    %4742 = vset.pattern.permute.xlu0 0
    %4743 = vperm.xlu0 %4742, %v4638
    %v4744 = vpop.permute.xlu0 %4743
    %4745 = vset.pattern.permute.xlu0 0
    %4746 = vperm.xlu0 %4745, %v4639
    %v4747 = vpop.permute.xlu0 %4746
    %4748 = vset.pattern.permute.xlu0 0
    %4749 = vperm.xlu0 %4748, %v4640
    %v4750 = vpop.permute.xlu0 %4749
    %4751 = vset.pattern.permute.xlu0 0
    %4752 = vperm.xlu0 %4751, %v4641
    %v4753 = vpop.permute.xlu0 %4752
    %4754 = vset.pattern.permute.xlu0 0
    %4755 = vperm.xlu0 %4754, %v4642
    %v4756 = vpop.permute.xlu0 %4755
    %4757 = vset.pattern.permute.xlu0 0
    %4758 = vperm.xlu0 %4757, %v4643
    %v4759 = vpop.permute.xlu0 %4758
    %4760 = vset.pattern.permute.xlu0 0
    %4761 = vperm.xlu0 %4760, %v4644
    %v4762 = vpop.permute.xlu0 %4761
    %4763 = vset.pattern.permute.xlu0 0
    %4764 = vperm.xlu0 %4763, %v4645
    %v4765 = vpop.permute.xlu0 %4764
    %4766 = vset.pattern.permute.xlu0 0
    %4767 = vperm.xlu0 %4766, %v4646
    %v4768 = vpop.permute.xlu0 %4767
    %4769 = vset.pattern.permute.xlu0 0
    %4770 = vperm.xlu0 %4769, %v4647
    %v4771 = vpop.permute.xlu0 %4770
    %4772 = vset.pattern.permute.xlu0 0
    %4773 = vperm.xlu0 %4772, %v4648
    %v4774 = vpop.permute.xlu0 %4773
    %4775 = vset.pattern.permute.xlu0 0
    %4776 = vperm.xlu0 %4775, %v4649
    %v4777 = vpop.permute.xlu0 %4776
    %v4778 = vlaneseq
    %v4779 = vshrl.u32 %v4778, 7
    %v4780 = vsub.s32 %v927, %v4779
    %v4781 = vrot.slane %v4684, %v4780
    %v4782 = vlaneseq
    %v4783 = vshrl.u32 %v4782, 7
    %v4784 = vsub.s32 %v932, %v4783
    %v4785 = vrot.slane %v4687, %v4784
    %v4786 = vsel %vm937, %v4785, %v4781
    %v4787 = vlaneseq
    %v4788 = vshrl.u32 %v4787, 7
    %v4789 = vsub.s32 %v939, %v4788
    %v4790 = vrot.slane %v4690, %v4789
    %v4791 = vsel %vm944, %v4790, %v4786
    %v4792 = vlaneseq
    %v4793 = vshrl.u32 %v4792, 7
    %v4794 = vsub.s32 %v946, %v4793
    %v4795 = vrot.slane %v4693, %v4794
    %v4796 = vsel %vm951, %v4795, %v4791
    %v4797 = vlaneseq
    %v4798 = vshrl.u32 %v4797, 7
    %v4799 = vsub.s32 %v953, %v4798
    %v4800 = vrot.slane %v4696, %v4799
    %v4801 = vsel %vm958, %v4800, %v4796
    %v4802 = vlaneseq
    %v4803 = vshrl.u32 %v4802, 7
    %v4804 = vsub.s32 %v960, %v4803
    %v4805 = vrot.slane %v4699, %v4804
    %v4806 = vsel %vm965, %v4805, %v4801
    %v4807 = vlaneseq
    %v4808 = vshrl.u32 %v4807, 7
    %v4809 = vsub.s32 %v967, %v4808
    %v4810 = vrot.slane %v4702, %v4809
    %v4811 = vsel %vm972, %v4810, %v4806
    %v4812 = vlaneseq
    %v4813 = vshrl.u32 %v4812, 7
    %v4814 = vsub.s32 %v974, %v4813
    %v4815 = vrot.slane %v4705, %v4814
    %v4816 = vsel %vm979, %v4815, %v4811
    %v4817 = vlaneseq
    %v4818 = vshrl.u32 %v4817, 7
    %v4819 = vsub.s32 %v981, %v4818
    %v4820 = vrot.slane %v4708, %v4819
    %v4821 = vsel %vm986, %v4820, %v4816
    %v4822 = vlaneseq
    %v4823 = vshrl.u32 %v4822, 7
    %v4824 = vsub.s32 %v988, %v4823
    %v4825 = vrot.slane %v4711, %v4824
    %v4826 = vsel %vm993, %v4825, %v4821
    %v4827 = vlaneseq
    %v4828 = vshrl.u32 %v4827, 7
    %v4829 = vsub.s32 %v995, %v4828
    %v4830 = vrot.slane %v4714, %v4829
    %v4831 = vsel %vm1000, %v4830, %v4826
    %v4832 = vlaneseq
    %v4833 = vshrl.u32 %v4832, 7
    %v4834 = vsub.s32 %v1002, %v4833
    %v4835 = vrot.slane %v4717, %v4834
    %v4836 = vsel %vm1007, %v4835, %v4831
    %v4837 = vlaneseq
    %v4838 = vshrl.u32 %v4837, 7
    %v4839 = vsub.s32 %v1009, %v4838
    %v4840 = vrot.slane %v4720, %v4839
    %v4841 = vsel %vm1014, %v4840, %v4836
    %v4842 = vlaneseq
    %v4843 = vshrl.u32 %v4842, 7
    %v4844 = vsub.s32 %v1016, %v4843
    %v4845 = vrot.slane %v4723, %v4844
    %v4846 = vsel %vm1021, %v4845, %v4841
    %v4847 = vlaneseq
    %v4848 = vshrl.u32 %v4847, 7
    %v4849 = vsub.s32 %v1023, %v4848
    %v4850 = vrot.slane %v4726, %v4849
    %v4851 = vsel %vm1028, %v4850, %v4846
    %v4852 = vlaneseq
    %v4853 = vshrl.u32 %v4852, 7
    %v4854 = vsub.s32 %v1030, %v4853
    %v4855 = vrot.slane %v4729, %v4854
    %v4856 = vsel %vm1035, %v4855, %v4851
    %v4857 = vlaneseq
    %v4858 = vshrl.u32 %v4857, 7
    %v4859 = vsub.s32 %v927, %v4858
    %v4860 = vrot.slane %v4732, %v4859
    %v4861 = vlaneseq
    %v4862 = vshrl.u32 %v4861, 7
    %v4863 = vsub.s32 %v932, %v4862
    %v4864 = vrot.slane %v4735, %v4863
    %v4865 = vsel %vm937, %v4864, %v4860
    %v4866 = vlaneseq
    %v4867 = vshrl.u32 %v4866, 7
    %v4868 = vsub.s32 %v939, %v4867
    %v4869 = vrot.slane %v4738, %v4868
    %v4870 = vsel %vm944, %v4869, %v4865
    %v4871 = vlaneseq
    %v4872 = vshrl.u32 %v4871, 7
    %v4873 = vsub.s32 %v946, %v4872
    %v4874 = vrot.slane %v4741, %v4873
    %v4875 = vsel %vm951, %v4874, %v4870
    %v4876 = vlaneseq
    %v4877 = vshrl.u32 %v4876, 7
    %v4878 = vsub.s32 %v953, %v4877
    %v4879 = vrot.slane %v4744, %v4878
    %v4880 = vsel %vm958, %v4879, %v4875
    %v4881 = vlaneseq
    %v4882 = vshrl.u32 %v4881, 7
    %v4883 = vsub.s32 %v960, %v4882
    %v4884 = vrot.slane %v4747, %v4883
    %v4885 = vsel %vm965, %v4884, %v4880
    %v4886 = vlaneseq
    %v4887 = vshrl.u32 %v4886, 7
    %v4888 = vsub.s32 %v967, %v4887
    %v4889 = vrot.slane %v4750, %v4888
    %v4890 = vsel %vm972, %v4889, %v4885
    %v4891 = vlaneseq
    %v4892 = vshrl.u32 %v4891, 7
    %v4893 = vsub.s32 %v974, %v4892
    %v4894 = vrot.slane %v4753, %v4893
    %v4895 = vsel %vm979, %v4894, %v4890
    %v4896 = vlaneseq
    %v4897 = vshrl.u32 %v4896, 7
    %v4898 = vsub.s32 %v981, %v4897
    %v4899 = vrot.slane %v4756, %v4898
    %v4900 = vsel %vm986, %v4899, %v4895
    %v4901 = vlaneseq
    %v4902 = vshrl.u32 %v4901, 7
    %v4903 = vsub.s32 %v988, %v4902
    %v4904 = vrot.slane %v4759, %v4903
    %v4905 = vsel %vm993, %v4904, %v4900
    %v4906 = vlaneseq
    %v4907 = vshrl.u32 %v4906, 7
    %v4908 = vsub.s32 %v995, %v4907
    %v4909 = vrot.slane %v4762, %v4908
    %v4910 = vsel %vm1000, %v4909, %v4905
    %v4911 = vlaneseq
    %v4912 = vshrl.u32 %v4911, 7
    %v4913 = vsub.s32 %v1002, %v4912
    %v4914 = vrot.slane %v4765, %v4913
    %v4915 = vsel %vm1007, %v4914, %v4910
    %v4916 = vlaneseq
    %v4917 = vshrl.u32 %v4916, 7
    %v4918 = vsub.s32 %v1009, %v4917
    %v4919 = vrot.slane %v4768, %v4918
    %v4920 = vsel %vm1014, %v4919, %v4915
    %v4921 = vlaneseq
    %v4922 = vshrl.u32 %v4921, 7
    %v4923 = vsub.s32 %v1016, %v4922
    %v4924 = vrot.slane %v4771, %v4923
    %v4925 = vsel %vm1021, %v4924, %v4920
    %v4926 = vlaneseq
    %v4927 = vshrl.u32 %v4926, 7
    %v4928 = vsub.s32 %v1023, %v4927
    %v4929 = vrot.slane %v4774, %v4928
    %v4930 = vsel %vm1028, %v4929, %v4925
    %v4931 = vlaneseq
    %v4932 = vshrl.u32 %v4931, 7
    %v4933 = vsub.s32 %v1030, %v4932
    %v4934 = vrot.slane %v4777, %v4933
    %v4935 = vsel %vm1035, %v4934, %v4930
    %v4936 = vsel %vm1116, %v4935, %v4856
    %s4938 = scalar_lea.vmem %s7, 4
    %4939 = vst [vmem:[%s4938] sm:$0x3] %v4936
    %v4940 = vadd.f32 %v3103, %v3722
    %v4941 = vadd.f32 %v3104, %v3726
    %v4942 = vadd.f32 %v3105, %v3730
    %v4943 = vadd.f32 %v3106, %v3734
    %v4944 = vadd.f32 %v3107, %v3738
    %v4945 = vadd.f32 %v3108, %v3742
    %v4946 = vadd.f32 %v3109, %v3746
    %v4947 = vadd.f32 %v3110, %v3750
    %v4948 = vadd.f32 %v3111, %v3754
    %v4949 = vadd.f32 %v3112, %v3758
    %v4950 = vadd.f32 %v3113, %v3762
    %v4951 = vadd.f32 %v3114, %v3766
    %v4952 = vadd.f32 %v3115, %v3770
    %v4953 = vadd.f32 %v3116, %v3774
    %v4954 = vadd.f32 %v3117, %v3778
    %v4955 = vadd.f32 %v3118, %v3782
    %v4956 = vadd.f32 %v3119, %v3789
    %v4957 = vadd.f32 %v3120, %v3793
    %v4958 = vadd.f32 %v3121, %v3797
    %v4959 = vadd.f32 %v3122, %v3801
    %v4960 = vadd.f32 %v3123, %v3805
    %v4961 = vadd.f32 %v3124, %v3809
    %v4962 = vadd.f32 %v3125, %v3813
    %v4963 = vadd.f32 %v3126, %v3817
    %v4964 = vadd.f32 %v3127, %v3821
    %v4965 = vadd.f32 %v3128, %v3825
    %v4966 = vadd.f32 %v3129, %v3829
    %v4967 = vadd.f32 %v3130, %v3833
    %v4968 = vadd.f32 %v3131, %v3837
    %v4969 = vadd.f32 %v3132, %v3841
    %v4970 = vadd.f32 %v3133, %v3845
    %v4971 = vadd.f32 %v3134, %v3849
    %5004 = vset.pattern.permute.xlu0 0
    %5005 = vperm.xlu0 %5004, %v4940
    %v5006 = vpop.permute.xlu0 %5005
    %5007 = vset.pattern.permute.xlu0 0
    %5008 = vperm.xlu0 %5007, %v4941
    %v5009 = vpop.permute.xlu0 %5008
    %5010 = vset.pattern.permute.xlu0 0
    %5011 = vperm.xlu0 %5010, %v4942
    %v5012 = vpop.permute.xlu0 %5011
    %5013 = vset.pattern.permute.xlu0 0
    %5014 = vperm.xlu0 %5013, %v4943
    %v5015 = vpop.permute.xlu0 %5014
    %5016 = vset.pattern.permute.xlu0 0
    %5017 = vperm.xlu0 %5016, %v4944
    %v5018 = vpop.permute.xlu0 %5017
    %5019 = vset.pattern.permute.xlu0 0
    %5020 = vperm.xlu0 %5019, %v4945
    %v5021 = vpop.permute.xlu0 %5020
    %5022 = vset.pattern.permute.xlu0 0
    %5023 = vperm.xlu0 %5022, %v4946
    %v5024 = vpop.permute.xlu0 %5023
    %5025 = vset.pattern.permute.xlu0 0
    %5026 = vperm.xlu0 %5025, %v4947
    %v5027 = vpop.permute.xlu0 %5026
    %5028 = vset.pattern.permute.xlu0 0
    %5029 = vperm.xlu0 %5028, %v4948
    %v5030 = vpop.permute.xlu0 %5029
    %5031 = vset.pattern.permute.xlu0 0
    %5032 = vperm.xlu0 %5031, %v4949
    %v5033 = vpop.permute.xlu0 %5032
    %5034 = vset.pattern.permute.xlu0 0
    %5035 = vperm.xlu0 %5034, %v4950
    %v5036 = vpop.permute.xlu0 %5035
    %5037 = vset.pattern.permute.xlu0 0
    %5038 = vperm.xlu0 %5037, %v4951
    %v5039 = vpop.permute.xlu0 %5038
    %5040 = vset.pattern.permute.xlu0 0
    %5041 = vperm.xlu0 %5040, %v4952
    %v5042 = vpop.permute.xlu0 %5041
    %5043 = vset.pattern.permute.xlu0 0
    %5044 = vperm.xlu0 %5043, %v4953
    %v5045 = vpop.permute.xlu0 %5044
    %5046 = vset.pattern.permute.xlu0 0
    %5047 = vperm.xlu0 %5046, %v4954
    %v5048 = vpop.permute.xlu0 %5047
    %5049 = vset.pattern.permute.xlu0 0
    %5050 = vperm.xlu0 %5049, %v4955
    %v5051 = vpop.permute.xlu0 %5050
    %5052 = vset.pattern.permute.xlu0 0
    %5053 = vperm.xlu0 %5052, %v4956
    %v5054 = vpop.permute.xlu0 %5053
    %5055 = vset.pattern.permute.xlu0 0
    %5056 = vperm.xlu0 %5055, %v4957
    %v5057 = vpop.permute.xlu0 %5056
    %5058 = vset.pattern.permute.xlu0 0
    %5059 = vperm.xlu0 %5058, %v4958
    %v5060 = vpop.permute.xlu0 %5059
    %5061 = vset.pattern.permute.xlu0 0
    %5062 = vperm.xlu0 %5061, %v4959
    %v5063 = vpop.permute.xlu0 %5062
    %5064 = vset.pattern.permute.xlu0 0
    %5065 = vperm.xlu0 %5064, %v4960
    %v5066 = vpop.permute.xlu0 %5065
    %5067 = vset.pattern.permute.xlu0 0
    %5068 = vperm.xlu0 %5067, %v4961
    %v5069 = vpop.permute.xlu0 %5068
    %5070 = vset.pattern.permute.xlu0 0
    %5071 = vperm.xlu0 %5070, %v4962
    %v5072 = vpop.permute.xlu0 %5071
    %5073 = vset.pattern.permute.xlu0 0
    %5074 = vperm.xlu0 %5073, %v4963
    %v5075 = vpop.permute.xlu0 %5074
    %5076 = vset.pattern.permute.xlu0 0
    %5077 = vperm.xlu0 %5076, %v4964
    %v5078 = vpop.permute.xlu0 %5077
    %5079 = vset.pattern.permute.xlu0 0
    %5080 = vperm.xlu0 %5079, %v4965
    %v5081 = vpop.permute.xlu0 %5080
    %5082 = vset.pattern.permute.xlu0 0
    %5083 = vperm.xlu0 %5082, %v4966
    %v5084 = vpop.permute.xlu0 %5083
    %5085 = vset.pattern.permute.xlu0 0
    %5086 = vperm.xlu0 %5085, %v4967
    %v5087 = vpop.permute.xlu0 %5086
    %5088 = vset.pattern.permute.xlu0 0
    %5089 = vperm.xlu0 %5088, %v4968
    %v5090 = vpop.permute.xlu0 %5089
    %5091 = vset.pattern.permute.xlu0 0
    %5092 = vperm.xlu0 %5091, %v4969
    %v5093 = vpop.permute.xlu0 %5092
    %5094 = vset.pattern.permute.xlu0 0
    %5095 = vperm.xlu0 %5094, %v4970
    %v5096 = vpop.permute.xlu0 %5095
    %5097 = vset.pattern.permute.xlu0 0
    %5098 = vperm.xlu0 %5097, %v4971
    %v5099 = vpop.permute.xlu0 %5098
    %v5100 = vlaneseq
    %v5101 = vshrl.u32 %v5100, 7
    %v5102 = vsub.s32 %v927, %v5101
    %v5103 = vrot.slane %v5006, %v5102
    %v5104 = vlaneseq
    %v5105 = vshrl.u32 %v5104, 7
    %v5106 = vsub.s32 %v932, %v5105
    %v5107 = vrot.slane %v5009, %v5106
    %v5108 = vsel %vm937, %v5107, %v5103
    %v5109 = vlaneseq
    %v5110 = vshrl.u32 %v5109, 7
    %v5111 = vsub.s32 %v939, %v5110
    %v5112 = vrot.slane %v5012, %v5111
    %v5113 = vsel %vm944, %v5112, %v5108
    %v5114 = vlaneseq
    %v5115 = vshrl.u32 %v5114, 7
    %v5116 = vsub.s32 %v946, %v5115
    %v5117 = vrot.slane %v5015, %v5116
    %v5118 = vsel %vm951, %v5117, %v5113
    %v5119 = vlaneseq
    %v5120 = vshrl.u32 %v5119, 7
    %v5121 = vsub.s32 %v953, %v5120
    %v5122 = vrot.slane %v5018, %v5121
    %v5123 = vsel %vm958, %v5122, %v5118
    %v5124 = vlaneseq
    %v5125 = vshrl.u32 %v5124, 7
    %v5126 = vsub.s32 %v960, %v5125
    %v5127 = vrot.slane %v5021, %v5126
    %v5128 = vsel %vm965, %v5127, %v5123
    %v5129 = vlaneseq
    %v5130 = vshrl.u32 %v5129, 7
    %v5131 = vsub.s32 %v967, %v5130
    %v5132 = vrot.slane %v5024, %v5131
    %v5133 = vsel %vm972, %v5132, %v5128
    %v5134 = vlaneseq
    %v5135 = vshrl.u32 %v5134, 7
    %v5136 = vsub.s32 %v974, %v5135
    %v5137 = vrot.slane %v5027, %v5136
    %v5138 = vsel %vm979, %v5137, %v5133
    %v5139 = vlaneseq
    %v5140 = vshrl.u32 %v5139, 7
    %v5141 = vsub.s32 %v981, %v5140
    %v5142 = vrot.slane %v5030, %v5141
    %v5143 = vsel %vm986, %v5142, %v5138
    %v5144 = vlaneseq
    %v5145 = vshrl.u32 %v5144, 7
    %v5146 = vsub.s32 %v988, %v5145
    %v5147 = vrot.slane %v5033, %v5146
    %v5148 = vsel %vm993, %v5147, %v5143
    %v5149 = vlaneseq
    %v5150 = vshrl.u32 %v5149, 7
    %v5151 = vsub.s32 %v995, %v5150
    %v5152 = vrot.slane %v5036, %v5151
    %v5153 = vsel %vm1000, %v5152, %v5148
    %v5154 = vlaneseq
    %v5155 = vshrl.u32 %v5154, 7
    %v5156 = vsub.s32 %v1002, %v5155
    %v5157 = vrot.slane %v5039, %v5156
    %v5158 = vsel %vm1007, %v5157, %v5153
    %v5159 = vlaneseq
    %v5160 = vshrl.u32 %v5159, 7
    %v5161 = vsub.s32 %v1009, %v5160
    %v5162 = vrot.slane %v5042, %v5161
    %v5163 = vsel %vm1014, %v5162, %v5158
    %v5164 = vlaneseq
    %v5165 = vshrl.u32 %v5164, 7
    %v5166 = vsub.s32 %v1016, %v5165
    %v5167 = vrot.slane %v5045, %v5166
    %v5168 = vsel %vm1021, %v5167, %v5163
    %v5169 = vlaneseq
    %v5170 = vshrl.u32 %v5169, 7
    %v5171 = vsub.s32 %v1023, %v5170
    %v5172 = vrot.slane %v5048, %v5171
    %v5173 = vsel %vm1028, %v5172, %v5168
    %v5174 = vlaneseq
    %v5175 = vshrl.u32 %v5174, 7
    %v5176 = vsub.s32 %v1030, %v5175
    %v5177 = vrot.slane %v5051, %v5176
    %v5178 = vsel %vm1035, %v5177, %v5173
    %v5179 = vlaneseq
    %v5180 = vshrl.u32 %v5179, 7
    %v5181 = vsub.s32 %v927, %v5180
    %v5182 = vrot.slane %v5054, %v5181
    %v5183 = vlaneseq
    %v5184 = vshrl.u32 %v5183, 7
    %v5185 = vsub.s32 %v932, %v5184
    %v5186 = vrot.slane %v5057, %v5185
    %v5187 = vsel %vm937, %v5186, %v5182
    %v5188 = vlaneseq
    %v5189 = vshrl.u32 %v5188, 7
    %v5190 = vsub.s32 %v939, %v5189
    %v5191 = vrot.slane %v5060, %v5190
    %v5192 = vsel %vm944, %v5191, %v5187
    %v5193 = vlaneseq
    %v5194 = vshrl.u32 %v5193, 7
    %v5195 = vsub.s32 %v946, %v5194
    %v5196 = vrot.slane %v5063, %v5195
    %v5197 = vsel %vm951, %v5196, %v5192
    %v5198 = vlaneseq
    %v5199 = vshrl.u32 %v5198, 7
    %v5200 = vsub.s32 %v953, %v5199
    %v5201 = vrot.slane %v5066, %v5200
    %v5202 = vsel %vm958, %v5201, %v5197
    %v5203 = vlaneseq
    %v5204 = vshrl.u32 %v5203, 7
    %v5205 = vsub.s32 %v960, %v5204
    %v5206 = vrot.slane %v5069, %v5205
    %v5207 = vsel %vm965, %v5206, %v5202
    %v5208 = vlaneseq
    %v5209 = vshrl.u32 %v5208, 7
    %v5210 = vsub.s32 %v967, %v5209
    %v5211 = vrot.slane %v5072, %v5210
    %v5212 = vsel %vm972, %v5211, %v5207
    %v5213 = vlaneseq
    %v5214 = vshrl.u32 %v5213, 7
    %v5215 = vsub.s32 %v974, %v5214
    %v5216 = vrot.slane %v5075, %v5215
    %v5217 = vsel %vm979, %v5216, %v5212
    %v5218 = vlaneseq
    %v5219 = vshrl.u32 %v5218, 7
    %v5220 = vsub.s32 %v981, %v5219
    %v5221 = vrot.slane %v5078, %v5220
    %v5222 = vsel %vm986, %v5221, %v5217
    %v5223 = vlaneseq
    %v5224 = vshrl.u32 %v5223, 7
    %v5225 = vsub.s32 %v988, %v5224
    %v5226 = vrot.slane %v5081, %v5225
    %v5227 = vsel %vm993, %v5226, %v5222
    %v5228 = vlaneseq
    %v5229 = vshrl.u32 %v5228, 7
    %v5230 = vsub.s32 %v995, %v5229
    %v5231 = vrot.slane %v5084, %v5230
    %v5232 = vsel %vm1000, %v5231, %v5227
    %v5233 = vlaneseq
    %v5234 = vshrl.u32 %v5233, 7
    %v5235 = vsub.s32 %v1002, %v5234
    %v5236 = vrot.slane %v5087, %v5235
    %v5237 = vsel %vm1007, %v5236, %v5232
    %v5238 = vlaneseq
    %v5239 = vshrl.u32 %v5238, 7
    %v5240 = vsub.s32 %v1009, %v5239
    %v5241 = vrot.slane %v5090, %v5240
    %v5242 = vsel %vm1014, %v5241, %v5237
    %v5243 = vlaneseq
    %v5244 = vshrl.u32 %v5243, 7
    %v5245 = vsub.s32 %v1016, %v5244
    %v5246 = vrot.slane %v5093, %v5245
    %v5247 = vsel %vm1021, %v5246, %v5242
    %v5248 = vlaneseq
    %v5249 = vshrl.u32 %v5248, 7
    %v5250 = vsub.s32 %v1023, %v5249
    %v5251 = vrot.slane %v5096, %v5250
    %v5252 = vsel %vm1028, %v5251, %v5247
    %v5253 = vlaneseq
    %v5254 = vshrl.u32 %v5253, 7
    %v5255 = vsub.s32 %v1030, %v5254
    %v5256 = vrot.slane %v5099, %v5255
    %v5257 = vsel %vm1035, %v5256, %v5252
    %v5258 = vsel %vm1116, %v5257, %v5178
    %v5260 = vsel %vm4202, %v5258, -inf
    %5261 = vmax.xlane.f32.xlu0 %v5260
    %v5262 = vpop.xlane.xlu0 %5261
    %v5264 = vlaneseq
    %v5265 = vshrl.u32 %v5264, 7
    %v5266 = vsub.s32 0, %v5265
    %v5267 = vrot.slane %v5262, %v5266
    %v5268 = vlaneseq
    %v5269 = vshrl.u32 %v5268, 7
    %v5270 = vsub.s32 1, %v5269
    %v5271 = vrot.slane %v5262, %v5270
    %v5274 = vsub.f32 %v4940, %v5267
    %v5275 = vsub.f32 %v4941, %v5267
    %v5276 = vsub.f32 %v4942, %v5267
    %v5277 = vsub.f32 %v4943, %v5267
    %v5278 = vsub.f32 %v4944, %v5267
    %v5279 = vsub.f32 %v4945, %v5267
    %v5280 = vsub.f32 %v4946, %v5267
    %v5281 = vsub.f32 %v4947, %v5267
    %v5282 = vsub.f32 %v4948, %v5267
    %v5283 = vsub.f32 %v4949, %v5267
    %v5284 = vsub.f32 %v4950, %v5267
    %v5285 = vsub.f32 %v4951, %v5267
    %v5286 = vsub.f32 %v4952, %v5267
    %v5287 = vsub.f32 %v4953, %v5267
    %v5288 = vsub.f32 %v4954, %v5267
    %v5289 = vsub.f32 %v4955, %v5267
    %v5290 = vsub.f32 %v4956, %v5271
    %v5291 = vsub.f32 %v4957, %v5271
    %v5292 = vsub.f32 %v4958, %v5271
    %v5293 = vsub.f32 %v4959, %v5271
    %v5294 = vsub.f32 %v4960, %v5271
    %v5295 = vsub.f32 %v4961, %v5271
    %v5296 = vsub.f32 %v4962, %v5271
    %v5297 = vsub.f32 %v4963, %v5271
    %v5298 = vsub.f32 %v4964, %v5271
    %v5299 = vsub.f32 %v4965, %v5271
    %v5300 = vsub.f32 %v4966, %v5271
    %v5301 = vsub.f32 %v4967, %v5271
    %v5302 = vsub.f32 %v4968, %v5271
    %v5303 = vsub.f32 %v4969, %v5271
    %v5304 = vsub.f32 %v4970, %v5271
    %v5305 = vsub.f32 %v4971, %v5271
    %v5306 = vmul.f32 %v5274, 1.442695
    %v5307 = vpow.pop %v5306
    %v5308 = vmul.f32 %v5275, 1.442695
    %v5309 = vpow.pop %v5308
    %v5310 = vmul.f32 %v5276, 1.442695
    %v5311 = vpow.pop %v5310
    %v5312 = vmul.f32 %v5277, 1.442695
    %v5313 = vpow.pop %v5312
    %v5314 = vmul.f32 %v5278, 1.442695
    %v5315 = vpow.pop %v5314
    %v5316 = vmul.f32 %v5279, 1.442695
    %v5317 = vpow.pop %v5316
    %v5318 = vmul.f32 %v5280, 1.442695
    %v5319 = vpow.pop %v5318
    %v5320 = vmul.f32 %v5281, 1.442695
    %v5321 = vpow.pop %v5320
    %v5322 = vmul.f32 %v5282, 1.442695
    %v5323 = vpow.pop %v5322
    %v5324 = vmul.f32 %v5283, 1.442695
    %v5325 = vpow.pop %v5324
    %v5326 = vmul.f32 %v5284, 1.442695
    %v5327 = vpow.pop %v5326
    %v5328 = vmul.f32 %v5285, 1.442695
    %v5329 = vpow.pop %v5328
    %v5330 = vmul.f32 %v5286, 1.442695
    %v5331 = vpow.pop %v5330
    %v5332 = vmul.f32 %v5287, 1.442695
    %v5333 = vpow.pop %v5332
    %v5334 = vmul.f32 %v5288, 1.442695
    %v5335 = vpow.pop %v5334
    %v5336 = vmul.f32 %v5289, 1.442695
    %v5337 = vpow.pop %v5336
    %v5338 = vmul.f32 %v5290, 1.442695
    %v5339 = vpow.pop %v5338
    %v5340 = vmul.f32 %v5291, 1.442695
    %v5341 = vpow.pop %v5340
    %v5342 = vmul.f32 %v5292, 1.442695
    %v5343 = vpow.pop %v5342
    %v5344 = vmul.f32 %v5293, 1.442695
    %v5345 = vpow.pop %v5344
    %v5346 = vmul.f32 %v5294, 1.442695
    %v5347 = vpow.pop %v5346
    %v5348 = vmul.f32 %v5295, 1.442695
    %v5349 = vpow.pop %v5348
    %v5350 = vmul.f32 %v5296, 1.442695
    %v5351 = vpow.pop %v5350
    %v5352 = vmul.f32 %v5297, 1.442695
    %v5353 = vpow.pop %v5352
    %v5354 = vmul.f32 %v5298, 1.442695
    %v5355 = vpow.pop %v5354
    %v5356 = vmul.f32 %v5299, 1.442695
    %v5357 = vpow.pop %v5356
    %v5358 = vmul.f32 %v5300, 1.442695
    %v5359 = vpow.pop %v5358
    %v5360 = vmul.f32 %v5301, 1.442695
    %v5361 = vpow.pop %v5360
    %v5362 = vmul.f32 %v5302, 1.442695
    %v5363 = vpow.pop %v5362
    %v5364 = vmul.f32 %v5303, 1.442695
    %v5365 = vpow.pop %v5364
    %v5366 = vmul.f32 %v5304, 1.442695
    %v5367 = vpow.pop %v5366
    %v5368 = vmul.f32 %v5305, 1.442695
    %v5369 = vpow.pop %v5368
    %5402 = vset.pattern.permute.xlu0 0
    %5403 = vperm.xlu0 %5402, %v5307
    %v5404 = vpop.permute.xlu0 %5403
    %5405 = vset.pattern.permute.xlu0 0
    %5406 = vperm.xlu0 %5405, %v5309
    %v5407 = vpop.permute.xlu0 %5406
    %5408 = vset.pattern.permute.xlu0 0
    %5409 = vperm.xlu0 %5408, %v5311
    %v5410 = vpop.permute.xlu0 %5409
    %5411 = vset.pattern.permute.xlu0 0
    %5412 = vperm.xlu0 %5411, %v5313
    %v5413 = vpop.permute.xlu0 %5412
    %5414 = vset.pattern.permute.xlu0 0
    %5415 = vperm.xlu0 %5414, %v5315
    %v5416 = vpop.permute.xlu0 %5415
    %5417 = vset.pattern.permute.xlu0 0
    %5418 = vperm.xlu0 %5417, %v5317
    %v5419 = vpop.permute.xlu0 %5418
    %5420 = vset.pattern.permute.xlu0 0
    %5421 = vperm.xlu0 %5420, %v5319
    %v5422 = vpop.permute.xlu0 %5421
    %5423 = vset.pattern.permute.xlu0 0
    %5424 = vperm.xlu0 %5423, %v5321
    %v5425 = vpop.permute.xlu0 %5424
    %5426 = vset.pattern.permute.xlu0 0
    %5427 = vperm.xlu0 %5426, %v5323
    %v5428 = vpop.permute.xlu0 %5427
    %5429 = vset.pattern.permute.xlu0 0
    %5430 = vperm.xlu0 %5429, %v5325
    %v5431 = vpop.permute.xlu0 %5430
    %5432 = vset.pattern.permute.xlu0 0
    %5433 = vperm.xlu0 %5432, %v5327
    %v5434 = vpop.permute.xlu0 %5433
    %5435 = vset.pattern.permute.xlu0 0
    %5436 = vperm.xlu0 %5435, %v5329
    %v5437 = vpop.permute.xlu0 %5436
    %5438 = vset.pattern.permute.xlu0 0
    %5439 = vperm.xlu0 %5438, %v5331
    %v5440 = vpop.permute.xlu0 %5439
    %5441 = vset.pattern.permute.xlu0 0
    %5442 = vperm.xlu0 %5441, %v5333
    %v5443 = vpop.permute.xlu0 %5442
    %5444 = vset.pattern.permute.xlu0 0
    %5445 = vperm.xlu0 %5444, %v5335
    %v5446 = vpop.permute.xlu0 %5445
    %5447 = vset.pattern.permute.xlu0 0
    %5448 = vperm.xlu0 %5447, %v5337
    %v5449 = vpop.permute.xlu0 %5448
    %5450 = vset.pattern.permute.xlu0 0
    %5451 = vperm.xlu0 %5450, %v5339
    %v5452 = vpop.permute.xlu0 %5451
    %5453 = vset.pattern.permute.xlu0 0
    %5454 = vperm.xlu0 %5453, %v5341
    %v5455 = vpop.permute.xlu0 %5454
    %5456 = vset.pattern.permute.xlu0 0
    %5457 = vperm.xlu0 %5456, %v5343
    %v5458 = vpop.permute.xlu0 %5457
    %5459 = vset.pattern.permute.xlu0 0
    %5460 = vperm.xlu0 %5459, %v5345
    %v5461 = vpop.permute.xlu0 %5460
    %5462 = vset.pattern.permute.xlu0 0
    %5463 = vperm.xlu0 %5462, %v5347
    %v5464 = vpop.permute.xlu0 %5463
    %5465 = vset.pattern.permute.xlu0 0
    %5466 = vperm.xlu0 %5465, %v5349
    %v5467 = vpop.permute.xlu0 %5466
    %5468 = vset.pattern.permute.xlu0 0
    %5469 = vperm.xlu0 %5468, %v5351
    %v5470 = vpop.permute.xlu0 %5469
    %5471 = vset.pattern.permute.xlu0 0
    %5472 = vperm.xlu0 %5471, %v5353
    %v5473 = vpop.permute.xlu0 %5472
    %5474 = vset.pattern.permute.xlu0 0
    %5475 = vperm.xlu0 %5474, %v5355
    %v5476 = vpop.permute.xlu0 %5475
    %5477 = vset.pattern.permute.xlu0 0
    %5478 = vperm.xlu0 %5477, %v5357
    %v5479 = vpop.permute.xlu0 %5478
    %5480 = vset.pattern.permute.xlu0 0
    %5481 = vperm.xlu0 %5480, %v5359
    %v5482 = vpop.permute.xlu0 %5481
    %5483 = vset.pattern.permute.xlu0 0
    %5484 = vperm.xlu0 %5483, %v5361
    %v5485 = vpop.permute.xlu0 %5484
    %5486 = vset.pattern.permute.xlu0 0
    %5487 = vperm.xlu0 %5486, %v5363
    %v5488 = vpop.permute.xlu0 %5487
    %5489 = vset.pattern.permute.xlu0 0
    %5490 = vperm.xlu0 %5489, %v5365
    %v5491 = vpop.permute.xlu0 %5490
    %5492 = vset.pattern.permute.xlu0 0
    %5493 = vperm.xlu0 %5492, %v5367
    %v5494 = vpop.permute.xlu0 %5493
    %5495 = vset.pattern.permute.xlu0 0
    %5496 = vperm.xlu0 %5495, %v5369
    %v5497 = vpop.permute.xlu0 %5496
    %v5498 = vlaneseq
    %v5499 = vshrl.u32 %v5498, 7
    %v5500 = vsub.s32 %v927, %v5499
    %v5501 = vrot.slane %v5404, %v5500
    %v5502 = vlaneseq
    %v5503 = vshrl.u32 %v5502, 7
    %v5504 = vsub.s32 %v932, %v5503
    %v5505 = vrot.slane %v5407, %v5504
    %v5506 = vsel %vm937, %v5505, %v5501
    %v5507 = vlaneseq
    %v5508 = vshrl.u32 %v5507, 7
    %v5509 = vsub.s32 %v939, %v5508
    %v5510 = vrot.slane %v5410, %v5509
    %v5511 = vsel %vm944, %v5510, %v5506
    %v5512 = vlaneseq
    %v5513 = vshrl.u32 %v5512, 7
    %v5514 = vsub.s32 %v946, %v5513
    %v5515 = vrot.slane %v5413, %v5514
    %v5516 = vsel %vm951, %v5515, %v5511
    %v5517 = vlaneseq
    %v5518 = vshrl.u32 %v5517, 7
    %v5519 = vsub.s32 %v953, %v5518
    %v5520 = vrot.slane %v5416, %v5519
    %v5521 = vsel %vm958, %v5520, %v5516
    %v5522 = vlaneseq
    %v5523 = vshrl.u32 %v5522, 7
    %v5524 = vsub.s32 %v960, %v5523
    %v5525 = vrot.slane %v5419, %v5524
    %v5526 = vsel %vm965, %v5525, %v5521
    %v5527 = vlaneseq
    %v5528 = vshrl.u32 %v5527, 7
    %v5529 = vsub.s32 %v967, %v5528
    %v5530 = vrot.slane %v5422, %v5529
    %v5531 = vsel %vm972, %v5530, %v5526
    %v5532 = vlaneseq
    %v5533 = vshrl.u32 %v5532, 7
    %v5534 = vsub.s32 %v974, %v5533
    %v5535 = vrot.slane %v5425, %v5534
    %v5536 = vsel %vm979, %v5535, %v5531
    %v5537 = vlaneseq
    %v5538 = vshrl.u32 %v5537, 7
    %v5539 = vsub.s32 %v981, %v5538
    %v5540 = vrot.slane %v5428, %v5539
    %v5541 = vsel %vm986, %v5540, %v5536
    %v5542 = vlaneseq
    %v5543 = vshrl.u32 %v5542, 7
    %v5544 = vsub.s32 %v988, %v5543
    %v5545 = vrot.slane %v5431, %v5544
    %v5546 = vsel %vm993, %v5545, %v5541
    %v5547 = vlaneseq
    %v5548 = vshrl.u32 %v5547, 7
    %v5549 = vsub.s32 %v995, %v5548
    %v5550 = vrot.slane %v5434, %v5549
    %v5551 = vsel %vm1000, %v5550, %v5546
    %v5552 = vlaneseq
    %v5553 = vshrl.u32 %v5552, 7
    %v5554 = vsub.s32 %v1002, %v5553
    %v5555 = vrot.slane %v5437, %v5554
    %v5556 = vsel %vm1007, %v5555, %v5551
    %v5557 = vlaneseq
    %v5558 = vshrl.u32 %v5557, 7
    %v5559 = vsub.s32 %v1009, %v5558
    %v5560 = vrot.slane %v5440, %v5559
    %v5561 = vsel %vm1014, %v5560, %v5556
    %v5562 = vlaneseq
    %v5563 = vshrl.u32 %v5562, 7
    %v5564 = vsub.s32 %v1016, %v5563
    %v5565 = vrot.slane %v5443, %v5564
    %v5566 = vsel %vm1021, %v5565, %v5561
    %v5567 = vlaneseq
    %v5568 = vshrl.u32 %v5567, 7
    %v5569 = vsub.s32 %v1023, %v5568
    %v5570 = vrot.slane %v5446, %v5569
    %v5571 = vsel %vm1028, %v5570, %v5566
    %v5572 = vlaneseq
    %v5573 = vshrl.u32 %v5572, 7
    %v5574 = vsub.s32 %v1030, %v5573
    %v5575 = vrot.slane %v5449, %v5574
    %v5576 = vsel %vm1035, %v5575, %v5571
    %v5577 = vlaneseq
    %v5578 = vshrl.u32 %v5577, 7
    %v5579 = vsub.s32 %v927, %v5578
    %v5580 = vrot.slane %v5452, %v5579
    %v5581 = vlaneseq
    %v5582 = vshrl.u32 %v5581, 7
    %v5583 = vsub.s32 %v932, %v5582
    %v5584 = vrot.slane %v5455, %v5583
    %v5585 = vsel %vm937, %v5584, %v5580
    %v5586 = vlaneseq
    %v5587 = vshrl.u32 %v5586, 7
    %v5588 = vsub.s32 %v939, %v5587
    %v5589 = vrot.slane %v5458, %v5588
    %v5590 = vsel %vm944, %v5589, %v5585
    %v5591 = vlaneseq
    %v5592 = vshrl.u32 %v5591, 7
    %v5593 = vsub.s32 %v946, %v5592
    %v5594 = vrot.slane %v5461, %v5593
    %v5595 = vsel %vm951, %v5594, %v5590
    %v5596 = vlaneseq
    %v5597 = vshrl.u32 %v5596, 7
    %v5598 = vsub.s32 %v953, %v5597
    %v5599 = vrot.slane %v5464, %v5598
    %v5600 = vsel %vm958, %v5599, %v5595
    %v5601 = vlaneseq
    %v5602 = vshrl.u32 %v5601, 7
    %v5603 = vsub.s32 %v960, %v5602
    %v5604 = vrot.slane %v5467, %v5603
    %v5605 = vsel %vm965, %v5604, %v5600
    %v5606 = vlaneseq
    %v5607 = vshrl.u32 %v5606, 7
    %v5608 = vsub.s32 %v967, %v5607
    %v5609 = vrot.slane %v5470, %v5608
    %v5610 = vsel %vm972, %v5609, %v5605
    %v5611 = vlaneseq
    %v5612 = vshrl.u32 %v5611, 7
    %v5613 = vsub.s32 %v974, %v5612
    %v5614 = vrot.slane %v5473, %v5613
    %v5615 = vsel %vm979, %v5614, %v5610
    %v5616 = vlaneseq
    %v5617 = vshrl.u32 %v5616, 7
    %v5618 = vsub.s32 %v981, %v5617
    %v5619 = vrot.slane %v5476, %v5618
    %v5620 = vsel %vm986, %v5619, %v5615
    %v5621 = vlaneseq
    %v5622 = vshrl.u32 %v5621, 7
    %v5623 = vsub.s32 %v988, %v5622
    %v5624 = vrot.slane %v5479, %v5623
    %v5625 = vsel %vm993, %v5624, %v5620
    %v5626 = vlaneseq
    %v5627 = vshrl.u32 %v5626, 7
    %v5628 = vsub.s32 %v995, %v5627
    %v5629 = vrot.slane %v5482, %v5628
    %v5630 = vsel %vm1000, %v5629, %v5625
    %v5631 = vlaneseq
    %v5632 = vshrl.u32 %v5631, 7
    %v5633 = vsub.s32 %v1002, %v5632
    %v5634 = vrot.slane %v5485, %v5633
    %v5635 = vsel %vm1007, %v5634, %v5630
    %v5636 = vlaneseq
    %v5637 = vshrl.u32 %v5636, 7
    %v5638 = vsub.s32 %v1009, %v5637
    %v5639 = vrot.slane %v5488, %v5638
    %v5640 = vsel %vm1014, %v5639, %v5635
    %v5641 = vlaneseq
    %v5642 = vshrl.u32 %v5641, 7
    %v5643 = vsub.s32 %v1016, %v5642
    %v5644 = vrot.slane %v5491, %v5643
    %v5645 = vsel %vm1021, %v5644, %v5640
    %v5646 = vlaneseq
    %v5647 = vshrl.u32 %v5646, 7
    %v5648 = vsub.s32 %v1023, %v5647
    %v5649 = vrot.slane %v5494, %v5648
    %v5650 = vsel %vm1028, %v5649, %v5645
    %v5651 = vlaneseq
    %v5652 = vshrl.u32 %v5651, 7
    %v5653 = vsub.s32 %v1030, %v5652
    %v5654 = vrot.slane %v5497, %v5653
    %v5655 = vsel %vm1035, %v5654, %v5650
    %v5656 = vsel %vm1116, %v5655, %v5576
    %v5658 = vsel %vm4202, %v5656, 0.0
    %5659 = vadd.xlane.f32.xlu0 %v5658
    %v5660 = vpop.xlane.xlu0 %5659
    %v5661 = vlog2.pop %v5660
    %v5662 = vmul.f32 %v5661, 0.6931472
    %v5663 = vadd.f32 %v5662, %v5262
    %v5665 = vlaneseq
    %v5666 = vshrl.u32 %v5665, 7
    %v5667 = vsub.s32 0, %v5666
    %v5668 = vrot.slane %v5663, %v5667
    %v5669 = vlaneseq
    %v5670 = vshrl.u32 %v5669, 7
    %v5671 = vsub.s32 1, %v5670
    %v5672 = vrot.slane %v5663, %v5671
    %v5675 = vsub.f32 %v4940, %v5668
    %v5676 = vsub.f32 %v4941, %v5668
    %v5677 = vsub.f32 %v4942, %v5668
    %v5678 = vsub.f32 %v4943, %v5668
    %v5679 = vsub.f32 %v4944, %v5668
    %v5680 = vsub.f32 %v4945, %v5668
    %v5681 = vsub.f32 %v4946, %v5668
    %v5682 = vsub.f32 %v4947, %v5668
    %v5683 = vsub.f32 %v4948, %v5668
    %v5684 = vsub.f32 %v4949, %v5668
    %v5685 = vsub.f32 %v4950, %v5668
    %v5686 = vsub.f32 %v4951, %v5668
    %v5687 = vsub.f32 %v4952, %v5668
    %v5688 = vsub.f32 %v4953, %v5668
    %v5689 = vsub.f32 %v4954, %v5668
    %v5690 = vsub.f32 %v4955, %v5668
    %v5691 = vsub.f32 %v4956, %v5672
    %v5692 = vsub.f32 %v4957, %v5672
    %v5693 = vsub.f32 %v4958, %v5672
    %v5694 = vsub.f32 %v4959, %v5672
    %v5695 = vsub.f32 %v4960, %v5672
    %v5696 = vsub.f32 %v4961, %v5672
    %v5697 = vsub.f32 %v4962, %v5672
    %v5698 = vsub.f32 %v4963, %v5672
    %v5699 = vsub.f32 %v4964, %v5672
    %v5700 = vsub.f32 %v4965, %v5672
    %v5701 = vsub.f32 %v4966, %v5672
    %v5702 = vsub.f32 %v4967, %v5672
    %v5703 = vsub.f32 %v4968, %v5672
    %v5704 = vsub.f32 %v4969, %v5672
    %v5705 = vsub.f32 %v4970, %v5672
    %v5706 = vsub.f32 %v4971, %v5672
    %5739 = vset.pattern.permute.xlu0 0
    %5740 = vperm.xlu0 %5739, %v5675
    %v5741 = vpop.permute.xlu0 %5740
    %5742 = vset.pattern.permute.xlu0 0
    %5743 = vperm.xlu0 %5742, %v5676
    %v5744 = vpop.permute.xlu0 %5743
    %5745 = vset.pattern.permute.xlu0 0
    %5746 = vperm.xlu0 %5745, %v5677
    %v5747 = vpop.permute.xlu0 %5746
    %5748 = vset.pattern.permute.xlu0 0
    %5749 = vperm.xlu0 %5748, %v5678
    %v5750 = vpop.permute.xlu0 %5749
    %5751 = vset.pattern.permute.xlu0 0
    %5752 = vperm.xlu0 %5751, %v5679
    %v5753 = vpop.permute.xlu0 %5752
    %5754 = vset.pattern.permute.xlu0 0
    %5755 = vperm.xlu0 %5754, %v5680
    %v5756 = vpop.permute.xlu0 %5755
    %5757 = vset.pattern.permute.xlu0 0
    %5758 = vperm.xlu0 %5757, %v5681
    %v5759 = vpop.permute.xlu0 %5758
    %5760 = vset.pattern.permute.xlu0 0
    %5761 = vperm.xlu0 %5760, %v5682
    %v5762 = vpop.permute.xlu0 %5761
    %5763 = vset.pattern.permute.xlu0 0
    %5764 = vperm.xlu0 %5763, %v5683
    %v5765 = vpop.permute.xlu0 %5764
    %5766 = vset.pattern.permute.xlu0 0
    %5767 = vperm.xlu0 %5766, %v5684
    %v5768 = vpop.permute.xlu0 %5767
    %5769 = vset.pattern.permute.xlu0 0
    %5770 = vperm.xlu0 %5769, %v5685
    %v5771 = vpop.permute.xlu0 %5770
    %5772 = vset.pattern.permute.xlu0 0
    %5773 = vperm.xlu0 %5772, %v5686
    %v5774 = vpop.permute.xlu0 %5773
    %5775 = vset.pattern.permute.xlu0 0
    %5776 = vperm.xlu0 %5775, %v5687
    %v5777 = vpop.permute.xlu0 %5776
    %5778 = vset.pattern.permute.xlu0 0
    %5779 = vperm.xlu0 %5778, %v5688
    %v5780 = vpop.permute.xlu0 %5779
    %5781 = vset.pattern.permute.xlu0 0
    %5782 = vperm.xlu0 %5781, %v5689
    %v5783 = vpop.permute.xlu0 %5782
    %5784 = vset.pattern.permute.xlu0 0
    %5785 = vperm.xlu0 %5784, %v5690
    %v5786 = vpop.permute.xlu0 %5785
    %5787 = vset.pattern.permute.xlu0 0
    %5788 = vperm.xlu0 %5787, %v5691
    %v5789 = vpop.permute.xlu0 %5788
    %5790 = vset.pattern.permute.xlu0 0
    %5791 = vperm.xlu0 %5790, %v5692
    %v5792 = vpop.permute.xlu0 %5791
    %5793 = vset.pattern.permute.xlu0 0
    %5794 = vperm.xlu0 %5793, %v5693
    %v5795 = vpop.permute.xlu0 %5794
    %5796 = vset.pattern.permute.xlu0 0
    %5797 = vperm.xlu0 %5796, %v5694
    %v5798 = vpop.permute.xlu0 %5797
    %5799 = vset.pattern.permute.xlu0 0
    %5800 = vperm.xlu0 %5799, %v5695
    %v5801 = vpop.permute.xlu0 %5800
    %5802 = vset.pattern.permute.xlu0 0
    %5803 = vperm.xlu0 %5802, %v5696
    %v5804 = vpop.permute.xlu0 %5803
    %5805 = vset.pattern.permute.xlu0 0
    %5806 = vperm.xlu0 %5805, %v5697
    %v5807 = vpop.permute.xlu0 %5806
    %5808 = vset.pattern.permute.xlu0 0
    %5809 = vperm.xlu0 %5808, %v5698
    %v5810 = vpop.permute.xlu0 %5809
    %5811 = vset.pattern.permute.xlu0 0
    %5812 = vperm.xlu0 %5811, %v5699
    %v5813 = vpop.permute.xlu0 %5812
    %5814 = vset.pattern.permute.xlu0 0
    %5815 = vperm.xlu0 %5814, %v5700
    %v5816 = vpop.permute.xlu0 %5815
    %5817 = vset.pattern.permute.xlu0 0
    %5818 = vperm.xlu0 %5817, %v5701
    %v5819 = vpop.permute.xlu0 %5818
    %5820 = vset.pattern.permute.xlu0 0
    %5821 = vperm.xlu0 %5820, %v5702
    %v5822 = vpop.permute.xlu0 %5821
    %5823 = vset.pattern.permute.xlu0 0
    %5824 = vperm.xlu0 %5823, %v5703
    %v5825 = vpop.permute.xlu0 %5824
    %5826 = vset.pattern.permute.xlu0 0
    %5827 = vperm.xlu0 %5826, %v5704
    %v5828 = vpop.permute.xlu0 %5827
    %5829 = vset.pattern.permute.xlu0 0
    %5830 = vperm.xlu0 %5829, %v5705
    %v5831 = vpop.permute.xlu0 %5830
    %5832 = vset.pattern.permute.xlu0 0
    %5833 = vperm.xlu0 %5832, %v5706
    %v5834 = vpop.permute.xlu0 %5833
    %v5835 = vlaneseq
    %v5836 = vshrl.u32 %v5835, 7
    %v5837 = vsub.s32 %v927, %v5836
    %v5838 = vrot.slane %v5741, %v5837
    %v5839 = vlaneseq
    %v5840 = vshrl.u32 %v5839, 7
    %v5841 = vsub.s32 %v932, %v5840
    %v5842 = vrot.slane %v5744, %v5841
    %v5843 = vsel %vm937, %v5842, %v5838
    %v5844 = vlaneseq
    %v5845 = vshrl.u32 %v5844, 7
    %v5846 = vsub.s32 %v939, %v5845
    %v5847 = vrot.slane %v5747, %v5846
    %v5848 = vsel %vm944, %v5847, %v5843
    %v5849 = vlaneseq
    %v5850 = vshrl.u32 %v5849, 7
    %v5851 = vsub.s32 %v946, %v5850
    %v5852 = vrot.slane %v5750, %v5851
    %v5853 = vsel %vm951, %v5852, %v5848
    %v5854 = vlaneseq
    %v5855 = vshrl.u32 %v5854, 7
    %v5856 = vsub.s32 %v953, %v5855
    %v5857 = vrot.slane %v5753, %v5856
    %v5858 = vsel %vm958, %v5857, %v5853
    %v5859 = vlaneseq
    %v5860 = vshrl.u32 %v5859, 7
    %v5861 = vsub.s32 %v960, %v5860
    %v5862 = vrot.slane %v5756, %v5861
    %v5863 = vsel %vm965, %v5862, %v5858
    %v5864 = vlaneseq
    %v5865 = vshrl.u32 %v5864, 7
    %v5866 = vsub.s32 %v967, %v5865
    %v5867 = vrot.slane %v5759, %v5866
    %v5868 = vsel %vm972, %v5867, %v5863
    %v5869 = vlaneseq
    %v5870 = vshrl.u32 %v5869, 7
    %v5871 = vsub.s32 %v974, %v5870
    %v5872 = vrot.slane %v5762, %v5871
    %v5873 = vsel %vm979, %v5872, %v5868
    %v5874 = vlaneseq
    %v5875 = vshrl.u32 %v5874, 7
    %v5876 = vsub.s32 %v981, %v5875
    %v5877 = vrot.slane %v5765, %v5876
    %v5878 = vsel %vm986, %v5877, %v5873
    %v5879 = vlaneseq
    %v5880 = vshrl.u32 %v5879, 7
    %v5881 = vsub.s32 %v988, %v5880
    %v5882 = vrot.slane %v5768, %v5881
    %v5883 = vsel %vm993, %v5882, %v5878
    %v5884 = vlaneseq
    %v5885 = vshrl.u32 %v5884, 7
    %v5886 = vsub.s32 %v995, %v5885
    %v5887 = vrot.slane %v5771, %v5886
    %v5888 = vsel %vm1000, %v5887, %v5883
    %v5889 = vlaneseq
    %v5890 = vshrl.u32 %v5889, 7
    %v5891 = vsub.s32 %v1002, %v5890
    %v5892 = vrot.slane %v5774, %v5891
    %v5893 = vsel %vm1007, %v5892, %v5888
    %v5894 = vlaneseq
    %v5895 = vshrl.u32 %v5894, 7
    %v5896 = vsub.s32 %v1009, %v5895
    %v5897 = vrot.slane %v5777, %v5896
    %v5898 = vsel %vm1014, %v5897, %v5893
    %v5899 = vlaneseq
    %v5900 = vshrl.u32 %v5899, 7
    %v5901 = vsub.s32 %v1016, %v5900
    %v5902 = vrot.slane %v5780, %v5901
    %v5903 = vsel %vm1021, %v5902, %v5898
    %v5904 = vlaneseq
    %v5905 = vshrl.u32 %v5904, 7
    %v5906 = vsub.s32 %v1023, %v5905
    %v5907 = vrot.slane %v5783, %v5906
    %v5908 = vsel %vm1028, %v5907, %v5903
    %v5909 = vlaneseq
    %v5910 = vshrl.u32 %v5909, 7
    %v5911 = vsub.s32 %v1030, %v5910
    %v5912 = vrot.slane %v5786, %v5911
    %v5913 = vsel %vm1035, %v5912, %v5908
    %v5914 = vlaneseq
    %v5915 = vshrl.u32 %v5914, 7
    %v5916 = vsub.s32 %v927, %v5915
    %v5917 = vrot.slane %v5789, %v5916
    %v5918 = vlaneseq
    %v5919 = vshrl.u32 %v5918, 7
    %v5920 = vsub.s32 %v932, %v5919
    %v5921 = vrot.slane %v5792, %v5920
    %v5922 = vsel %vm937, %v5921, %v5917
    %v5923 = vlaneseq
    %v5924 = vshrl.u32 %v5923, 7
    %v5925 = vsub.s32 %v939, %v5924
    %v5926 = vrot.slane %v5795, %v5925
    %v5927 = vsel %vm944, %v5926, %v5922
    %v5928 = vlaneseq
    %v5929 = vshrl.u32 %v5928, 7
    %v5930 = vsub.s32 %v946, %v5929
    %v5931 = vrot.slane %v5798, %v5930
    %v5932 = vsel %vm951, %v5931, %v5927
    %v5933 = vlaneseq
    %v5934 = vshrl.u32 %v5933, 7
    %v5935 = vsub.s32 %v953, %v5934
    %v5936 = vrot.slane %v5801, %v5935
    %v5937 = vsel %vm958, %v5936, %v5932
    %v5938 = vlaneseq
    %v5939 = vshrl.u32 %v5938, 7
    %v5940 = vsub.s32 %v960, %v5939
    %v5941 = vrot.slane %v5804, %v5940
    %v5942 = vsel %vm965, %v5941, %v5937
    %v5943 = vlaneseq
    %v5944 = vshrl.u32 %v5943, 7
    %v5945 = vsub.s32 %v967, %v5944
    %v5946 = vrot.slane %v5807, %v5945
    %v5947 = vsel %vm972, %v5946, %v5942
    %v5948 = vlaneseq
    %v5949 = vshrl.u32 %v5948, 7
    %v5950 = vsub.s32 %v974, %v5949
    %v5951 = vrot.slane %v5810, %v5950
    %v5952 = vsel %vm979, %v5951, %v5947
    %v5953 = vlaneseq
    %v5954 = vshrl.u32 %v5953, 7
    %v5955 = vsub.s32 %v981, %v5954
    %v5956 = vrot.slane %v5813, %v5955
    %v5957 = vsel %vm986, %v5956, %v5952
    %v5958 = vlaneseq
    %v5959 = vshrl.u32 %v5958, 7
    %v5960 = vsub.s32 %v988, %v5959
    %v5961 = vrot.slane %v5816, %v5960
    %v5962 = vsel %vm993, %v5961, %v5957
    %v5963 = vlaneseq
    %v5964 = vshrl.u32 %v5963, 7
    %v5965 = vsub.s32 %v995, %v5964
    %v5966 = vrot.slane %v5819, %v5965
    %v5967 = vsel %vm1000, %v5966, %v5962
    %v5968 = vlaneseq
    %v5969 = vshrl.u32 %v5968, 7
    %v5970 = vsub.s32 %v1002, %v5969
    %v5971 = vrot.slane %v5822, %v5970
    %v5972 = vsel %vm1007, %v5971, %v5967
    %v5973 = vlaneseq
    %v5974 = vshrl.u32 %v5973, 7
    %v5975 = vsub.s32 %v1009, %v5974
    %v5976 = vrot.slane %v5825, %v5975
    %v5977 = vsel %vm1014, %v5976, %v5972
    %v5978 = vlaneseq
    %v5979 = vshrl.u32 %v5978, 7
    %v5980 = vsub.s32 %v1016, %v5979
    %v5981 = vrot.slane %v5828, %v5980
    %v5982 = vsel %vm1021, %v5981, %v5977
    %v5983 = vlaneseq
    %v5984 = vshrl.u32 %v5983, 7
    %v5985 = vsub.s32 %v1023, %v5984
    %v5986 = vrot.slane %v5831, %v5985
    %v5987 = vsel %vm1028, %v5986, %v5982
    %v5988 = vlaneseq
    %v5989 = vshrl.u32 %v5988, 7
    %v5990 = vsub.s32 %v1030, %v5989
    %v5991 = vrot.slane %v5834, %v5990
    %v5992 = vsel %vm1035, %v5991, %v5987
    %v5993 = vsel %vm1116, %v5992, %v5913
    %s5995 = scalar_lea.vmem %s7, 6
    %5996 = vst [vmem:[%s5995] sm:$0x3] %v5993
    // Predicated region
    $region34: #{attention_rnn_forward.1} parent=1 // pred_check
      _
    $region35: #{attention_rnn_forward.1} parent=1 // pred_check_branch
      %5998 = sbr.rel (0) target = $region37
    $region36: #{attention_rnn_forward.1} parent=1 // pred_region
      _
    $region37: #{attention_rnn_forward.1} parent=1 // pred_fallthru
      _
    // Predicated region
    $region38: #{attention_rnn_forward.1} parent=1 // pred_check
      _
    $region39: #{attention_rnn_forward.1} parent=1 // pred_check_branch
      %6000 = sbr.rel (0) target = $region41
    $region40: #{attention_rnn_forward.1} parent=1 // pred_region
      _
    $region41: #{attention_rnn_forward.1} parent=1 // pred_fallthru
      _
    %6001 = vsyncpa [#allocation3], 1

</llo_original>
